<compile_context>
chip_gen: v7x
topology: tpu7x:2x2x1
jax: 0.10.0
libtpu: 0.0.40
codegen_flags: <defaults>
</compile_context>

<pallas_src>
import functools

import jax
import jax.numpy as jnp
from jax import lax
from jax.experimental import pallas as pl
from jax.experimental.pallas import tpu as pltpu


def _round_up(x, m):
    return (x + m - 1) // m * m


def _vmem_capacity_bytes():
    try:
        return int(pltpu.get_tpu_info().vmem_capacity_bytes)
    except Exception:
        return 64 << 20          # conservative fallback (v7x per-TC VMEM)


def _vmem_limit_bytes():
    # ~85% of physical VMEM: ~108 MiB on 128 MiB parts (v5e/v6e), ~54 MiB v7x.
    return min(int(_vmem_capacity_bytes() * 0.85), 112 << 20)


def _auto_chunk_t(b_pad, e_in_max, hp, seq_len):
    """Largest time-chunk whose working set fits this chip's VMEM."""
    budget = int(_vmem_capacity_bytes() * 0.70)
    # Single-buffered bf16 weights, f32 biases, carried f32 h (bytes).
    fixed = 2 * (e_in_max + hp) * 3 * hp + 4 * 4 * 3 * hp + 4 * b_pad * hp
    # Per flattened (time,batch) row: double-buffered bf16 x / out blocks,
    # bf16 gx scratch, f32 mask (double-buffered).
    per_row = 2 * 2 * e_in_max + 2 * 2 * hp + 2 * 3 * hp + 2 * 4
    rows = max(b_pad, (budget - fixed) // max(per_row, 1))
    chunk = max(8, (rows // b_pad) // 8 * 8)
    chunk = min(chunk, 128)
    chunk = min(chunk, _round_up(max(seq_len, 1), 8))
    return chunk


# ----------------------------------------------------------------------------
# Pallas kernel: GRU recurrence, grid = (direction, time-chunk).
# ----------------------------------------------------------------------------
def _gru_kernel(x_ref, m_ref, wih_hbm, whh_hbm, bih_ref, bhh_ref,
                out_ref, hT_ref,
                wih_v, whh_v, gx_ref, h_ref, sem,
                *, chunk_t, b_pad, hp, n_chunks, n_dir, unroll):
    # x_ref  : (chunk_t*b_pad, E_in)  bf16, time-major rows (t-major, b-minor)
    # m_ref  : (chunk_t*b_pad, 1)     f32 mask
    # wih_hbm: (n_dir, E_in, 3*hp)    bf16, HBM (manual single-buffered copy)
    # whh_hbm: (n_dir, hp, 3*hp)      bf16, HBM
    # bih/bhh: (1, 3*hp)              f32 (blocked per direction)
    # out_ref: (chunk_t*b_pad, hp)    bf16 lane-block d of the concat output
    # hT_ref : (b_pad, hp)            f32 final hidden (written at last chunk)
    # wih_v/whh_v : VMEM scratch, single-buffered weights for direction d
    # gx_ref : VMEM scratch (chunk_t*b_pad, 3*hp) bf16 -- chunk-sized only
    # h_ref  : VMEM scratch (b_pad, hp) f32           -- carried across chunks
    d = pl.program_id(0)          # 0 = forward, 1 = backward direction
    c = pl.program_id(1)          # chunk step (time-reversed for backward)

    @pl.when(c == 0)
    def _():
        h_ref[...] = jnp.zeros_like(h_ref)     # h0 == 0 (module default)
        cp_ih = pltpu.make_async_copy(wih_hbm.at[d], wih_v, sem.at[0])
        cp_hh = pltpu.make_async_copy(whh_hbm.at[d], whh_v, sem.at[1])
        cp_ih.start()
        cp_hh.start()
        cp_ih.wait()
        cp_hh.wait()

    # Fused input projection for this chunk: bf16 MXU, f32 accumulate,
    # stored bf16 (halves the largest scratch + per-step vld bytes).
    gx_ref[...] = (
        jnp.dot(x_ref[...], wih_v[...], preferred_element_type=jnp.float32)
        + bih_ref[...]).astype(gx_ref.dtype)

    whh = whh_v[...]              # hoisted: constant across the time loop
    bhh = bhh_ref[...]

    def step(t, h):
        row = pl.multiple_of(t * b_pad, b_pad)
        gx = gx_ref[pl.ds(row, b_pad), :]                     # (b_pad, 3hp) bf16
        msk = m_ref[pl.ds(row, b_pad), :]                     # (b_pad, 1)   f32
        gh = jnp.dot(h.astype(whh.dtype), whh,
                     preferred_element_type=jnp.float32) + bhh
        r = jax.nn.sigmoid(gx[:, 0:hp] + gh[:, 0:hp])
        z = jax.nn.sigmoid(gx[:, hp:2 * hp] + gh[:, hp:2 * hp])
        n = jnp.tanh(gx[:, 2 * hp:3 * hp] + r * gh[:, 2 * hp:3 * hp])
        h_new = (1.0 - z) * n + z * h
        out_ref[pl.ds(row, b_pad), :] = (msk * h_new).astype(out_ref.dtype)
        return msk * h_new + (1.0 - msk) * h                  # freeze padding

    def run_fwd():                # plain counter t = i
        h_ref[...] = lax.fori_loop(0, chunk_t, step, h_ref[...], unroll=unroll)

    def run_bwd():                # plain counter, reversed inside the chunk
        h_ref[...] = lax.fori_loop(
            0, chunk_t, lambda i, h: step(chunk_t - 1 - i, h),
            h_ref[...], unroll=unroll)

    if n_dir == 1:
        run_fwd()
    else:
        pl.when(d == 0)(run_fwd)
        pl.when(d == 1)(run_bwd)

    @pl.when(c == n_chunks - 1)
    def _():
        hT_ref[...] = h_ref[...]


def _gru_layer(x_flat, m_flat, lw, *, b_pad, t_pad, hp, chunk_t):
    """One GRU layer, both directions fused, over the flattened sequence."""
    n_dir, e_in, _ = lw["w_ih_t"].shape
    assert t_pad % chunk_t == 0
    nc = t_pad // chunk_t
    rows = chunk_t * b_pad

    def tblk(d, c):
        # forward (d=0): chunk c ; backward (d=1): chunk nc-1-c
        return c + d * (nc - 1 - 2 * c)

    unroll = chunk_t if chunk_t <= 8 else 8
    kernel = functools.partial(_gru_kernel, chunk_t=chunk_t, b_pad=b_pad,
                               hp=hp, n_chunks=nc, n_dir=n_dir, unroll=unroll)
    out, hT = pl.pallas_call(
        kernel,
        grid_spec=pltpu.PrefetchScalarGridSpec(
            num_scalar_prefetch=0,
            grid=(n_dir, nc),
            in_specs=[
                pl.BlockSpec((rows, e_in), lambda d, c: (tblk(d, c), 0)),
                pl.BlockSpec((rows, 1), lambda d, c: (tblk(d, c), 0)),
                pl.BlockSpec(memory_space=pl.ANY),   # W_ih: single-buffered
                pl.BlockSpec(memory_space=pl.ANY),   # W_hh: single-buffered
                pl.BlockSpec((None, 1, 3 * hp), lambda d, c: (d, 0, 0)),
                pl.BlockSpec((None, 1, 3 * hp), lambda d, c: (d, 0, 0)),
            ],
            out_specs=[
                # both directions write into one lane-concatenated bf16 buffer
                pl.BlockSpec((rows, hp), lambda d, c: (tblk(d, c), d)),
                pl.BlockSpec((None, b_pad, hp), lambda d, c: (d, 0, 0)),
            ],
            scratch_shapes=[
                pltpu.VMEM((e_in, 3 * hp), jnp.bfloat16),   # W_ih (1 copy)
                pltpu.VMEM((hp, 3 * hp), jnp.bfloat16),     # W_hh (1 copy)
                pltpu.VMEM((rows, 3 * hp), jnp.bfloat16),   # gx for this chunk
                pltpu.VMEM((b_pad, hp), jnp.float32),       # carried h
                pltpu.SemaphoreType.DMA((2,)),
            ],
        ),
        out_shape=(
            jax.ShapeDtypeStruct((t_pad * b_pad, n_dir * hp), jnp.bfloat16),
            jax.ShapeDtypeStruct((n_dir, b_pad, hp), jnp.float32),
        ),
        compiler_params=pltpu.CompilerParams(
            dimension_semantics=("parallel", "arbitrary"),
            vmem_limit_bytes=_vmem_limit_bytes()),
    )(x_flat, m_flat, lw["w_ih_t"], lw["w_hh_t"], lw["b_ih"], lw["b_hh"])
    return out, hT


# ----------------------------------------------------------------------------
# Parameter construction (reference layout) + one-time packing for the kernel.
# ----------------------------------------------------------------------------
def init_params(key, vocab, embed_dim, hidden, num_layers, bidirectional):
    nb_dir = 2 if bidirectional else 1
    params = {}
    key, k_emb = jax.random.split(key)
    params["embedding"] = jax.random.uniform(
        k_emb, (vocab, embed_dim), jnp.float32, -0.1, 0.1)
    scale = 1.0 / jnp.sqrt(hidden)
    layers = []
    for l in range(num_layers):
        in_dim = embed_dim if l == 0 else hidden * nb_dir
        dirs = []
        for _ in range(nb_dir):
            key, k1, k2, k3, k4 = jax.random.split(key, 5)
            dirs.append({
                "w_ih": jax.random.uniform(k1, (3 * hidden, in_dim),
                                           jnp.float32, -scale, scale),
                "w_hh": jax.random.uniform(k2, (3 * hidden, hidden),
                                           jnp.float32, -scale, scale),
                "b_ih": jax.random.uniform(k3, (3 * hidden,),
                                           jnp.float32, -scale, scale),
                "b_hh": jax.random.uniform(k4, (3 * hidden,),
                                           jnp.float32, -scale, scale),
            })
        layers.append(dirs)
    params["gru"] = layers
    return params


def pack_params(params, *, embed_dim, hidden, num_layers, bidirectional):
    """Pre-transpose / pad / stack weights once (done outside the hot path)."""
    D = 2 if bidirectional else 1
    hp = _round_up(hidden, 128)          # lane-aligned hidden / gate slices
    e_pad = _round_up(embed_dim, 128)    # lane-aligned embedding dim
    emb = params["embedding"]
    vocab = emb.shape[0]
    emb_p = jnp.zeros((vocab, e_pad), jnp.float32).at[:, :embed_dim].set(emb)
    packed = {"hp": hp, "e_pad": e_pad, "nb_dir": D,
              "embedding": emb_p.astype(jnp.bfloat16), "layers": []}
    for l in range(num_layers):
        in_dim = embed_dim if l == 0 else hidden * D
        in_pad = e_pad if l == 0 else hp * D
        wih_l, whh_l, bih_l, bhh_l = [], [], [], []
        for d in range(D):
            p = params["gru"][l][d]
            # w_ih: (3H, in) -> (in, 3, H) -> pad gates to hp (lane aligned).
            w = jnp.transpose(p["w_ih"]).reshape(in_dim, 3, hidden)
            w = jnp.pad(w, ((0, 0), (0, 0), (0, hp - hidden)))
            if l == 0:
                w = jnp.pad(w, ((0, in_pad - in_dim), (0, 0), (0, 0)))
            else:
                # keep each direction's H-wide input block at an hp offset
                w = w.reshape(D, hidden, 3, hp)
                w = jnp.pad(w, ((0, 0), (0, hp - hidden), (0, 0), (0, 0)))
            wih_l.append(w.reshape(in_pad, 3 * hp))
            wh = jnp.transpose(p["w_hh"]).reshape(hidden, 3, hidden)
            wh = jnp.pad(wh, ((0, hp - hidden), (0, 0), (0, hp - hidden)))
            whh_l.append(wh.reshape(hp, 3 * hp))
            bi = jnp.pad(p["b_ih"].reshape(3, hidden),
                         ((0, 0), (0, hp - hidden)))
            bih_l.append(bi.reshape(1, 3 * hp))
            bh = jnp.pad(p["b_hh"].reshape(3, hidden),
                         ((0, 0), (0, hp - hidden)))
            bhh_l.append(bh.reshape(1, 3 * hp))
        packed["layers"].append({
            "w_ih_t": jnp.stack(wih_l).astype(jnp.bfloat16),
            "w_hh_t": jnp.stack(whh_l).astype(jnp.bfloat16),
            "b_ih": jnp.stack(bih_l).astype(jnp.float32),
            "b_hh": jnp.stack(bhh_l).astype(jnp.float32),
        })
    return packed


# ----------------------------------------------------------------------------
# MTEncoder.forward (eval mode) using the Pallas GRU kernel.
# ----------------------------------------------------------------------------
def mt_encoder_forward(packed, inputs, mask, *, hidden, num_layers,
                       bidirectional, chunk_t=None):
    B, T = inputs.shape
    D = 2 if bidirectional else 1
    hp = packed["hp"]
    e_pad = packed["e_pad"]
    b_pad = _round_up(B, 16)             # >=16 rows per MXU push, bf16 tiles
    if chunk_t is None:
        chunk_t = _auto_chunk_t(b_pad, max(e_pad, D * hp), hp, T)
    t_pad = _round_up(T, chunk_t)

    # Time-major gather: no (1,0,2) transpose pass over the embeddings.
    inputs_tm = jnp.zeros((t_pad, b_pad), jnp.int32).at[:T, :B].set(
        jnp.transpose(inputs))
    mask_tm = jnp.zeros((t_pad, b_pad), jnp.float32).at[:T, :B].set(
        jnp.transpose(mask).astype(jnp.float32))

    x = packed["embedding"][inputs_tm].reshape(t_pad * b_pad, e_pad)  # bf16
    m = mask_tm.reshape(t_pad * b_pad, 1)

    fw_h, bw_h, out = [], [], None
    for l in range(num_layers):
        out, hT = _gru_layer(x, m, packed["layers"][l], b_pad=b_pad,
                             t_pad=t_pad, hp=hp, chunk_t=chunk_t)
        fw_h.append(hT[0])
        if D == 2:
            bw_h.append(hT[1])
        if l + 1 < num_layers:
            x = out          # already bf16, [fw | bw] lane-concatenated

    if D == 2:
        # TODO(synk): the fw+bw sum / transpose / slice could be fused into a
        # small epilogue kernel to save one more HBM pass over activations.
        enc = (out[:, :hp].astype(jnp.float32)
               + out[:, hp:2 * hp].astype(jnp.float32))
        fin = jnp.stack([fw_h[l] + bw_h[l] for l in range(num_layers)], 0)
    else:
        enc = out[:, :hp].astype(jnp.float32)
        fin = jnp.stack(fw_h, 0)
    enc = enc.reshape(t_pad, b_pad, hp).transpose(1, 0, 2)[:B, :T, :hidden]
    fin = fin[:, :B, :hidden]
    return enc, fin                                  # (B,T,H), (L,B,H)


# ----------------------------------------------------------------------------
# Pure-JAX reference (mirrors PyTorch packed-GRU semantics) for checking.
# ----------------------------------------------------------------------------
def _ref_gru_dir(x, mask, w_ih, w_hh, b_ih, b_hh, h0, reverse):
    B, T, _ = x.shape
    H = h0.shape[-1]
    h = h0
    outs = [None] * T
    order = range(T - 1, -1, -1) if reverse else range(T)
    for t in order:
        gx = jnp.dot(x[:, t], w_ih.T, precision=lax.Precision.HIGHEST) + b_ih
        gh = jnp.dot(h, w_hh.T, precision=lax.Precision.HIGHEST) + b_hh
        r = jax.nn.sigmoid(gx[:, :H] + gh[:, :H])
        z = jax.nn.sigmoid(gx[:, H:2 * H] + gh[:, H:2 * H])
        n = jnp.tanh(gx[:, 2 * H:] + r * gh[:, 2 * H:])
        h_new = (1.0 - z) * n + z * h
        m = mask[:, t:t + 1]
        h = m * h_new + (1.0 - m) * h
        outs[t] = m * h_new
    return jnp.stack(outs, axis=1), h


def ref_forward(params, inputs, mask, *, hidden, num_layers, bidirectional):
    B, T = inputs.shape
    x = params["embedding"][inputs]
    mask_f = mask.astype(jnp.float32)
    h0 = jnp.zeros((B, hidden), jnp.float32)
    fw_hs, bw_hs = [], []
    fw_o = bw_o = None
    for l in range(num_layers):
        p_fw = params["gru"][l][0]
        fw_o, fh = _ref_gru_dir(x, mask_f, p_fw["w_ih"], p_fw["w_hh"],
                                p_fw["b_ih"], p_fw["b_hh"], h0, False)
        if bidirectional:
            p_bw = params["gru"][l][1]
            bw_o, bh = _ref_gru_dir(x, mask_f, p_bw["w_ih"], p_bw["w_hh"],
                                    p_bw["b_ih"], p_bw["b_hh"], h0, True)
            x = jnp.concatenate([fw_o, bw_o], axis=-1)
        else:
            bh = None
            x = fw_o
        fw_hs.append(fh)
        bw_hs.append(bh)
    if bidirectional:
        enc_out = fw_o + bw_o
        final_hidden = jnp.stack([fw_hs[l] + bw_hs[l]
                                  for l in range(num_layers)], axis=0)
    else:
        enc_out = fw_o
        final_hidden = jnp.stack(fw_hs, axis=0)
    return enc_out, final_hidden


# ----------------------------------------------------------------------------
if __name__ == "__main__":
    VOCAB, EMBED, HIDDEN = 50, 16, 32
    NUM_LAYERS, BIDIR = 2, True
    B, T = 2, 8
    CHUNK_T = 4          # 2 time-chunks -> exercises the pipelined grid

    key = jax.random.PRNGKey(0)
    params = init_params(key, VOCAB, EMBED, HIDDEN, NUM_LAYERS, BIDIR)
    packed = pack_params(params, embed_dim=EMBED, hidden=HIDDEN,
                         num_layers=NUM_LAYERS, bidirectional=BIDIR)

    key, k_tok = jax.random.split(key)
    inputs = jax.random.randint(k_tok, (B, T), 1, VOCAB, dtype=jnp.int32)
    # Right-padded, length-sorted mask (pack_padded_sequence requirement).
    lengths = jnp.array([T, 5], dtype=jnp.int32)
    mask = (jnp.arange(T)[None, :] < lengths[:, None]).astype(jnp.int32)
    inputs = inputs * mask                                   # padding_idx = 0

    enc_out, final_hidden = mt_encoder_forward(
        packed, inputs, mask, hidden=HIDDEN, num_layers=NUM_LAYERS,
        bidirectional=BIDIR, chunk_t=CHUNK_T)
    jax.block_until_ready((enc_out, final_hidden))

    ref_out, ref_hidden = ref_forward(
        params, inputs, mask, hidden=HIDDEN, num_layers=NUM_LAYERS,
        bidirectional=BIDIR)
    assert enc_out.shape == (B, T, HIDDEN)
    assert final_hidden.shape == (NUM_LAYERS, B, HIDDEN)
    # bf16 MXU operands / bf16 activation storage with f32 accumulation ->
    # tolerance loosened vs the f32 reference.
    assert jnp.allclose(enc_out, ref_out, atol=3e-2, rtol=3e-2)
    assert jnp.allclose(final_hidden, ref_hidden, atol=3e-2, rtol=3e-2)

    print("KERNEL_OK")
</pallas_src>

<mosaic_0001>
module attributes {stable_mosaic.version = 11 : i64} {
  func.func @_gru_kernel(%arg0: i32, %arg1: i32, %arg2: memref<64x128xbf16, #tpu.memory_space<vmem>>, %arg3: memref<64x1xf32, #tpu.memory_space<vmem>>, %arg4: memref<2x128x384xbf16, #tpu.memory_space<any>>, %arg5: memref<2x128x384xbf16, #tpu.memory_space<any>>, %arg6: memref<1x1x384xf32, #tpu.memory_space<vmem>>, %arg7: memref<1x1x384xf32, #tpu.memory_space<vmem>>, %arg8: memref<64x128xbf16, #tpu.memory_space<vmem>>, %arg9: memref<1x16x128xf32, #tpu.memory_space<vmem>>, %arg10: memref<128x384xbf16, #tpu.memory_space<vmem>>, %arg11: memref<128x384xbf16, #tpu.memory_space<vmem>>, %arg12: memref<64x384xbf16, #tpu.memory_space<vmem>>, %arg13: memref<16x128xf32, #tpu.memory_space<vmem>>, %arg14: memref<2x!tpu.dma_semaphore, #tpu.memory_space<semaphore_mem>>) attributes {dimension_semantics = [#tpu.dimension_semantics<parallel>, #tpu.dimension_semantics<arbitrary>], iteration_bounds = array<i64: 2, 2>, scalar_prefetch = 0 : i64, scratch_operands = 5 : i64, tpu.core_type = #tpu.core_type<tc>, window_params = [{transform_indices = @transform_0, window_bounds = array<i64: 64, 128>}, {transform_indices = @transform_1, window_bounds = array<i64: 64, 1>}, {}, {}, {transform_indices = @transform_4, window_bounds = array<i64: 1, 1, 384>}, {transform_indices = @transform_5, window_bounds = array<i64: 1, 1, 384>}, {transform_indices = @transform_6, window_bounds = array<i64: 64, 128>}, {transform_indices = @transform_7, window_bounds = array<i64: 1, 16, 128>}]} {
    %c0_i32 = arith.constant 0 : i32
    %0 = arith.cmpi eq, %arg1, %c0_i32 : i32
    %1 = arith.extui %0 : i1 to i32
    %c0_i32_0 = arith.constant 0 : i32
    %2 = arith.cmpi ne, %1, %c0_i32_0 : i32
    scf.if %2 {
      %cst_19 = arith.constant 0.000000e+00 : f32
      %24 = vector.broadcast %cst_19 : f32 to vector<16x128xf32>
      %c0_20 = arith.constant 0 : index
      %c0_21 = arith.constant 0 : index
      %25 = vector.load %arg13[%c0_20, %c0_21] : memref<16x128xf32, #tpu.memory_space<vmem>>, vector<16x128xf32>
      tpu.vector_store %arg13[%c0_20, %c0_21], %24 {strides = array<i32>} : memref<16x128xf32, #tpu.memory_space<vmem>>, vector<16x128xf32>,
      %c0_i32_22 = arith.constant 0 : i32
      %c0_i32_23 = arith.constant 0 : i32
      %c0_i32_24 = arith.constant 0 : i32
      %26 = tpu.memref_slice %arg4[%arg0, %c0_i32_23, %c0_i32_24] : memref<2x128x384xbf16, #tpu.memory_space<any>> -> memref<1x128x384xbf16, #tpu.memory_space<any>>
      %27 = tpu.memref_squeeze %26 : memref<1x128x384xbf16, #tpu.memory_space<any>> -> memref<128x384xbf16, #tpu.memory_space<any>>
      %28 = tpu.memref_slice %arg14[%c0_i32_22] : memref<2x!tpu.dma_semaphore, #tpu.memory_space<semaphore_mem>> -> memref<1x!tpu.dma_semaphore, #tpu.memory_space<semaphore_mem>>
      %29 = tpu.memref_squeeze %28 : memref<1x!tpu.dma_semaphore, #tpu.memory_space<semaphore_mem>> -> memref<!tpu.dma_semaphore, #tpu.memory_space<semaphore_mem>>
      tpu.enqueue_dma source(%27 : memref<128x384xbf16, #tpu.memory_space<any>>) target(%arg10 : memref<128x384xbf16, #tpu.memory_space<vmem>>) target_semaphore(%29 : memref<!tpu.dma_semaphore, #tpu.memory_space<semaphore_mem>>)
      %c1_i32_25 = arith.constant 1 : i32
      %c0_i32_26 = arith.constant 0 : i32
      %c0_i32_27 = arith.constant 0 : i32
      %30 = tpu.memref_slice %arg5[%arg0, %c0_i32_26, %c0_i32_27] : memref<2x128x384xbf16, #tpu.memory_space<any>> -> memref<1x128x384xbf16, #tpu.memory_space<any>>
      %31 = tpu.memref_squeeze %30 : memref<1x128x384xbf16, #tpu.memory_space<any>> -> memref<128x384xbf16, #tpu.memory_space<any>>
      %32 = tpu.memref_slice %arg14[%c1_i32_25] : memref<2x!tpu.dma_semaphore, #tpu.memory_space<semaphore_mem>> -> memref<1x!tpu.dma_semaphore, #tpu.memory_space<semaphore_mem>>
      %33 = tpu.memref_squeeze %32 : memref<1x!tpu.dma_semaphore, #tpu.memory_space<semaphore_mem>> -> memref<!tpu.dma_semaphore, #tpu.memory_space<semaphore_mem>>
      tpu.enqueue_dma source(%31 : memref<128x384xbf16, #tpu.memory_space<any>>) target(%arg11 : memref<128x384xbf16, #tpu.memory_space<vmem>>) target_semaphore(%33 : memref<!tpu.dma_semaphore, #tpu.memory_space<semaphore_mem>>)
      %c0_i32_28 = arith.constant 0 : i32
      %c0_i32_29 = arith.constant 0 : i32
      %c0_i32_30 = arith.constant 0 : i32
      %34 = tpu.memref_slice %arg4[%arg0, %c0_i32_29, %c0_i32_30] : memref<2x128x384xbf16, #tpu.memory_space<any>> -> memref<1x128x384xbf16, #tpu.memory_space<any>>
      %35 = tpu.memref_squeeze %34 : memref<1x128x384xbf16, #tpu.memory_space<any>> -> memref<128x384xbf16, #tpu.memory_space<any>>
      %36 = tpu.memref_slice %arg14[%c0_i32_28] : memref<2x!tpu.dma_semaphore, #tpu.memory_space<semaphore_mem>> -> memref<1x!tpu.dma_semaphore, #tpu.memory_space<semaphore_mem>>
      %37 = tpu.memref_squeeze %36 : memref<1x!tpu.dma_semaphore, #tpu.memory_space<semaphore_mem>> -> memref<!tpu.dma_semaphore, #tpu.memory_space<semaphore_mem>>
      tpu.wait_dma2 semaphore(%37 : memref<!tpu.dma_semaphore, #tpu.memory_space<semaphore_mem>>) src(%35 : memref<128x384xbf16, #tpu.memory_space<any>>) dst(%arg10 : memref<128x384xbf16, #tpu.memory_space<vmem>>)
      %c1_i32_31 = arith.constant 1 : i32
      %c0_i32_32 = arith.constant 0 : i32
      %c0_i32_33 = arith.constant 0 : i32
      %38 = tpu.memref_slice %arg5[%arg0, %c0_i32_32, %c0_i32_33] : memref<2x128x384xbf16, #tpu.memory_space<any>> -> memref<1x128x384xbf16, #tpu.memory_space<any>>
      %39 = tpu.memref_squeeze %38 : memref<1x128x384xbf16, #tpu.memory_space<any>> -> memref<128x384xbf16, #tpu.memory_space<any>>
      %40 = tpu.memref_slice %arg14[%c1_i32_31] : memref<2x!tpu.dma_semaphore, #tpu.memory_space<semaphore_mem>> -> memref<1x!tpu.dma_semaphore, #tpu.memory_space<semaphore_mem>>
      %41 = tpu.memref_squeeze %40 : memref<1x!tpu.dma_semaphore, #tpu.memory_space<semaphore_mem>> -> memref<!tpu.dma_semaphore, #tpu.memory_space<semaphore_mem>>
      tpu.wait_dma2 semaphore(%41 : memref<!tpu.dma_semaphore, #tpu.memory_space<semaphore_mem>>) src(%39 : memref<128x384xbf16, #tpu.memory_space<any>>) dst(%arg11 : memref<128x384xbf16, #tpu.memory_space<vmem>>)
    } else {
    }
    %c0 = arith.constant 0 : index
    %c0_1 = arith.constant 0 : index
    %3 = vector.load %arg2[%c0, %c0_1] : memref<64x128xbf16, #tpu.memory_space<vmem>>, vector<64x128xbf16>
    %c0_2 = arith.constant 0 : index
    %c0_3 = arith.constant 0 : index
    %4 = vector.load %arg10[%c0_2, %c0_3] : memref<128x384xbf16, #tpu.memory_space<vmem>>, vector<128x384xbf16>
    %cst = arith.constant dense<0.000000e+00> : vector<64x384xf32>
    %5 = tpu.matmul %3, %4, %cst {dimension_numbers = #tpu.dot_dimension_numbers<[1], [0], [0], [1], [0, 0, 1, 1], [], []>} : vector<64x128xbf16>, vector<128x384xbf16>, vector<64x384xf32> -> vector<64x384xf32>
    %c0_4 = arith.constant 0 : index
    %c0_5 = arith.constant 0 : index
    %c0_6 = arith.constant 0 : index
    %6 = vector.load %arg6[%c0_4, %c0_5, %c0_6] : memref<1x1x384xf32, #tpu.memory_space<vmem>>, vector<1x1x384xf32>
    %7 = vector.shape_cast %6 : vector<1x1x384xf32> to vector<1x384xf32>
    %8 = vector.broadcast %7 : vector<1x384xf32> to vector<64x384xf32>
    %9 = arith.addf %5, %8 : vector<64x384xf32>
    %10 = arith.truncf %9 : vector<64x384xf32> to vector<64x384xbf16>
    %c0_7 = arith.constant 0 : index
    %c0_8 = arith.constant 0 : index
    %11 = vector.load %arg12[%c0_7, %c0_8] : memref<64x384xbf16, #tpu.memory_space<vmem>>, vector<64x384xbf16>
    tpu.vector_store %arg12[%c0_7, %c0_8], %10 {strides = array<i32>} : memref<64x384xbf16, #tpu.memory_space<vmem>>, vector<64x384xbf16>,
    %c0_9 = arith.constant 0 : index
    %c0_10 = arith.constant 0 : index
    %12 = vector.load %arg11[%c0_9, %c0_10] : memref<128x384xbf16, #tpu.memory_space<vmem>>, vector<128x384xbf16>
    %c0_11 = arith.constant 0 : index
    %c0_12 = arith.constant 0 : index
    %c0_13 = arith.constant 0 : index
    %13 = vector.load %arg7[%c0_11, %c0_12, %c0_13] : memref<1x1x384xf32, #tpu.memory_space<vmem>>, vector<1x1x384xf32>
    %14 = vector.shape_cast %13 : vector<1x1x384xf32> to vector<1x384xf32>
    %c0_i32_14 = arith.constant 0 : i32
    %15 = arith.cmpi eq, %arg0, %c0_i32_14 : i32
    %16 = arith.extui %15 : i1 to i32
    %c0_i32_15 = arith.constant 0 : i32
    %17 = arith.cmpi ne, %16, %c0_i32_15 : i32
    scf.if %17 {
      %c0_19 = arith.constant 0 : index
      %c0_20 = arith.constant 0 : index
      %24 = vector.load %arg13[%c0_19, %c0_20] : memref<16x128xf32, #tpu.memory_space<vmem>>, vector<16x128xf32>
      %c0_i32_21 = arith.constant 0 : i32
      %c16_i32 = arith.constant 16 : i32
      %25 = arith.muli %c0_i32_21, %c16_i32 : i32
      %26 = tpu.assume_multiple %25, 16 : i32
      %27 = arith.index_cast %26 : i32 to index
      %c0_22 = arith.constant 0 : index
      %28 = vector.load %arg12[%27, %c0_22] : memref<64x384xbf16, #tpu.memory_space<vmem>>, vector<16x384xbf16>
      %29 = arith.index_cast %26 : i32 to index
      %c0_23 = arith.constant 0 : index
      %30 = vector.load %arg3[%29, %c0_23] : memref<64x1xf32, #tpu.memory_space<vmem>>, vector<16x1xf32>
      %31 = arith.truncf %24 : vector<16x128xf32> to vector<16x128xbf16>
      %cst_24 = arith.constant dense<0.000000e+00> : vector<16x384xf32>
      %32 = tpu.matmul %31, %12, %cst_24 {dimension_numbers = #tpu.dot_dimension_numbers<[1], [0], [0], [1], [0, 0, 1, 1], [], []>} : vector<16x128xbf16>, vector<128x384xbf16>, vector<16x384xf32> -> vector<16x384xf32>
      %33 = vector.broadcast %14 : vector<1x384xf32> to vector<16x384xf32>
      %34 = arith.addf %32, %33 : vector<16x384xf32>
      %35 = vector.extract_strided_slice %28 {offsets = [0, 0], sizes = [16, 128], strides = [1, 1]} : vector<16x384xbf16> to vector<16x128xbf16>
      %36 = vector.extract_strided_slice %34 {offsets = [0, 0], sizes = [16, 128], strides = [1, 1]} : vector<16x384xf32> to vector<16x128xf32>
      %37 = arith.extf %35 : vector<16x128xbf16> to vector<16x128xf32>
      %38 = arith.addf %37, %36 : vector<16x128xf32>
      %39 = arith.negf %38 : vector<16x128xf32>
      %40 = math.exp %39 : vector<16x128xf32>
      %cst_25 = arith.constant 1.000000e+00 : f32
      %41 = vector.broadcast %cst_25 : f32 to vector<16x128xf32>
      %42 = arith.addf %41, %40 : vector<16x128xf32>
      %43 = arith.divf %41, %42 : vector<16x128xf32>
      %44 = vector.extract_strided_slice %28 {offsets = [0, 128], sizes = [16, 128], strides = [1, 1]} : vector<16x384xbf16> to vector<16x128xbf16>
      %45 = vector.extract_strided_slice %34 {offsets = [0, 128], sizes = [16, 128], strides = [1, 1]} : vector<16x384xf32> to vector<16x128xf32>
      %46 = arith.extf %44 : vector<16x128xbf16> to vector<16x128xf32>
      %47 = arith.addf %46, %45 : vector<16x128xf32>
      %48 = arith.negf %47 : vector<16x128xf32>
      %49 = math.exp %48 : vector<16x128xf32>
      %cst_26 = arith.constant 1.000000e+00 : f32
      %50 = vector.broadcast %cst_26 : f32 to vector<16x128xf32>
      %51 = arith.addf %50, %49 : vector<16x128xf32>
      %52 = arith.divf %50, %51 : vector<16x128xf32>
      %53 = vector.extract_strided_slice %28 {offsets = [0, 256], sizes = [16, 128], strides = [1, 1]} : vector<16x384xbf16> to vector<16x128xbf16>
      %54 = vector.extract_strided_slice %34 {offsets = [0, 256], sizes = [16, 128], strides = [1, 1]} : vector<16x384xf32> to vector<16x128xf32>
      %55 = arith.mulf %43, %54 : vector<16x128xf32>
      %56 = arith.extf %53 : vector<16x128xbf16> to vector<16x128xf32>
      %57 = arith.addf %56, %55 : vector<16x128xf32>
      %58 = math.tanh %57 : vector<16x128xf32>
      %cst_27 = arith.constant 1.000000e+00 : f32
      %59 = vector.broadcast %cst_27 : f32 to vector<16x128xf32>
      %60 = arith.subf %59, %52 : vector<16x128xf32>
      %61 = arith.mulf %60, %58 : vector<16x128xf32>
      %62 = arith.mulf %52, %24 : vector<16x128xf32>
      %63 = arith.addf %61, %62 : vector<16x128xf32>
      %64 = vector.broadcast %30 : vector<16x1xf32> to vector<16x128xf32>
      %65 = arith.mulf %64, %63 : vector<16x128xf32>
      %66 = arith.truncf %65 : vector<16x128xf32> to vector<16x128xbf16>
      %67 = arith.index_cast %26 : i32 to index
      %c0_28 = arith.constant 0 : index
      %68 = vector.load %arg8[%67, %c0_28] : memref<64x128xbf16, #tpu.memory_space<vmem>>, vector<16x128xbf16>
      tpu.vector_store %arg8[%67, %c0_28], %66 {strides = array<i32>} : memref<64x128xbf16, #tpu.memory_space<vmem>>, vector<16x128xbf16>,
      %69 = vector.broadcast %30 : vector<16x1xf32> to vector<16x128xf32>
      %70 = arith.mulf %69, %63 : vector<16x128xf32>
      %cst_29 = arith.constant 1.000000e+00 : f32
      %71 = vector.broadcast %cst_29 : f32 to vector<16x1xf32>
      %72 = arith.subf %71, %30 : vector<16x1xf32>
      %73 = vector.broadcast %72 : vector<16x1xf32> to vector<16x128xf32>
      %74 = arith.mulf %73, %24 : vector<16x128xf32>
      %75 = arith.addf %70, %74 : vector<16x128xf32>
      %c1_i32_30 = arith.constant 1 : i32
      %c16_i32_31 = arith.constant 16 : i32
      %76 = arith.muli %c1_i32_30, %c16_i32_31 : i32
      %77 = tpu.assume_multiple %76, 16 : i32
      %78 = arith.index_cast %77 : i32 to index
      %c0_32 = arith.constant 0 : index
      %79 = vector.load %arg12[%78, %c0_32] : memref<64x384xbf16, #tpu.memory_space<vmem>>, vector<16x384xbf16>
      %80 = arith.index_cast %77 : i32 to index
      %c0_33 = arith.constant 0 : index
      %81 = vector.load %arg3[%80, %c0_33] : memref<64x1xf32, #tpu.memory_space<vmem>>, vector<16x1xf32>
      %82 = arith.truncf %75 : vector<16x128xf32> to vector<16x128xbf16>
      %cst_34 = arith.constant dense<0.000000e+00> : vector<16x384xf32>
      %83 = tpu.matmul %82, %12, %cst_34 {dimension_numbers = #tpu.dot_dimension_numbers<[1], [0], [0], [1], [0, 0, 1, 1], [], []>} : vector<16x128xbf16>, vector<128x384xbf16>, vector<16x384xf32> -> vector<16x384xf32>
      %84 = vector.broadcast %14 : vector<1x384xf32> to vector<16x384xf32>
      %85 = arith.addf %83, %84 : vector<16x384xf32>
      %86 = vector.extract_strided_slice %79 {offsets = [0, 0], sizes = [16, 128], strides = [1, 1]} : vector<16x384xbf16> to vector<16x128xbf16>
      %87 = vector.extract_strided_slice %85 {offsets = [0, 0], sizes = [16, 128], strides = [1, 1]} : vector<16x384xf32> to vector<16x128xf32>
      %88 = arith.extf %86 : vector<16x128xbf16> to vector<16x128xf32>
      %89 = arith.addf %88, %87 : vector<16x128xf32>
      %90 = arith.negf %89 : vector<16x128xf32>
      %91 = math.exp %90 : vector<16x128xf32>
      %cst_35 = arith.constant 1.000000e+00 : f32
      %92 = vector.broadcast %cst_35 : f32 to vector<16x128xf32>
      %93 = arith.addf %92, %91 : vector<16x128xf32>
      %94 = arith.divf %92, %93 : vector<16x128xf32>
      %95 = vector.extract_strided_slice %79 {offsets = [0, 128], sizes = [16, 128], strides = [1, 1]} : vector<16x384xbf16> to vector<16x128xbf16>
      %96 = vector.extract_strided_slice %85 {offsets = [0, 128], sizes = [16, 128], strides = [1, 1]} : vector<16x384xf32> to vector<16x128xf32>
      %97 = arith.extf %95 : vector<16x128xbf16> to vector<16x128xf32>
      %98 = arith.addf %97, %96 : vector<16x128xf32>
      %99 = arith.negf %98 : vector<16x128xf32>
      %100 = math.exp %99 : vector<16x128xf32>
      %cst_36 = arith.constant 1.000000e+00 : f32
      %101 = vector.broadcast %cst_36 : f32 to vector<16x128xf32>
      %102 = arith.addf %101, %100 : vector<16x128xf32>
      %103 = arith.divf %101, %102 : vector<16x128xf32>
      %104 = vector.extract_strided_slice %79 {offsets = [0, 256], sizes = [16, 128], strides = [1, 1]} : vector<16x384xbf16> to vector<16x128xbf16>
      %105 = vector.extract_strided_slice %85 {offsets = [0, 256], sizes = [16, 128], strides = [1, 1]} : vector<16x384xf32> to vector<16x128xf32>
      %106 = arith.mulf %94, %105 : vector<16x128xf32>
      %107 = arith.extf %104 : vector<16x128xbf16> to vector<16x128xf32>
      %108 = arith.addf %107, %106 : vector<16x128xf32>
      %109 = math.tanh %108 : vector<16x128xf32>
      %cst_37 = arith.constant 1.000000e+00 : f32
      %110 = vector.broadcast %cst_37 : f32 to vector<16x128xf32>
      %111 = arith.subf %110, %103 : vector<16x128xf32>
      %112 = arith.mulf %111, %109 : vector<16x128xf32>
      %113 = arith.mulf %103, %75 : vector<16x128xf32>
      %114 = arith.addf %112, %113 : vector<16x128xf32>
      %115 = vector.broadcast %81 : vector<16x1xf32> to vector<16x128xf32>
      %116 = arith.mulf %115, %114 : vector<16x128xf32>
      %117 = arith.truncf %116 : vector<16x128xf32> to vector<16x128xbf16>
      %118 = arith.index_cast %77 : i32 to index
      %c0_38 = arith.constant 0 : index
      %119 = vector.load %arg8[%118, %c0_38] : memref<64x128xbf16, #tpu.memory_space<vmem>>, vector<16x128xbf16>
      tpu.vector_store %arg8[%118, %c0_38], %117 {strides = array<i32>} : memref<64x128xbf16, #tpu.memory_space<vmem>>, vector<16x128xbf16>,
      %120 = vector.broadcast %81 : vector<16x1xf32> to vector<16x128xf32>
      %121 = arith.mulf %120, %114 : vector<16x128xf32>
      %cst_39 = arith.constant 1.000000e+00 : f32
      %122 = vector.broadcast %cst_39 : f32 to vector<16x1xf32>
      %123 = arith.subf %122, %81 : vector<16x1xf32>
      %124 = vector.broadcast %123 : vector<16x1xf32> to vector<16x128xf32>
      %125 = arith.mulf %124, %75 : vector<16x128xf32>
      %126 = arith.addf %121, %125 : vector<16x128xf32>
      %c2_i32 = arith.constant 2 : i32
      %c16_i32_40 = arith.constant 16 : i32
      %127 = arith.muli %c2_i32, %c16_i32_40 : i32
      %128 = tpu.assume_multiple %127, 16 : i32
      %129 = arith.index_cast %128 : i32 to index
      %c0_41 = arith.constant 0 : index
      %130 = vector.load %arg12[%129, %c0_41] : memref<64x384xbf16, #tpu.memory_space<vmem>>, vector<16x384xbf16>
      %131 = arith.index_cast %128 : i32 to index
      %c0_42 = arith.constant 0 : index
      %132 = vector.load %arg3[%131, %c0_42] : memref<64x1xf32, #tpu.memory_space<vmem>>, vector<16x1xf32>
      %133 = arith.truncf %126 : vector<16x128xf32> to vector<16x128xbf16>
      %cst_43 = arith.constant dense<0.000000e+00> : vector<16x384xf32>
      %134 = tpu.matmul %133, %12, %cst_43 {dimension_numbers = #tpu.dot_dimension_numbers<[1], [0], [0], [1], [0, 0, 1, 1], [], []>} : vector<16x128xbf16>, vector<128x384xbf16>, vector<16x384xf32> -> vector<16x384xf32>
      %135 = vector.broadcast %14 : vector<1x384xf32> to vector<16x384xf32>
      %136 = arith.addf %134, %135 : vector<16x384xf32>
      %137 = vector.extract_strided_slice %130 {offsets = [0, 0], sizes = [16, 128], strides = [1, 1]} : vector<16x384xbf16> to vector<16x128xbf16>
      %138 = vector.extract_strided_slice %136 {offsets = [0, 0], sizes = [16, 128], strides = [1, 1]} : vector<16x384xf32> to vector<16x128xf32>
      %139 = arith.extf %137 : vector<16x128xbf16> to vector<16x128xf32>
      %140 = arith.addf %139, %138 : vector<16x128xf32>
      %141 = arith.negf %140 : vector<16x128xf32>
      %142 = math.exp %141 : vector<16x128xf32>
      %cst_44 = arith.constant 1.000000e+00 : f32
      %143 = vector.broadcast %cst_44 : f32 to vector<16x128xf32>
      %144 = arith.addf %143, %142 : vector<16x128xf32>
      %145 = arith.divf %143, %144 : vector<16x128xf32>
      %146 = vector.extract_strided_slice %130 {offsets = [0, 128], sizes = [16, 128], strides = [1, 1]} : vector<16x384xbf16> to vector<16x128xbf16>
      %147 = vector.extract_strided_slice %136 {offsets = [0, 128], sizes = [16, 128], strides = [1, 1]} : vector<16x384xf32> to vector<16x128xf32>
      %148 = arith.extf %146 : vector<16x128xbf16> to vector<16x128xf32>
      %149 = arith.addf %148, %147 : vector<16x128xf32>
      %150 = arith.negf %149 : vector<16x128xf32>
      %151 = math.exp %150 : vector<16x128xf32>
      %cst_45 = arith.constant 1.000000e+00 : f32
      %152 = vector.broadcast %cst_45 : f32 to vector<16x128xf32>
      %153 = arith.addf %152, %151 : vector<16x128xf32>
      %154 = arith.divf %152, %153 : vector<16x128xf32>
      %155 = vector.extract_strided_slice %130 {offsets = [0, 256], sizes = [16, 128], strides = [1, 1]} : vector<16x384xbf16> to vector<16x128xbf16>
      %156 = vector.extract_strided_slice %136 {offsets = [0, 256], sizes = [16, 128], strides = [1, 1]} : vector<16x384xf32> to vector<16x128xf32>
      %157 = arith.mulf %145, %156 : vector<16x128xf32>
      %158 = arith.extf %155 : vector<16x128xbf16> to vector<16x128xf32>
      %159 = arith.addf %158, %157 : vector<16x128xf32>
      %160 = math.tanh %159 : vector<16x128xf32>
      %cst_46 = arith.constant 1.000000e+00 : f32
      %161 = vector.broadcast %cst_46 : f32 to vector<16x128xf32>
      %162 = arith.subf %161, %154 : vector<16x128xf32>
      %163 = arith.mulf %162, %160 : vector<16x128xf32>
      %164 = arith.mulf %154, %126 : vector<16x128xf32>
      %165 = arith.addf %163, %164 : vector<16x128xf32>
      %166 = vector.broadcast %132 : vector<16x1xf32> to vector<16x128xf32>
      %167 = arith.mulf %166, %165 : vector<16x128xf32>
      %168 = arith.truncf %167 : vector<16x128xf32> to vector<16x128xbf16>
      %169 = arith.index_cast %128 : i32 to index
      %c0_47 = arith.constant 0 : index
      %170 = vector.load %arg8[%169, %c0_47] : memref<64x128xbf16, #tpu.memory_space<vmem>>, vector<16x128xbf16>
      tpu.vector_store %arg8[%169, %c0_47], %168 {strides = array<i32>} : memref<64x128xbf16, #tpu.memory_space<vmem>>, vector<16x128xbf16>,
      %171 = vector.broadcast %132 : vector<16x1xf32> to vector<16x128xf32>
      %172 = arith.mulf %171, %165 : vector<16x128xf32>
      %cst_48 = arith.constant 1.000000e+00 : f32
      %173 = vector.broadcast %cst_48 : f32 to vector<16x1xf32>
      %174 = arith.subf %173, %132 : vector<16x1xf32>
      %175 = vector.broadcast %174 : vector<16x1xf32> to vector<16x128xf32>
      %176 = arith.mulf %175, %126 : vector<16x128xf32>
      %177 = arith.addf %172, %176 : vector<16x128xf32>
      %c3_i32 = arith.constant 3 : i32
      %c16_i32_49 = arith.constant 16 : i32
      %178 = arith.muli %c3_i32, %c16_i32_49 : i32
      %179 = tpu.assume_multiple %178, 16 : i32
      %180 = arith.index_cast %179 : i32 to index
      %c0_50 = arith.constant 0 : index
      %181 = vector.load %arg12[%180, %c0_50] : memref<64x384xbf16, #tpu.memory_space<vmem>>, vector<16x384xbf16>
      %182 = arith.index_cast %179 : i32 to index
      %c0_51 = arith.constant 0 : index
      %183 = vector.load %arg3[%182, %c0_51] : memref<64x1xf32, #tpu.memory_space<vmem>>, vector<16x1xf32>
      %184 = arith.truncf %177 : vector<16x128xf32> to vector<16x128xbf16>
      %cst_52 = arith.constant dense<0.000000e+00> : vector<16x384xf32>
      %185 = tpu.matmul %184, %12, %cst_52 {dimension_numbers = #tpu.dot_dimension_numbers<[1], [0], [0], [1], [0, 0, 1, 1], [], []>} : vector<16x128xbf16>, vector<128x384xbf16>, vector<16x384xf32> -> vector<16x384xf32>
      %186 = vector.broadcast %14 : vector<1x384xf32> to vector<16x384xf32>
      %187 = arith.addf %185, %186 : vector<16x384xf32>
      %188 = vector.extract_strided_slice %181 {offsets = [0, 0], sizes = [16, 128], strides = [1, 1]} : vector<16x384xbf16> to vector<16x128xbf16>
      %189 = vector.extract_strided_slice %187 {offsets = [0, 0], sizes = [16, 128], strides = [1, 1]} : vector<16x384xf32> to vector<16x128xf32>
      %190 = arith.extf %188 : vector<16x128xbf16> to vector<16x128xf32>
      %191 = arith.addf %190, %189 : vector<16x128xf32>
      %192 = arith.negf %191 : vector<16x128xf32>
      %193 = math.exp %192 : vector<16x128xf32>
      %cst_53 = arith.constant 1.000000e+00 : f32
      %194 = vector.broadcast %cst_53 : f32 to vector<16x128xf32>
      %195 = arith.addf %194, %193 : vector<16x128xf32>
      %196 = arith.divf %194, %195 : vector<16x128xf32>
      %197 = vector.extract_strided_slice %181 {offsets = [0, 128], sizes = [16, 128], strides = [1, 1]} : vector<16x384xbf16> to vector<16x128xbf16>
      %198 = vector.extract_strided_slice %187 {offsets = [0, 128], sizes = [16, 128], strides = [1, 1]} : vector<16x384xf32> to vector<16x128xf32>
      %199 = arith.extf %197 : vector<16x128xbf16> to vector<16x128xf32>
      %200 = arith.addf %199, %198 : vector<16x128xf32>
      %201 = arith.negf %200 : vector<16x128xf32>
      %202 = math.exp %201 : vector<16x128xf32>
      %cst_54 = arith.constant 1.000000e+00 : f32
      %203 = vector.broadcast %cst_54 : f32 to vector<16x128xf32>
      %204 = arith.addf %203, %202 : vector<16x128xf32>
      %205 = arith.divf %203, %204 : vector<16x128xf32>
      %206 = vector.extract_strided_slice %181 {offsets = [0, 256], sizes = [16, 128], strides = [1, 1]} : vector<16x384xbf16> to vector<16x128xbf16>
      %207 = vector.extract_strided_slice %187 {offsets = [0, 256], sizes = [16, 128], strides = [1, 1]} : vector<16x384xf32> to vector<16x128xf32>
      %208 = arith.mulf %196, %207 : vector<16x128xf32>
      %209 = arith.extf %206 : vector<16x128xbf16> to vector<16x128xf32>
      %210 = arith.addf %209, %208 : vector<16x128xf32>
      %211 = math.tanh %210 : vector<16x128xf32>
      %cst_55 = arith.constant 1.000000e+00 : f32
      %212 = vector.broadcast %cst_55 : f32 to vector<16x128xf32>
      %213 = arith.subf %212, %205 : vector<16x128xf32>
      %214 = arith.mulf %213, %211 : vector<16x128xf32>
      %215 = arith.mulf %205, %177 : vector<16x128xf32>
      %216 = arith.addf %214, %215 : vector<16x128xf32>
      %217 = vector.broadcast %183 : vector<16x1xf32> to vector<16x128xf32>
      %218 = arith.mulf %217, %216 : vector<16x128xf32>
      %219 = arith.truncf %218 : vector<16x128xf32> to vector<16x128xbf16>
      %220 = arith.index_cast %179 : i32 to index
      %c0_56 = arith.constant 0 : index
      %221 = vector.load %arg8[%220, %c0_56] : memref<64x128xbf16, #tpu.memory_space<vmem>>, vector<16x128xbf16>
      tpu.vector_store %arg8[%220, %c0_56], %219 {strides = array<i32>} : memref<64x128xbf16, #tpu.memory_space<vmem>>, vector<16x128xbf16>,
      %222 = vector.broadcast %183 : vector<16x1xf32> to vector<16x128xf32>
      %223 = arith.mulf %222, %216 : vector<16x128xf32>
      %cst_57 = arith.constant 1.000000e+00 : f32
      %224 = vector.broadcast %cst_57 : f32 to vector<16x1xf32>
      %225 = arith.subf %224, %183 : vector<16x1xf32>
      %226 = vector.broadcast %225 : vector<16x1xf32> to vector<16x128xf32>
      %227 = arith.mulf %226, %177 : vector<16x128xf32>
      %228 = arith.addf %223, %227 : vector<16x128xf32>
      %c4_i32 = arith.constant 4 : i32
      %c0_58 = arith.constant 0 : index
      %c0_59 = arith.constant 0 : index
      %229 = vector.load %arg13[%c0_58, %c0_59] : memref<16x128xf32, #tpu.memory_space<vmem>>, vector<16x128xf32>
      tpu.vector_store %arg13[%c0_58, %c0_59], %228 {strides = array<i32>} : memref<16x128xf32, #tpu.memory_space<vmem>>, vector<16x128xf32>,
    } else {
    }
    %c1_i32 = arith.constant 1 : i32
    %18 = arith.cmpi eq, %arg0, %c1_i32 : i32
    %19 = arith.extui %18 : i1 to i32
    %c0_i32_16 = arith.constant 0 : i32
    %20 = arith.cmpi ne, %19, %c0_i32_16 : i32
    scf.if %20 {
      %c0_19 = arith.constant 0 : index
      %c0_20 = arith.constant 0 : index
      %24 = vector.load %arg13[%c0_19, %c0_20] : memref<16x128xf32, #tpu.memory_space<vmem>>, vector<16x128xf32>
      %c0_i32_21 = arith.constant 0 : i32
      %c3_i32 = arith.constant 3 : i32
      %25 = arith.subi %c3_i32, %c0_i32_21 : i32
      %c16_i32 = arith.constant 16 : i32
      %26 = arith.muli %25, %c16_i32 : i32
      %27 = tpu.assume_multiple %26, 16 : i32
      %28 = arith.index_cast %27 : i32 to index
      %c0_22 = arith.constant 0 : index
      %29 = vector.load %arg12[%28, %c0_22] : memref<64x384xbf16, #tpu.memory_space<vmem>>, vector<16x384xbf16>
      %30 = arith.index_cast %27 : i32 to index
      %c0_23 = arith.constant 0 : index
      %31 = vector.load %arg3[%30, %c0_23] : memref<64x1xf32, #tpu.memory_space<vmem>>, vector<16x1xf32>
      %32 = arith.truncf %24 : vector<16x128xf32> to vector<16x128xbf16>
      %cst_24 = arith.constant dense<0.000000e+00> : vector<16x384xf32>
      %33 = tpu.matmul %32, %12, %cst_24 {dimension_numbers = #tpu.dot_dimension_numbers<[1], [0], [0], [1], [0, 0, 1, 1], [], []>} : vector<16x128xbf16>, vector<128x384xbf16>, vector<16x384xf32> -> vector<16x384xf32>
      %34 = vector.broadcast %14 : vector<1x384xf32> to vector<16x384xf32>
      %35 = arith.addf %33, %34 : vector<16x384xf32>
      %36 = vector.extract_strided_slice %29 {offsets = [0, 0], sizes = [16, 128], strides = [1, 1]} : vector<16x384xbf16> to vector<16x128xbf16>
      %37 = vector.extract_strided_slice %35 {offsets = [0, 0], sizes = [16, 128], strides = [1, 1]} : vector<16x384xf32> to vector<16x128xf32>
      %38 = arith.extf %36 : vector<16x128xbf16> to vector<16x128xf32>
      %39 = arith.addf %38, %37 : vector<16x128xf32>
      %40 = arith.negf %39 : vector<16x128xf32>
      %41 = math.exp %40 : vector<16x128xf32>
      %cst_25 = arith.constant 1.000000e+00 : f32
      %42 = vector.broadcast %cst_25 : f32 to vector<16x128xf32>
      %43 = arith.addf %42, %41 : vector<16x128xf32>
      %44 = arith.divf %42, %43 : vector<16x128xf32>
      %45 = vector.extract_strided_slice %29 {offsets = [0, 128], sizes = [16, 128], strides = [1, 1]} : vector<16x384xbf16> to vector<16x128xbf16>
      %46 = vector.extract_strided_slice %35 {offsets = [0, 128], sizes = [16, 128], strides = [1, 1]} : vector<16x384xf32> to vector<16x128xf32>
      %47 = arith.extf %45 : vector<16x128xbf16> to vector<16x128xf32>
      %48 = arith.addf %47, %46 : vector<16x128xf32>
      %49 = arith.negf %48 : vector<16x128xf32>
      %50 = math.exp %49 : vector<16x128xf32>
      %cst_26 = arith.constant 1.000000e+00 : f32
      %51 = vector.broadcast %cst_26 : f32 to vector<16x128xf32>
      %52 = arith.addf %51, %50 : vector<16x128xf32>
      %53 = arith.divf %51, %52 : vector<16x128xf32>
      %54 = vector.extract_strided_slice %29 {offsets = [0, 256], sizes = [16, 128], strides = [1, 1]} : vector<16x384xbf16> to vector<16x128xbf16>
      %55 = vector.extract_strided_slice %35 {offsets = [0, 256], sizes = [16, 128], strides = [1, 1]} : vector<16x384xf32> to vector<16x128xf32>
      %56 = arith.mulf %44, %55 : vector<16x128xf32>
      %57 = arith.extf %54 : vector<16x128xbf16> to vector<16x128xf32>
      %58 = arith.addf %57, %56 : vector<16x128xf32>
      %59 = math.tanh %58 : vector<16x128xf32>
      %cst_27 = arith.constant 1.000000e+00 : f32
      %60 = vector.broadcast %cst_27 : f32 to vector<16x128xf32>
      %61 = arith.subf %60, %53 : vector<16x128xf32>
      %62 = arith.mulf %61, %59 : vector<16x128xf32>
      %63 = arith.mulf %53, %24 : vector<16x128xf32>
      %64 = arith.addf %62, %63 : vector<16x128xf32>
      %65 = vector.broadcast %31 : vector<16x1xf32> to vector<16x128xf32>
      %66 = arith.mulf %65, %64 : vector<16x128xf32>
      %67 = arith.truncf %66 : vector<16x128xf32> to vector<16x128xbf16>
      %68 = arith.index_cast %27 : i32 to index
      %c0_28 = arith.constant 0 : index
      %69 = vector.load %arg8[%68, %c0_28] : memref<64x128xbf16, #tpu.memory_space<vmem>>, vector<16x128xbf16>
      tpu.vector_store %arg8[%68, %c0_28], %67 {strides = array<i32>} : memref<64x128xbf16, #tpu.memory_space<vmem>>, vector<16x128xbf16>,
      %70 = vector.broadcast %31 : vector<16x1xf32> to vector<16x128xf32>
      %71 = arith.mulf %70, %64 : vector<16x128xf32>
      %cst_29 = arith.constant 1.000000e+00 : f32
      %72 = vector.broadcast %cst_29 : f32 to vector<16x1xf32>
      %73 = arith.subf %72, %31 : vector<16x1xf32>
      %74 = vector.broadcast %73 : vector<16x1xf32> to vector<16x128xf32>
      %75 = arith.mulf %74, %24 : vector<16x128xf32>
      %76 = arith.addf %71, %75 : vector<16x128xf32>
      %c1_i32_30 = arith.constant 1 : i32
      %c3_i32_31 = arith.constant 3 : i32
      %77 = arith.subi %c3_i32_31, %c1_i32_30 : i32
      %c16_i32_32 = arith.constant 16 : i32
      %78 = arith.muli %77, %c16_i32_32 : i32
      %79 = tpu.assume_multiple %78, 16 : i32
      %80 = arith.index_cast %79 : i32 to index
      %c0_33 = arith.constant 0 : index
      %81 = vector.load %arg12[%80, %c0_33] : memref<64x384xbf16, #tpu.memory_space<vmem>>, vector<16x384xbf16>
      %82 = arith.index_cast %79 : i32 to index
      %c0_34 = arith.constant 0 : index
      %83 = vector.load %arg3[%82, %c0_34] : memref<64x1xf32, #tpu.memory_space<vmem>>, vector<16x1xf32>
      %84 = arith.truncf %76 : vector<16x128xf32> to vector<16x128xbf16>
      %cst_35 = arith.constant dense<0.000000e+00> : vector<16x384xf32>
      %85 = tpu.matmul %84, %12, %cst_35 {dimension_numbers = #tpu.dot_dimension_numbers<[1], [0], [0], [1], [0, 0, 1, 1], [], []>} : vector<16x128xbf16>, vector<128x384xbf16>, vector<16x384xf32> -> vector<16x384xf32>
      %86 = vector.broadcast %14 : vector<1x384xf32> to vector<16x384xf32>
      %87 = arith.addf %85, %86 : vector<16x384xf32>
      %88 = vector.extract_strided_slice %81 {offsets = [0, 0], sizes = [16, 128], strides = [1, 1]} : vector<16x384xbf16> to vector<16x128xbf16>
      %89 = vector.extract_strided_slice %87 {offsets = [0, 0], sizes = [16, 128], strides = [1, 1]} : vector<16x384xf32> to vector<16x128xf32>
      %90 = arith.extf %88 : vector<16x128xbf16> to vector<16x128xf32>
      %91 = arith.addf %90, %89 : vector<16x128xf32>
      %92 = arith.negf %91 : vector<16x128xf32>
      %93 = math.exp %92 : vector<16x128xf32>
      %cst_36 = arith.constant 1.000000e+00 : f32
      %94 = vector.broadcast %cst_36 : f32 to vector<16x128xf32>
      %95 = arith.addf %94, %93 : vector<16x128xf32>
      %96 = arith.divf %94, %95 : vector<16x128xf32>
      %97 = vector.extract_strided_slice %81 {offsets = [0, 128], sizes = [16, 128], strides = [1, 1]} : vector<16x384xbf16> to vector<16x128xbf16>
      %98 = vector.extract_strided_slice %87 {offsets = [0, 128], sizes = [16, 128], strides = [1, 1]} : vector<16x384xf32> to vector<16x128xf32>
      %99 = arith.extf %97 : vector<16x128xbf16> to vector<16x128xf32>
      %100 = arith.addf %99, %98 : vector<16x128xf32>
      %101 = arith.negf %100 : vector<16x128xf32>
      %102 = math.exp %101 : vector<16x128xf32>
      %cst_37 = arith.constant 1.000000e+00 : f32
      %103 = vector.broadcast %cst_37 : f32 to vector<16x128xf32>
      %104 = arith.addf %103, %102 : vector<16x128xf32>
      %105 = arith.divf %103, %104 : vector<16x128xf32>
      %106 = vector.extract_strided_slice %81 {offsets = [0, 256], sizes = [16, 128], strides = [1, 1]} : vector<16x384xbf16> to vector<16x128xbf16>
      %107 = vector.extract_strided_slice %87 {offsets = [0, 256], sizes = [16, 128], strides = [1, 1]} : vector<16x384xf32> to vector<16x128xf32>
      %108 = arith.mulf %96, %107 : vector<16x128xf32>
      %109 = arith.extf %106 : vector<16x128xbf16> to vector<16x128xf32>
      %110 = arith.addf %109, %108 : vector<16x128xf32>
      %111 = math.tanh %110 : vector<16x128xf32>
      %cst_38 = arith.constant 1.000000e+00 : f32
      %112 = vector.broadcast %cst_38 : f32 to vector<16x128xf32>
      %113 = arith.subf %112, %105 : vector<16x128xf32>
      %114 = arith.mulf %113, %111 : vector<16x128xf32>
      %115 = arith.mulf %105, %76 : vector<16x128xf32>
      %116 = arith.addf %114, %115 : vector<16x128xf32>
      %117 = vector.broadcast %83 : vector<16x1xf32> to vector<16x128xf32>
      %118 = arith.mulf %117, %116 : vector<16x128xf32>
      %119 = arith.truncf %118 : vector<16x128xf32> to vector<16x128xbf16>
      %120 = arith.index_cast %79 : i32 to index
      %c0_39 = arith.constant 0 : index
      %121 = vector.load %arg8[%120, %c0_39] : memref<64x128xbf16, #tpu.memory_space<vmem>>, vector<16x128xbf16>
      tpu.vector_store %arg8[%120, %c0_39], %119 {strides = array<i32>} : memref<64x128xbf16, #tpu.memory_space<vmem>>, vector<16x128xbf16>,
      %122 = vector.broadcast %83 : vector<16x1xf32> to vector<16x128xf32>
      %123 = arith.mulf %122, %116 : vector<16x128xf32>
      %cst_40 = arith.constant 1.000000e+00 : f32
      %124 = vector.broadcast %cst_40 : f32 to vector<16x1xf32>
      %125 = arith.subf %124, %83 : vector<16x1xf32>
      %126 = vector.broadcast %125 : vector<16x1xf32> to vector<16x128xf32>
      %127 = arith.mulf %126, %76 : vector<16x128xf32>
      %128 = arith.addf %123, %127 : vector<16x128xf32>
      %c2_i32 = arith.constant 2 : i32
      %c3_i32_41 = arith.constant 3 : i32
      %129 = arith.subi %c3_i32_41, %c2_i32 : i32
      %c16_i32_42 = arith.constant 16 : i32
      %130 = arith.muli %129, %c16_i32_42 : i32
      %131 = tpu.assume_multiple %130, 16 : i32
      %132 = arith.index_cast %131 : i32 to index
      %c0_43 = arith.constant 0 : index
      %133 = vector.load %arg12[%132, %c0_43] : memref<64x384xbf16, #tpu.memory_space<vmem>>, vector<16x384xbf16>
      %134 = arith.index_cast %131 : i32 to index
      %c0_44 = arith.constant 0 : index
      %135 = vector.load %arg3[%134, %c0_44] : memref<64x1xf32, #tpu.memory_space<vmem>>, vector<16x1xf32>
      %136 = arith.truncf %128 : vector<16x128xf32> to vector<16x128xbf16>
      %cst_45 = arith.constant dense<0.000000e+00> : vector<16x384xf32>
      %137 = tpu.matmul %136, %12, %cst_45 {dimension_numbers = #tpu.dot_dimension_numbers<[1], [0], [0], [1], [0, 0, 1, 1], [], []>} : vector<16x128xbf16>, vector<128x384xbf16>, vector<16x384xf32> -> vector<16x384xf32>
      %138 = vector.broadcast %14 : vector<1x384xf32> to vector<16x384xf32>
      %139 = arith.addf %137, %138 : vector<16x384xf32>
      %140 = vector.extract_strided_slice %133 {offsets = [0, 0], sizes = [16, 128], strides = [1, 1]} : vector<16x384xbf16> to vector<16x128xbf16>
      %141 = vector.extract_strided_slice %139 {offsets = [0, 0], sizes = [16, 128], strides = [1, 1]} : vector<16x384xf32> to vector<16x128xf32>
      %142 = arith.extf %140 : vector<16x128xbf16> to vector<16x128xf32>
      %143 = arith.addf %142, %141 : vector<16x128xf32>
      %144 = arith.negf %143 : vector<16x128xf32>
      %145 = math.exp %144 : vector<16x128xf32>
      %cst_46 = arith.constant 1.000000e+00 : f32
      %146 = vector.broadcast %cst_46 : f32 to vector<16x128xf32>
      %147 = arith.addf %146, %145 : vector<16x128xf32>
      %148 = arith.divf %146, %147 : vector<16x128xf32>
      %149 = vector.extract_strided_slice %133 {offsets = [0, 128], sizes = [16, 128], strides = [1, 1]} : vector<16x384xbf16> to vector<16x128xbf16>
      %150 = vector.extract_strided_slice %139 {offsets = [0, 128], sizes = [16, 128], strides = [1, 1]} : vector<16x384xf32> to vector<16x128xf32>
      %151 = arith.extf %149 : vector<16x128xbf16> to vector<16x128xf32>
      %152 = arith.addf %151, %150 : vector<16x128xf32>
      %153 = arith.negf %152 : vector<16x128xf32>
      %154 = math.exp %153 : vector<16x128xf32>
      %cst_47 = arith.constant 1.000000e+00 : f32
      %155 = vector.broadcast %cst_47 : f32 to vector<16x128xf32>
      %156 = arith.addf %155, %154 : vector<16x128xf32>
      %157 = arith.divf %155, %156 : vector<16x128xf32>
      %158 = vector.extract_strided_slice %133 {offsets = [0, 256], sizes = [16, 128], strides = [1, 1]} : vector<16x384xbf16> to vector<16x128xbf16>
      %159 = vector.extract_strided_slice %139 {offsets = [0, 256], sizes = [16, 128], strides = [1, 1]} : vector<16x384xf32> to vector<16x128xf32>
      %160 = arith.mulf %148, %159 : vector<16x128xf32>
      %161 = arith.extf %158 : vector<16x128xbf16> to vector<16x128xf32>
      %162 = arith.addf %161, %160 : vector<16x128xf32>
      %163 = math.tanh %162 : vector<16x128xf32>
      %cst_48 = arith.constant 1.000000e+00 : f32
      %164 = vector.broadcast %cst_48 : f32 to vector<16x128xf32>
      %165 = arith.subf %164, %157 : vector<16x128xf32>
      %166 = arith.mulf %165, %163 : vector<16x128xf32>
      %167 = arith.mulf %157, %128 : vector<16x128xf32>
      %168 = arith.addf %166, %167 : vector<16x128xf32>
      %169 = vector.broadcast %135 : vector<16x1xf32> to vector<16x128xf32>
      %170 = arith.mulf %169, %168 : vector<16x128xf32>
      %171 = arith.truncf %170 : vector<16x128xf32> to vector<16x128xbf16>
      %172 = arith.index_cast %131 : i32 to index
      %c0_49 = arith.constant 0 : index
      %173 = vector.load %arg8[%172, %c0_49] : memref<64x128xbf16, #tpu.memory_space<vmem>>, vector<16x128xbf16>
      tpu.vector_store %arg8[%172, %c0_49], %171 {strides = array<i32>} : memref<64x128xbf16, #tpu.memory_space<vmem>>, vector<16x128xbf16>,
      %174 = vector.broadcast %135 : vector<16x1xf32> to vector<16x128xf32>
      %175 = arith.mulf %174, %168 : vector<16x128xf32>
      %cst_50 = arith.constant 1.000000e+00 : f32
      %176 = vector.broadcast %cst_50 : f32 to vector<16x1xf32>
      %177 = arith.subf %176, %135 : vector<16x1xf32>
      %178 = vector.broadcast %177 : vector<16x1xf32> to vector<16x128xf32>
      %179 = arith.mulf %178, %128 : vector<16x128xf32>
      %180 = arith.addf %175, %179 : vector<16x128xf32>
      %c3_i32_51 = arith.constant 3 : i32
      %c3_i32_52 = arith.constant 3 : i32
      %181 = arith.subi %c3_i32_52, %c3_i32_51 : i32
      %c16_i32_53 = arith.constant 16 : i32
      %182 = arith.muli %181, %c16_i32_53 : i32
      %183 = tpu.assume_multiple %182, 16 : i32
      %184 = arith.index_cast %183 : i32 to index
      %c0_54 = arith.constant 0 : index
      %185 = vector.load %arg12[%184, %c0_54] : memref<64x384xbf16, #tpu.memory_space<vmem>>, vector<16x384xbf16>
      %186 = arith.index_cast %183 : i32 to index
      %c0_55 = arith.constant 0 : index
      %187 = vector.load %arg3[%186, %c0_55] : memref<64x1xf32, #tpu.memory_space<vmem>>, vector<16x1xf32>
      %188 = arith.truncf %180 : vector<16x128xf32> to vector<16x128xbf16>
      %cst_56 = arith.constant dense<0.000000e+00> : vector<16x384xf32>
      %189 = tpu.matmul %188, %12, %cst_56 {dimension_numbers = #tpu.dot_dimension_numbers<[1], [0], [0], [1], [0, 0, 1, 1], [], []>} : vector<16x128xbf16>, vector<128x384xbf16>, vector<16x384xf32> -> vector<16x384xf32>
      %190 = vector.broadcast %14 : vector<1x384xf32> to vector<16x384xf32>
      %191 = arith.addf %189, %190 : vector<16x384xf32>
      %192 = vector.extract_strided_slice %185 {offsets = [0, 0], sizes = [16, 128], strides = [1, 1]} : vector<16x384xbf16> to vector<16x128xbf16>
      %193 = vector.extract_strided_slice %191 {offsets = [0, 0], sizes = [16, 128], strides = [1, 1]} : vector<16x384xf32> to vector<16x128xf32>
      %194 = arith.extf %192 : vector<16x128xbf16> to vector<16x128xf32>
      %195 = arith.addf %194, %193 : vector<16x128xf32>
      %196 = arith.negf %195 : vector<16x128xf32>
      %197 = math.exp %196 : vector<16x128xf32>
      %cst_57 = arith.constant 1.000000e+00 : f32
      %198 = vector.broadcast %cst_57 : f32 to vector<16x128xf32>
      %199 = arith.addf %198, %197 : vector<16x128xf32>
      %200 = arith.divf %198, %199 : vector<16x128xf32>
      %201 = vector.extract_strided_slice %185 {offsets = [0, 128], sizes = [16, 128], strides = [1, 1]} : vector<16x384xbf16> to vector<16x128xbf16>
      %202 = vector.extract_strided_slice %191 {offsets = [0, 128], sizes = [16, 128], strides = [1, 1]} : vector<16x384xf32> to vector<16x128xf32>
      %203 = arith.extf %201 : vector<16x128xbf16> to vector<16x128xf32>
      %204 = arith.addf %203, %202 : vector<16x128xf32>
      %205 = arith.negf %204 : vector<16x128xf32>
      %206 = math.exp %205 : vector<16x128xf32>
      %cst_58 = arith.constant 1.000000e+00 : f32
      %207 = vector.broadcast %cst_58 : f32 to vector<16x128xf32>
      %208 = arith.addf %207, %206 : vector<16x128xf32>
      %209 = arith.divf %207, %208 : vector<16x128xf32>
      %210 = vector.extract_strided_slice %185 {offsets = [0, 256], sizes = [16, 128], strides = [1, 1]} : vector<16x384xbf16> to vector<16x128xbf16>
      %211 = vector.extract_strided_slice %191 {offsets = [0, 256], sizes = [16, 128], strides = [1, 1]} : vector<16x384xf32> to vector<16x128xf32>
      %212 = arith.mulf %200, %211 : vector<16x128xf32>
      %213 = arith.extf %210 : vector<16x128xbf16> to vector<16x128xf32>
      %214 = arith.addf %213, %212 : vector<16x128xf32>
      %215 = math.tanh %214 : vector<16x128xf32>
      %cst_59 = arith.constant 1.000000e+00 : f32
      %216 = vector.broadcast %cst_59 : f32 to vector<16x128xf32>
      %217 = arith.subf %216, %209 : vector<16x128xf32>
      %218 = arith.mulf %217, %215 : vector<16x128xf32>
      %219 = arith.mulf %209, %180 : vector<16x128xf32>
      %220 = arith.addf %218, %219 : vector<16x128xf32>
      %221 = vector.broadcast %187 : vector<16x1xf32> to vector<16x128xf32>
      %222 = arith.mulf %221, %220 : vector<16x128xf32>
      %223 = arith.truncf %222 : vector<16x128xf32> to vector<16x128xbf16>
      %224 = arith.index_cast %183 : i32 to index
      %c0_60 = arith.constant 0 : index
      %225 = vector.load %arg8[%224, %c0_60] : memref<64x128xbf16, #tpu.memory_space<vmem>>, vector<16x128xbf16>
      tpu.vector_store %arg8[%224, %c0_60], %223 {strides = array<i32>} : memref<64x128xbf16, #tpu.memory_space<vmem>>, vector<16x128xbf16>,
      %226 = vector.broadcast %187 : vector<16x1xf32> to vector<16x128xf32>
      %227 = arith.mulf %226, %220 : vector<16x128xf32>
      %cst_61 = arith.constant 1.000000e+00 : f32
      %228 = vector.broadcast %cst_61 : f32 to vector<16x1xf32>
      %229 = arith.subf %228, %187 : vector<16x1xf32>
      %230 = vector.broadcast %229 : vector<16x1xf32> to vector<16x128xf32>
      %231 = arith.mulf %230, %180 : vector<16x128xf32>
      %232 = arith.addf %227, %231 : vector<16x128xf32>
      %c4_i32 = arith.constant 4 : i32
      %c0_62 = arith.constant 0 : index
      %c0_63 = arith.constant 0 : index
      %233 = vector.load %arg13[%c0_62, %c0_63] : memref<16x128xf32, #tpu.memory_space<vmem>>, vector<16x128xf32>
      tpu.vector_store %arg13[%c0_62, %c0_63], %232 {strides = array<i32>} : memref<16x128xf32, #tpu.memory_space<vmem>>, vector<16x128xf32>,
    } else {
    }
    %c1_i32_17 = arith.constant 1 : i32
    %21 = arith.cmpi eq, %arg1, %c1_i32_17 : i32
    %22 = arith.extui %21 : i1 to i32
    %c0_i32_18 = arith.constant 0 : i32
    %23 = arith.cmpi ne, %22, %c0_i32_18 : i32
    scf.if %23 {
      %c0_19 = arith.constant 0 : index
      %c0_20 = arith.constant 0 : index
      %24 = vector.load %arg13[%c0_19, %c0_20] : memref<16x128xf32, #tpu.memory_space<vmem>>, vector<16x128xf32>
      %c0_21 = arith.constant 0 : index
      %c0_22 = arith.constant 0 : index
      %c0_23 = arith.constant 0 : index
      %25 = vector.load %arg9[%c0_21, %c0_22, %c0_23] : memref<1x16x128xf32, #tpu.memory_space<vmem>>, vector<1x16x128xf32>
      %26 = vector.shape_cast %25 : vector<1x16x128xf32> to vector<16x128xf32>
      %27 = vector.shape_cast %24 : vector<16x128xf32> to vector<1x16x128xf32>
      tpu.vector_store %arg9[%c0_21, %c0_22, %c0_23], %27 {strides = array<i32>} : memref<1x16x128xf32, #tpu.memory_space<vmem>>, vector<1x16x128xf32>,
    } else {
    }
    return
  }
  func.func @transform_0(%arg0: i32, %arg1: i32) -> (i32, i32) {
    %c2_i32 = arith.constant 2 : i32
    %0 = arith.muli %c2_i32, %arg1 : i32
    %c1_i32 = arith.constant 1 : i32
    %1 = arith.subi %c1_i32, %0 : i32
    %2 = arith.muli %arg0, %1 : i32
    %3 = arith.addi %arg1, %2 : i32
    %c0_i32 = arith.constant 0 : i32
    %c0_i32_0 = arith.constant 0 : i32
    return %3, %c0_i32 : i32, i32
  }
  func.func @transform_1(%arg0: i32, %arg1: i32) -> (i32, i32) {
    %c2_i32 = arith.constant 2 : i32
    %0 = arith.muli %c2_i32, %arg1 : i32
    %c1_i32 = arith.constant 1 : i32
    %1 = arith.subi %c1_i32, %0 : i32
    %2 = arith.muli %arg0, %1 : i32
    %3 = arith.addi %arg1, %2 : i32
    %c0_i32 = arith.constant 0 : i32
    %c0_i32_0 = arith.constant 0 : i32
    return %3, %c0_i32 : i32, i32
  }
  func.func @transform_4(%arg0: i32, %arg1: i32) -> (i32, i32, i32) {
    %c0_i32 = arith.constant 0 : i32
    %c0_i32_0 = arith.constant 0 : i32
    %c0_i32_1 = arith.constant 0 : i32
    return %arg0, %c0_i32, %c0_i32_0 : i32, i32, i32
  }
  func.func @transform_5(%arg0: i32, %arg1: i32) -> (i32, i32, i32) {
    %c0_i32 = arith.constant 0 : i32
    %c0_i32_0 = arith.constant 0 : i32
    %c0_i32_1 = arith.constant 0 : i32
    return %arg0, %c0_i32, %c0_i32_0 : i32, i32, i32
  }
  func.func @transform_6(%arg0: i32, %arg1: i32) -> (i32, i32) {
    %c2_i32 = arith.constant 2 : i32
    %0 = arith.muli %c2_i32, %arg1 : i32
    %c1_i32 = arith.constant 1 : i32
    %1 = arith.subi %c1_i32, %0 : i32
    %2 = arith.muli %arg0, %1 : i32
    %3 = arith.addi %arg1, %2 : i32
    %c0_i32 = arith.constant 0 : i32
    return %3, %arg0 : i32, i32
  }
  func.func @transform_7(%arg0: i32, %arg1: i32) -> (i32, i32, i32) {
    %c0_i32 = arith.constant 0 : i32
    %c0_i32_0 = arith.constant 0 : i32
    %c0_i32_1 = arith.constant 0 : i32
    return %arg0, %c0_i32, %c0_i32_0 : i32, i32, i32
  }
}

</mosaic_0001>

<llo_original>
// kernel: tpu_custom_call.1
$region0: #{tpu_custom_call.1}
  #allocation0 [shape = 'u32[]', space=smem, size = 0x4, offset = 0x4, fixed_abs, tag = 'smem constant byte address 0x4 - core index']
  #allocation1 [shape = 'u32[144,128]{1,0:T(1,128)}', space=vmem, size = 0x12000, scoped, tag = 'internal scratch']
  #allocation2 [shape = 'bf16[128,384]{1,0:T(16,128)(2,1)}', space=vmem, size = 0x18000, scoped, tag = 'scratch operand']
  #allocation3 [shape = 'bf16[128,384]{1,0:T(16,128)(2,1)}', space=vmem, size = 0x18000, scoped, tag = 'scratch operand']
  #allocation4 [shape = 'bf16[64,384]{1,0:T(16,128)(2,1)}', space=vmem, size = 0xc000, scoped, tag = 'scratch operand']
  #allocation5 [shape = 'f32[16,128]{1,0:T(8,128)}', space=vmem, size = 0x2000, scoped, tag = 'scratch operand']
  #allocation6 [shape = 's32[2]{0}', space=sflag, size = 0x8, scoped, tag = 'scratch operand']
  #allocation11 [shape = 's32[]', space=sflag, size = 0x4, offset = 0, fixed_abs, tag = 'sflag constant byte address 0x0 - dummy sync flag']
  #allocation13 [shape = 's32[]', space=sflag, size = 0x4, offset = 0, fixed_abs, tag = 'sflag constant byte address 0x0 - dummy sync flag']
  %s0 = inlined_call_operand.vmem [shape: bf16[128,128], index: 0, kind: input, shape index: {}]
  %s1 = inlined_call_operand.vmem [shape: f32[128,1], index: 1, kind: input, shape index: {}]
  %s2 = inlined_call_operand.hbm [shape: bf16[2,128,384], index: 2, kind: input, shape index: {}]
  %s3 = inlined_call_operand.hbm [shape: bf16[2,128,384], index: 3, kind: input, shape index: {}]
  %s4 = inlined_call_operand.vmem [shape: f32[2,1,384], index: 4, kind: input, shape index: {}]
  %s5 = inlined_call_operand.vmem [shape: f32[2,1,384], index: 5, kind: input, shape index: {}]
  %s6 = inlined_call_operand.hbm [shape: bf16[128,256], index: 6, kind: output, shape index: {0}]
  %s7 = inlined_call_operand.hbm [shape: f32[2,16,128], index: 7, kind: output, shape index: {1}]
  %8 = xla_tuple %s6, %s7
  %s9 = sld [smem:[#allocation0]]
  $region73: #{tpu_custom_call.1} parent=0
    _
  %s11 = ssub.s32 1, %s9
  %s12 = scalar_select 0, %s11, %s9
  $region1: #{tpu_custom_call.1} parent=0
    #allocation7 [shape = 'u8[32768]{0}', space=vmem, size = 0x8000, scoped, tag = 'output window, operand 0']
    #allocation8 [shape = 's32[2]{0}', space=sflag, size = 0x8, scoped, tag = 'scoped memory for tpu_custom_call.1']
    #allocation9 [shape = 'u8[16384]{0}', space=vmem, size = 0x4000, scoped, tag = 'output window, operand 1']
    #allocation10 [shape = 's32[2]{0}', space=sflag, size = 0x8, scoped, tag = 'scoped memory for tpu_custom_call.1']
    %13 = vsyncpa [#allocation8], 0
    %s14 = scalar_lea.sflag [#allocation8], 1
    %15 = vsyncpa %s14, 0
    %16 = vsyncpa [#allocation10], 0
    %s17 = scalar_lea.sflag [#allocation10], 1
    %18 = vsyncpa %s17, 0
    loop: start=0, step=1, limit=6
    $region2: #{tpu_custom_call.1} parent=1 // loop_pre_header
      _
    $region3: #{tpu_custom_call.1} parent=1 // loop_header
      %s20 = sphi 0, %s24
      %p21 = scmp.ge.s32.totalorder %s20, 6
      %s27 = sphi 0, %s39
      %s28 = sphi 0, %s35
      %s29 = sphi 0, %s27
      %s30 = sphi 0, %s28
      %s31 = sphi 0, %s29
      %s32 = sphi 0, %s30
      %s50 = sphi 0, %s52
      %s53 = sphi 0, %s50
      %s54 = sphi 0, %s53
      %s70 = sphi 0, %s54
      %s84 = sphi 0, %s86
      %s87 = sphi 0, %s84
      %s88 = sphi 0, %s87
      %s104 = sphi 0, %s88
      %s110 = sphi 0, %s112
      %s113 = sphi 0, %s110
      %s114 = sphi 0, %s113
      %s130 = sphi 0, %s114
      %s136 = sphi 0, %s138
      %s139 = sphi 0, %s136
      %s140 = sphi 0, %s139
      %s156 = sphi 0, %s140
      %s172 = sphi 0, %s174
      %s175 = sphi 0, %s172
      %s176 = sphi 0, %s175
      %s192 = sphi 0, %s176
      %s198 = sphi 0, %s200
      %s201 = sphi 0, %s198
      %s202 = sphi 0, %s201
      %s218 = sphi 0, %s202
    $region4: #{tpu_custom_call.1} parent=1 // loop_header_branch
      %23 = sbr.rel (%p21) target = $region8
    $region5: #{tpu_custom_call.1} parent=1 // loop_body
      %s25 = ssub.s32 %s20, 1
      %s26 = ssub.s32 %s20, 2
      %s33 = sadd.s32 1, %s28
      %p34 = scmp.ge.s32.totalorder %s33, 2
      %s35 = scalar_select %p34, 0, %s33
      %s36 = sadd.s32 1, %s27
      %s37 = scalar_select %p34, %s36, %s27
      %p38 = scmp.ge.s32.totalorder %s37, 2
      %s39 = scalar_select %p38, 0, %s37
      %s40 = smul.u32 %s28, 2
      %s41 = ssub.s32 1, %s40
      %s42 = smul.u32 %s27, %s41
      %s43 = sadd.s32 %s28, %s42
      %s44 = smul.u32 %s35, 2
      %s45 = ssub.s32 1, %s44
      %s46 = smul.u32 %s39, %s45
      %s47 = sadd.s32 %s35, %s46
      %s48 = ssub.s32 %s43, %s47
      %p49 = scmp.eq.s32.totalorder %s48, 0
      %s51 = sadd.s32 %s50, 1
      %s52 = scalar_select %p49, %s50, %s51
      %p55 = pneg %p49
      %p56 = scmp.eq.s32.totalorder %s20, 3
      %p57 = por %p55, %p56
      %p58 = scmp.ne.s32.totalorder %s50, %s53
      %p59 = scmp.eq.s32.totalorder %s20, 0
      %p60 = por %p58, %p59
      %p61 = scmp.ne.s32.totalorder %s50, %s53
      %p62 = scmp.eq.s32.totalorder %s25, 3
      %p63 = por %p61, %p62
      %p64 = scmp.ne.s32.totalorder %s53, %s54
      %p65 = scmp.eq.s32.totalorder %s25, 0
      %p66 = por %p64, %p65
      %p67 = scmp.ne.s32.totalorder %s53, %s54
      %p68 = scmp.eq.s32.totalorder %s26, 3
      %p69 = por %p67, %p68
      %p71 = scmp.ne.s32.totalorder %s54, %s70
      %p72 = scmp.eq.s32.totalorder %s26, 0
      %p73 = por %p71, %p72
      %s74 = smul.u32 %s28, 2
      %s75 = ssub.s32 1, %s74
      %s76 = smul.u32 %s27, %s75
      %s77 = sadd.s32 %s28, %s76
      %s78 = smul.u32 %s35, 2
      %s79 = ssub.s32 1, %s78
      %s80 = smul.u32 %s39, %s79
      %s81 = sadd.s32 %s35, %s80
      %s82 = ssub.s32 %s77, %s81
      %p83 = scmp.eq.s32.totalorder %s82, 0
      %s85 = sadd.s32 %s84, 1
      %s86 = scalar_select %p83, %s84, %s85
      %p89 = pneg %p83
      %p90 = scmp.eq.s32.totalorder %s20, 3
      %p91 = por %p89, %p90
      %p92 = scmp.ne.s32.totalorder %s84, %s87
      %p93 = scmp.eq.s32.totalorder %s20, 0
      %p94 = por %p92, %p93
      %p95 = scmp.ne.s32.totalorder %s84, %s87
      %p96 = scmp.eq.s32.totalorder %s25, 3
      %p97 = por %p95, %p96
      %p98 = scmp.ne.s32.totalorder %s87, %s88
      %p99 = scmp.eq.s32.totalorder %s25, 0
      %p100 = por %p98, %p99
      %p101 = scmp.ne.s32.totalorder %s87, %s88
      %p102 = scmp.eq.s32.totalorder %s26, 3
      %p103 = por %p101, %p102
      %p105 = scmp.ne.s32.totalorder %s88, %s104
      %p106 = scmp.eq.s32.totalorder %s26, 0
      %p107 = por %p105, %p106
      %s108 = ssub.s32 %s27, %s39
      %p109 = scmp.eq.s32.totalorder %s108, 0
      %s111 = sadd.s32 %s110, 1
      %s112 = scalar_select %p109, %s110, %s111
      %p115 = pneg %p109
      %p116 = scmp.eq.s32.totalorder %s20, 3
      %p117 = por %p115, %p116
      %p118 = scmp.ne.s32.totalorder %s110, %s113
      %p119 = scmp.eq.s32.totalorder %s20, 0
      %p120 = por %p118, %p119
      %p121 = scmp.ne.s32.totalorder %s110, %s113
      %p122 = scmp.eq.s32.totalorder %s25, 3
      %p123 = por %p121, %p122
      %p124 = scmp.ne.s32.totalorder %s113, %s114
      %p125 = scmp.eq.s32.totalorder %s25, 0
      %p126 = por %p124, %p125
      %p127 = scmp.ne.s32.totalorder %s113, %s114
      %p128 = scmp.eq.s32.totalorder %s26, 3
      %p129 = por %p127, %p128
      %p131 = scmp.ne.s32.totalorder %s114, %s130
      %p132 = scmp.eq.s32.totalorder %s26, 0
      %p133 = por %p131, %p132
      %s134 = ssub.s32 %s27, %s39
      %p135 = scmp.eq.s32.totalorder %s134, 0
      %s137 = sadd.s32 %s136, 1
      %s138 = scalar_select %p135, %s136, %s137
      %p141 = pneg %p135
      %p142 = scmp.eq.s32.totalorder %s20, 3
      %p143 = por %p141, %p142
      %p144 = scmp.ne.s32.totalorder %s136, %s139
      %p145 = scmp.eq.s32.totalorder %s20, 0
      %p146 = por %p144, %p145
      %p147 = scmp.ne.s32.totalorder %s136, %s139
      %p148 = scmp.eq.s32.totalorder %s25, 3
      %p149 = por %p147, %p148
      %p150 = scmp.ne.s32.totalorder %s139, %s140
      %p151 = scmp.eq.s32.totalorder %s25, 0
      %p152 = por %p150, %p151
      %p153 = scmp.ne.s32.totalorder %s139, %s140
      %p154 = scmp.eq.s32.totalorder %s26, 3
      %p155 = por %p153, %p154
      %p157 = scmp.ne.s32.totalorder %s140, %s156
      %p158 = scmp.eq.s32.totalorder %s26, 0
      %p159 = por %p157, %p158
      %s160 = smul.u32 %s28, 2
      %s161 = ssub.s32 1, %s160
      %s162 = smul.u32 %s27, %s161
      %s163 = sadd.s32 %s28, %s162
      %s164 = smul.u32 %s35, 2
      %s165 = ssub.s32 1, %s164
      %s166 = smul.u32 %s39, %s165
      %s167 = sadd.s32 %s35, %s166
      %s168 = ssub.s32 %s163, %s167
      %s169 = ssub.s32 %s27, %s39
      %s170 = sor.u32 %s168, %s169
      %p171 = scmp.eq.s32.totalorder %s170, 0
      %s173 = sadd.s32 %s172, 1
      %s174 = scalar_select %p171, %s172, %s173
      %p177 = pneg %p171
      %p178 = scmp.eq.s32.totalorder %s20, 3
      %p179 = por %p177, %p178
      %p180 = scmp.ne.s32.totalorder %s172, %s175
      %p181 = scmp.eq.s32.totalorder %s20, 0
      %p182 = por %p180, %p181
      %p183 = scmp.ne.s32.totalorder %s172, %s175
      %p184 = scmp.eq.s32.totalorder %s25, 3
      %p185 = por %p183, %p184
      %p186 = scmp.ne.s32.totalorder %s175, %s176
      %p187 = scmp.eq.s32.totalorder %s25, 0
      %p188 = por %p186, %p187
      %p189 = scmp.ne.s32.totalorder %s175, %s176
      %p190 = scmp.eq.s32.totalorder %s26, 3
      %p191 = por %p189, %p190
      %p193 = scmp.ne.s32.totalorder %s176, %s192
      %p194 = scmp.eq.s32.totalorder %s26, 0
      %p195 = por %p193, %p194
      %s196 = ssub.s32 %s27, %s39
      %p197 = scmp.eq.s32.totalorder %s196, 0
      %s199 = sadd.s32 %s198, 1
      %s200 = scalar_select %p197, %s198, %s199
      %p203 = pneg %p197
      %p204 = scmp.eq.s32.totalorder %s20, 3
      %p205 = por %p203, %p204
      %p206 = scmp.ne.s32.totalorder %s198, %s201
      %p207 = scmp.eq.s32.totalorder %s20, 0
      %p208 = por %p206, %p207
      %p209 = scmp.ne.s32.totalorder %s198, %s201
      %p210 = scmp.eq.s32.totalorder %s25, 3
      %p211 = por %p209, %p210
      %p212 = scmp.ne.s32.totalorder %s201, %s202
      %p213 = scmp.eq.s32.totalorder %s25, 0
      %p214 = por %p212, %p213
      %p215 = scmp.ne.s32.totalorder %s201, %s202
      %p216 = scmp.eq.s32.totalorder %s26, 3
      %p217 = por %p215, %p216
      %p219 = scmp.ne.s32.totalorder %s202, %s218
      %p220 = scmp.eq.s32.totalorder %s26, 0
      %p221 = por %p219, %p220
      %p222 = scmp.le.s32.totalorder 1, %s20
      %p223 = scmp.lt.s32.totalorder %s20, 5
      %p224 = pnand %p222, %p223
      %p225 = pneg %p224
      // Predicated region
      $region9: #{tpu_custom_call.1} parent=5 // pred_check
        _
      $region10: #{tpu_custom_call.1} parent=5 // pred_check_branch
        %227 = sbr.rel (%p224) target = $region12
      $region11: #{tpu_custom_call.1} parent=5 // pred_region
        %s228 = ssub.s32 %s20, 1
      $region12: #{tpu_custom_call.1} parent=5 // pred_fallthru
        _
      %p229 = scmp.lt.s32.totalorder %s20, 4
      // Predicated region
      $region13: #{tpu_custom_call.1} parent=5 // pred_check
        %p230 = pneg %p229
      $region14: #{tpu_custom_call.1} parent=5 // pred_check_branch
        %232 = sbr.rel (%p230) target = $region16
      $region15: #{tpu_custom_call.1} parent=5 // pred_region
        // Predicated region
        $region17: #{tpu_custom_call.1} parent=15 // pred_check
          %p233 = pneg %p60
        $region18: #{tpu_custom_call.1} parent=15 // pred_check_branch
          %235 = sbr.rel (%p233) target = $region20
        $region19: #{tpu_custom_call.1} parent=15 // pred_region
          %s236 = smul.u32 %s28, 2
          %s237 = ssub.s32 1, %s236
          %s238 = smul.u32 %s27, %s237
          %s239 = sadd.s32 %s28, %s238
          %s240 = smul.u32 8, %s239
          %p241 = scmp.lt.s32.totalorder %s240, 15
          %s242 = scalar_select %p241, %s240, 15
          %s243 = smul.addr %s242, 4
          %s244 = scalar_lea.vmem %s0, %s243
          %s245 = smul.u32 %s28, 2
          %s246 = ssub.s32 1, %s245
          %s247 = smul.u32 %s27, %s246
          %s248 = sadd.s32 %s28, %s247
          %s249 = smul.u32 8, %s248
        $region20: #{tpu_custom_call.1} parent=15 // pred_fallthru
          _
        // Predicated region
        $region21: #{tpu_custom_call.1} parent=15 // pred_check
          %p250 = pneg %p94
        $region22: #{tpu_custom_call.1} parent=15 // pred_check_branch
          %252 = sbr.rel (%p250) target = $region24
        $region23: #{tpu_custom_call.1} parent=15 // pred_region
          %s253 = smul.u32 %s28, 2
          %s254 = ssub.s32 1, %s253
          %s255 = smul.u32 %s27, %s254
          %s256 = sadd.s32 %s28, %s255
          %s257 = smul.u32 8, %s256
          %p258 = scmp.lt.s32.totalorder %s257, 15
          %s259 = scalar_select %p258, %s257, 15
          %s260 = smul.addr %s259, 8
          %s261 = scalar_lea.vmem %s1, %s260
          %s262 = smul.u32 %s28, 2
          %s263 = ssub.s32 1, %s262
          %s264 = smul.u32 %s27, %s263
          %s265 = sadd.s32 %s28, %s264
          %s266 = smul.u32 8, %s265
        $region24: #{tpu_custom_call.1} parent=15 // pred_fallthru
          _
        // Predicated region
        $region25: #{tpu_custom_call.1} parent=15 // pred_check
          %p267 = pneg %p120
        $region26: #{tpu_custom_call.1} parent=15 // pred_check_branch
          %269 = sbr.rel (%p267) target = $region28
        $region27: #{tpu_custom_call.1} parent=15 // pred_region
          %p270 = scmp.lt.s32.totalorder %s27, 1
          %s271 = scalar_select %p270, %s27, 1
          %s272 = smul.addr %s271, 3
          %s273 = scalar_lea.vmem %s4, %s272
        $region28: #{tpu_custom_call.1} parent=15 // pred_fallthru
          _
        // Predicated region
        $region29: #{tpu_custom_call.1} parent=15 // pred_check
          %p274 = pneg %p146
        $region30: #{tpu_custom_call.1} parent=15 // pred_check_branch
          %276 = sbr.rel (%p274) target = $region32
        $region31: #{tpu_custom_call.1} parent=15 // pred_region
          %p277 = scmp.lt.s32.totalorder %s27, 1
          %s278 = scalar_select %p277, %s27, 1
          %s279 = smul.addr %s278, 3
          %s280 = scalar_lea.vmem %s5, %s279
        $region32: #{tpu_custom_call.1} parent=15 // pred_fallthru
          _
      $region16: #{tpu_custom_call.1} parent=5 // pred_fallthru
        _
      %p281 = scmp.le.s32.totalorder 1, %s20
      %p282 = scmp.lt.s32.totalorder %s20, 5
      %p283 = pnand %p281, %p282
      %p284 = pneg %p283
      // Predicated region
      $region33: #{tpu_custom_call.1} parent=5 // pred_check
        _
      $region34: #{tpu_custom_call.1} parent=5 // pred_check_branch
        %286 = sbr.rel (%p283) target = $region36
      $region35: #{tpu_custom_call.1} parent=5 // pred_region
        %s287 = ssub.s32 %s20, 1
        %s288 = smul.u32 %s30, 2
        %s289 = ssub.s32 1, %s288
        %s290 = smul.u32 %s29, %s289
        %s291 = sadd.s32 %s30, %s290
        %s292 = smul.u32 8, %s291
        %p293 = scmp.lt.s32.totalorder %s292, 15
        %s294 = scalar_select %p293, %s292, 15
        %s295 = smul.addr %s294, 4
        %s296 = scalar_lea.vmem %s0, %s295
        %p297 = pneg %p66
        %p298 = pneg %p63
        %s299 = smul.u32 %s30, 2
        %s300 = ssub.s32 1, %s299
        %s301 = smul.u32 %s29, %s300
        %s302 = sadd.s32 %s30, %s301
        %s303 = smul.u32 8, %s302
        %p304 = scmp.lt.s32.totalorder %s303, 15
        %s305 = scalar_select %p304, %s303, 15
        %s306 = smul.addr %s305, 8
        %s307 = scalar_lea.vmem %s1, %s306
        %p308 = pneg %p100
        %p309 = pneg %p97
        %p310 = scmp.lt.s32.totalorder %s29, 1
        %s311 = scalar_select %p310, %s29, 1
        %s312 = smul.addr %s311, 3
        %s313 = scalar_lea.vmem %s4, %s312
        %p314 = pneg %p126
        %p315 = pneg %p123
        %p316 = scmp.lt.s32.totalorder %s29, 1
        %s317 = scalar_select %p316, %s29, 1
        %s318 = smul.addr %s317, 3
        %s319 = scalar_lea.vmem %s5, %s318
        %p320 = pneg %p152
        %p321 = pneg %p149
        %p322 = pneg %p188
        %p323 = pneg %p185
        %s324 = sand.u32 %s175, 1
        %s325 = scalar_lea.sflag [#allocation8], %s324
        %s326 = sand.u32 %s175, 1
        %s327 = smul.addr %s326, 32
        %s328 = scalar_lea.vmem [#allocation7], %s327
        %p329 = pneg %p214
        %p330 = pneg %p211
        %s331 = sand.u32 %s201, 1
        %s332 = scalar_lea.sflag [#allocation10], %s331
        %s333 = sand.u32 %s201, 1
        %s334 = smul.addr %s333, 16
        %s335 = scalar_lea.vmem [#allocation9], %s334
        %s336 = smul.u32 %s30, 2
        %s337 = ssub.s32 1, %s336
        %s338 = smul.u32 %s29, %s337
        %s339 = sadd.s32 %s30, %s338
        %s340 = smul.u32 8, %s339
        %p341 = scmp.lt.s32.totalorder %s340, 15
        %s342 = scalar_select %p341, %s340, 15
        %s343 = smul.addr %s342, 4
        %s344 = scalar_lea.vmem %s0, %s343
        %s345 = smul.u32 %s30, 2
        %s346 = ssub.s32 1, %s345
        %s347 = smul.u32 %s29, %s346
        %s348 = sadd.s32 %s30, %s347
        %s349 = smul.u32 8, %s348
        %s350 = smul.u32 %s30, 2
        %s351 = ssub.s32 1, %s350
        %s352 = smul.u32 %s29, %s351
        %s353 = sadd.s32 %s30, %s352
        %s354 = smul.u32 8, %s353
        %p355 = scmp.lt.s32.totalorder %s354, 15
        %s356 = scalar_select %p355, %s354, 15
        %s357 = smul.addr %s356, 8
        %s358 = scalar_lea.vmem %s1, %s357
        %s359 = smul.u32 %s30, 2
        %s360 = ssub.s32 1, %s359
        %s361 = smul.u32 %s29, %s360
        %s362 = sadd.s32 %s30, %s361
        %s363 = smul.u32 8, %s362
        %p364 = scmp.lt.s32.totalorder %s29, 1
        %s365 = scalar_select %p364, %s29, 1
        %s366 = smul.addr %s365, 3
        %s367 = scalar_lea.vmem %s4, %s366
        %p368 = scmp.lt.s32.totalorder %s29, 1
        %s369 = scalar_select %p368, %s29, 1
        %s370 = smul.addr %s369, 3
        %s371 = scalar_lea.vmem %s5, %s370
        %s372 = smul.u32 %s30, 2
        %s373 = ssub.s32 1, %s372
        %s374 = smul.u32 %s29, %s373
        %s375 = sadd.s32 %s30, %s374
        %s376 = smul.u32 8, %s375
        %p378 = scmp.eq.s32.totalorder %s30, 0
        // Predicated region
        $region37: #{tpu_custom_call.1} parent=35 // pred_check
          %p379 = pneg %p378
        $region38: #{tpu_custom_call.1} parent=35 // pred_check_branch
          %381 = sbr.rel (%p379) target = $region40
        $region39: #{tpu_custom_call.1} parent=35 // pred_region
          #allocation12 [shape = 'u32[9]{0}', space=smem, size = 0x24, scoped, tag = 'DMA stride descriptor']
          #allocation14 [shape = 'u32[9]{0}', space=smem, size = 0x24, scoped, tag = 'DMA stride descriptor']
          %382 = vst [vmem:[#allocation5] sm:$0xff] 0.0
          %383 = vst [vmem:[#allocation5 + $0x8] sm:$0xff] 0.0
          %s384 = smul.u32 %s29, 48
          %s385 = smul.addr %s384, 64
          %s386 = scalar_lea.hbm %s2, %s385
          %s388 = sshll.u32 1, 14
          %s389 = sxor.u32 4294967295, %s388
          %s391 = sld [smem:[#allocation0]]
          %s392 = sadd.s32 2, %s391
          %s394 = sshll.u32 7, 26
          %s395 = sxor.u32 4294967295, %s394
          %s396 = sand.u32 0, %s395
          %s397 = sshll.u32 %s392, 26
          %s398 = sor.u32 %s396, %s397
          %s399 = sshll.u32 [#allocation2], 4
          %s400 = int_to_ptr.vmem [resolvable:$true] %s399
          %403 = sst [smem:[#allocation12]] 384
          %s404 = scalar_lea.smem [#allocation12], 1
          %405 = sst [smem:[%s404]] 384
          %s406 = scalar_lea.smem [#allocation12], 2
          %407 = sst [smem:[%s406]] 3
          %s408 = scalar_lea.smem [#allocation12], 3
          %409 = sst [smem:[%s408]] 64
          %s410 = scalar_lea.smem [#allocation12], 4
          %411 = sst [smem:[%s410]] 128
          %s412 = scalar_lea.smem [#allocation12], 5
          %413 = sst [smem:[%s412]] 2
          %s414 = scalar_lea.smem [#allocation12], 6
          %415 = sst [smem:[%s414]] 192
          %s416 = scalar_lea.smem [#allocation12], 7
          %417 = sst [smem:[%s416]] 64
          %s418 = scalar_lea.smem [#allocation12], 8
          %419 = sst [smem:[%s418]] 4
          %421 = dma.general %s386, 3072, %s400, [#allocation6], [#allocation11], [#allocation12], %s398, 0
          %s422 = smul.addr %s384, 64
          %s423 = scalar_lea.hbm %s3, %s422
          %s424 = scalar_lea.sflag [#allocation6], 1
          %s426 = sshll.u32 1, 14
          %s427 = sxor.u32 4294967295, %s426
          %s429 = sadd.s32 2, %s391
          %s431 = sshll.u32 7, 26
          %s432 = sxor.u32 4294967295, %s431
          %s433 = sand.u32 0, %s432
          %s434 = sshll.u32 %s429, 26
          %s435 = sor.u32 %s433, %s434
          %s436 = sshll.u32 [#allocation3], 4
          %s437 = int_to_ptr.vmem [resolvable:$true] %s436
          %440 = sst [smem:[#allocation14]] 384
          %s441 = scalar_lea.smem [#allocation14], 1
          %442 = sst [smem:[%s441]] 384
          %s443 = scalar_lea.smem [#allocation14], 2
          %444 = sst [smem:[%s443]] 3
          %s445 = scalar_lea.smem [#allocation14], 3
          %446 = sst [smem:[%s445]] 64
          %s447 = scalar_lea.smem [#allocation14], 4
          %448 = sst [smem:[%s447]] 128
          %s449 = scalar_lea.smem [#allocation14], 5
          %450 = sst [smem:[%s449]] 2
          %s451 = scalar_lea.smem [#allocation14], 6
          %452 = sst [smem:[%s451]] 192
          %s453 = scalar_lea.smem [#allocation14], 7
          %454 = sst [smem:[%s453]] 64
          %s455 = scalar_lea.smem [#allocation14], 8
          %456 = sst [smem:[%s455]] 4
          %458 = dma.general %s423, 3072, %s437, %s424, [#allocation13], [#allocation14], %s435, 0
          %s459 = smul.u32 4, 16
          %s460 = smul.u32 %s459, 3
          %s461 = sshll.u32 %s460, 4
          %462 = dma.done [#allocation6], %s461
          %s463 = sshll.u32 %s460, 4
          %464 = dma.done %s424, %s463
        $region40: #{tpu_custom_call.1} parent=35 // pred_fallthru
          _
        %v465 = vld [vmem:[%s344] sm:$0xf]
        %v466 = vld [vmem:[%s344 + $0x4] sm:$0xf]
        %v467 = vld [vmem:[%s344 + $0x8] sm:$0xf]
        %v468 = vld [vmem:[%s344 + $0xc] sm:$0xf]
        %v469 = vld [vmem:[%s344 + $0x10] sm:$0xf]
        %v470 = vld [vmem:[%s344 + $0x14] sm:$0xf]
        %v471 = vld [vmem:[%s344 + $0x18] sm:$0xf]
        %v472 = vld [vmem:[%s344 + $0x1c] sm:$0xf]
        %v473 = vld [vmem:[#allocation2] sm:$0xff]
        %v474 = vld [vmem:[#allocation2 + $0x8] sm:$0xff]
        %v475 = vld [vmem:[#allocation2 + $0x10] sm:$0xff]
        %v476 = vld [vmem:[#allocation2 + $0x18] sm:$0xff]
        %v477 = vld [vmem:[#allocation2 + $0x20] sm:$0xff]
        %v478 = vld [vmem:[#allocation2 + $0x28] sm:$0xff]
        %v479 = vld [vmem:[#allocation2 + $0x30] sm:$0xff]
        %v480 = vld [vmem:[#allocation2 + $0x38] sm:$0xff]
        %v481 = vld [vmem:[#allocation2 + $0x40] sm:$0xff]
        %v482 = vld [vmem:[#allocation2 + $0x48] sm:$0xff]
        %v483 = vld [vmem:[#allocation2 + $0x50] sm:$0xff]
        %v484 = vld [vmem:[#allocation2 + $0x58] sm:$0xff]
        %v485 = vld [vmem:[#allocation2 + $0x60] sm:$0xff]
        %v486 = vld [vmem:[#allocation2 + $0x68] sm:$0xff]
        %v487 = vld [vmem:[#allocation2 + $0x70] sm:$0xff]
        %v488 = vld [vmem:[#allocation2 + $0x78] sm:$0xff]
        %v489 = vld [vmem:[#allocation2 + $0x80] sm:$0xff]
        %v490 = vld [vmem:[#allocation2 + $0x88] sm:$0xff]
        %v491 = vld [vmem:[#allocation2 + $0x90] sm:$0xff]
        %v492 = vld [vmem:[#allocation2 + $0x98] sm:$0xff]
        %v493 = vld [vmem:[#allocation2 + $0xa0] sm:$0xff]
        %v494 = vld [vmem:[#allocation2 + $0xa8] sm:$0xff]
        %v495 = vld [vmem:[#allocation2 + $0xb0] sm:$0xff]
        %v496 = vld [vmem:[#allocation2 + $0xb8] sm:$0xff]
        %v497 = vld [vmem:[%s367] sm:$0x7]
        %v499 = vlaneseq
        %v500 = vshrl.u32 %v499, 7
        %v501 = vsub.s32 0, %v500
        %v502 = vrot.slane %v497, %v501
        %v503 = vlaneseq
        %v504 = vshrl.u32 %v503, 7
        %v505 = vsub.s32 1, %v504
        %v506 = vrot.slane %v497, %v505
        %v507 = vlaneseq
        %v508 = vshrl.u32 %v507, 7
        %v509 = vsub.s32 2, %v508
        %v510 = vrot.slane %v497, %v509
        %v522 = vunpack.c.l.b16 %v465
        %v523 = vunpack.c.l.b16 %v466
        %v524 = vunpack.c.l.b16 %v467
        %v525 = vunpack.c.l.b16 %v468
        %v526 = vunpack.c.l.b16 %v469
        %v527 = vunpack.c.l.b16 %v470
        %v528 = vunpack.c.l.b16 %v471
        %v529 = vunpack.c.l.b16 %v472
        %v530 = vpack.c.b16 %v523, %v522
        %v531 = vpack.c.b16 %v525, %v524
        %v532 = vpack.c.b16 %v527, %v526
        %v533 = vpack.c.b16 %v529, %v528
        %538 = vmatprep.subr.bf16.mxu0 %v474
        %539 = vmatpush1.bf16.msra.mxu0 %v473
        %540 = vmatprep.subr.bf16.mxu0 %v477
        %541 = vmatpush1.bf16.msra.mxu0 %v476
        %542 = vmatprep.subr.bf16.mxu0 %v480
        %543 = vmatpush1.bf16.msra.mxu0 %v479
        %544 = vmatprep.subr.bf16.mxu0 %v483
        %545 = vmatpush1.bf16.msra.mxu0 %v482
        %546 = vmatprep.subr.bf16.mxu0 %v486
        %547 = vmatpush1.bf16.msra.mxu0 %v485
        %548 = vmatprep.subr.bf16.mxu0 %v489
        %549 = vmatpush1.bf16.msra.mxu0 %v488
        %550 = vmatprep.subr.bf16.mxu0 %v492
        %551 = vmatpush1.bf16.msra.mxu0 %v491
        %552 = vmatprep.subr.bf16.mxu0 %v495
        %553 = vmatpush1.bf16.msra.mxu0 %v494
        %554 = vmatprep.subr.bf16.mxu0 0
        %555 = vmatpush1.bf16.msra.mxu0 0
        %556 = vmatprep.subr.bf16.mxu0 0
        %557 = vmatpush1.bf16.msra.mxu0 0
        %558 = vmatprep.subr.bf16.mxu0 0
        %559 = vmatpush1.bf16.msra.mxu0 0
        %560 = vmatprep.subr.bf16.mxu0 0
        %561 = vmatpush1.bf16.msra.mxu0 0
        %562 = vmatprep.subr.bf16.mxu0 0
        %563 = vmatpush1.bf16.msra.mxu0 0
        %564 = vmatprep.subr.bf16.mxu0 0
        %565 = vmatpush1.bf16.msra.mxu0 0
        %566 = vmatprep.subr.bf16.mxu0 0
        %567 = vmatpush1.bf16.msra.mxu0 0
        %568 = vmatprep.subr.bf16.mxu0 0
        %569 = vmatpush1.bf16.msra.mxu0 0
        %570 = vmatprep.mubr.bf16.mxu0 0
        %571 = vmatmul.mubr.bf16.gmra.mrb[0].mxu0 %v530
        %v572 = vpop.f32.mrb[0].mxu0
        %v573 = vadd.f32 %v502, %v572
        %v574 = vpop.f32.mrb[0].mxu0
        %v575 = vadd.f32 %v506, %v574
        %v576 = vpop.f32.mrb[0].mxu0
        %v577 = vadd.f32 %v502, %v576
        %v578 = vpop.f32.mrb[0].mxu0
        %v579 = vadd.f32 %v506, %v578
        %580 = vmatprep.mubr.bf16.mxu0 0
        %581 = vmatmul.mubr.bf16.gmra.mrb[0].mxu0 %v531
        %v582 = vpop.f32.mrb[0].mxu0
        %v583 = vadd.f32 %v502, %v582
        %v584 = vpop.f32.mrb[0].mxu0
        %v585 = vadd.f32 %v506, %v584
        %v586 = vpop.f32.mrb[0].mxu0
        %v587 = vadd.f32 %v502, %v586
        %v588 = vpop.f32.mrb[0].mxu0
        %v589 = vadd.f32 %v506, %v588
        %590 = vmatprep.mubr.bf16.mxu0 0
        %591 = vmatmul.mubr.bf16.gmra.mrb[0].mxu0 %v532
        %v592 = vpop.f32.mrb[0].mxu0
        %v593 = vadd.f32 %v502, %v592
        %v594 = vpop.f32.mrb[0].mxu0
        %v595 = vadd.f32 %v506, %v594
        %v596 = vpop.f32.mrb[0].mxu0
        %v597 = vadd.f32 %v502, %v596
        %v598 = vpop.f32.mrb[0].mxu0
        %v599 = vadd.f32 %v506, %v598
        %600 = vmatprep.mubr.bf16.mxu0 0
        %601 = vmatmul.mubr.bf16.gmra.mrb[0].mxu0 %v533
        %v602 = vpop.f32.mrb[0].mxu0
        %v603 = vadd.f32 %v502, %v602
        %v604 = vpop.f32.mrb[0].mxu0
        %v605 = vadd.f32 %v506, %v604
        %v606 = vpop.f32.mrb[0].mxu0
        %v607 = vadd.f32 %v502, %v606
        %v608 = vpop.f32.mrb[0].mxu0
        %v609 = vadd.f32 %v506, %v608
        %610 = vdwg.mxu0
        %611 = vmatprep.subr.bf16.mxu0 0
        %612 = vmatpush1.bf16.msra.mxu0 %v475
        %613 = vmatprep.subr.bf16.mxu0 0
        %614 = vmatpush1.bf16.msra.mxu0 %v478
        %615 = vmatprep.subr.bf16.mxu0 0
        %616 = vmatpush1.bf16.msra.mxu0 %v481
        %617 = vmatprep.subr.bf16.mxu0 0
        %618 = vmatpush1.bf16.msra.mxu0 %v484
        %619 = vmatprep.subr.bf16.mxu0 0
        %620 = vmatpush1.bf16.msra.mxu0 %v487
        %621 = vmatprep.subr.bf16.mxu0 0
        %622 = vmatpush1.bf16.msra.mxu0 %v490
        %623 = vmatprep.subr.bf16.mxu0 0
        %624 = vmatpush1.bf16.msra.mxu0 %v493
        %625 = vmatprep.subr.bf16.mxu0 0
        %626 = vmatpush1.bf16.msra.mxu0 %v496
        %627 = vmatprep.subr.bf16.mxu0 0
        %628 = vmatpush1.bf16.msra.mxu0 0
        %629 = vmatprep.subr.bf16.mxu0 0
        %630 = vmatpush1.bf16.msra.mxu0 0
        %631 = vmatprep.subr.bf16.mxu0 0
        %632 = vmatpush1.bf16.msra.mxu0 0
        %633 = vmatprep.subr.bf16.mxu0 0
        %634 = vmatpush1.bf16.msra.mxu0 0
        %635 = vmatprep.subr.bf16.mxu0 0
        %636 = vmatpush1.bf16.msra.mxu0 0
        %637 = vmatprep.subr.bf16.mxu0 0
        %638 = vmatpush1.bf16.msra.mxu0 0
        %639 = vmatprep.subr.bf16.mxu0 0
        %640 = vmatpush1.bf16.msra.mxu0 0
        %641 = vmatprep.subr.bf16.mxu0 0
        %642 = vmatpush1.bf16.msra.mxu0 0
        %643 = vmatprep.mubr.bf16.mxu0 0
        %644 = vmatmul.mubr.bf16.gmra.mrb[0].mxu0 %v530
        %v645 = vpop.f32.mrb[0].mxu0
        %v646 = vadd.f32 %v510, %v645
        %v647 = vpop.f32.mrb[0].mxu0
        %v648 = vpop.f32.mrb[0].mxu0
        %v649 = vadd.f32 %v510, %v648
        %v650 = vpop.f32.mrb[0].mxu0
        %651 = vmatprep.mubr.bf16.mxu0 0
        %652 = vmatmul.mubr.bf16.gmra.mrb[0].mxu0 %v531
        %v653 = vpop.f32.mrb[0].mxu0
        %v654 = vadd.f32 %v510, %v653
        %v655 = vpop.f32.mrb[0].mxu0
        %v656 = vpop.f32.mrb[0].mxu0
        %v657 = vadd.f32 %v510, %v656
        %v658 = vpop.f32.mrb[0].mxu0
        %659 = vmatprep.mubr.bf16.mxu0 0
        %660 = vmatmul.mubr.bf16.gmra.mrb[0].mxu0 %v532
        %v661 = vpop.f32.mrb[0].mxu0
        %v662 = vadd.f32 %v510, %v661
        %v663 = vpop.f32.mrb[0].mxu0
        %v664 = vpop.f32.mrb[0].mxu0
        %v665 = vadd.f32 %v510, %v664
        %v666 = vpop.f32.mrb[0].mxu0
        %667 = vmatprep.mubr.bf16.mxu0 0
        %668 = vmatmul.mubr.bf16.gmra.mrb[0].mxu0 %v533
        %v669 = vpop.f32.mrb[0].mxu0
        %v670 = vadd.f32 %v510, %v669
        %v671 = vpop.f32.mrb[0].mxu0
        %v672 = vpop.f32.mrb[0].mxu0
        %v673 = vadd.f32 %v510, %v672
        %v674 = vpop.f32.mrb[0].mxu0
        %675 = vdwg.mxu0
        %v676 = vpack.c.bf16 %v577, %v573
        %v677 = vpack.c.bf16 %v579, %v575
        %v678 = vpack.c.bf16 %v649, %v646
        %v679 = vpack.c.bf16 %v587, %v583
        %v680 = vpack.c.bf16 %v589, %v585
        %v681 = vpack.c.bf16 %v657, %v654
        %v682 = vpack.c.bf16 %v597, %v593
        %v683 = vpack.c.bf16 %v599, %v595
        %v684 = vpack.c.bf16 %v665, %v662
        %v685 = vpack.c.bf16 %v607, %v603
        %v686 = vpack.c.bf16 %v609, %v605
        %v687 = vpack.c.bf16 %v673, %v670
        %688 = vst [vmem:[#allocation4] sm:$0xff] %v676
        %689 = vst [vmem:[#allocation4 + $0x8] sm:$0xff] %v677
        %690 = vst [vmem:[#allocation4 + $0x10] sm:$0xff] %v678
        %691 = vst [vmem:[#allocation4 + $0x18] sm:$0xff] %v679
        %692 = vst [vmem:[#allocation4 + $0x20] sm:$0xff] %v680
        %693 = vst [vmem:[#allocation4 + $0x28] sm:$0xff] %v681
        %694 = vst [vmem:[#allocation4 + $0x30] sm:$0xff] %v682
        %695 = vst [vmem:[#allocation4 + $0x38] sm:$0xff] %v683
        %696 = vst [vmem:[#allocation4 + $0x40] sm:$0xff] %v684
        %697 = vst [vmem:[#allocation4 + $0x48] sm:$0xff] %v685
        %698 = vst [vmem:[#allocation4 + $0x50] sm:$0xff] %v686
        %699 = vst [vmem:[#allocation4 + $0x58] sm:$0xff] %v687
        %v700 = vld [vmem:[#allocation3] sm:$0xff]
        %v701 = vld [vmem:[#allocation3 + $0x8] sm:$0xff]
        %v702 = vld [vmem:[#allocation3 + $0x10] sm:$0xff]
        %v703 = vld [vmem:[#allocation3 + $0x18] sm:$0xff]
        %v704 = vld [vmem:[#allocation3 + $0x20] sm:$0xff]
        %v705 = vld [vmem:[#allocation3 + $0x28] sm:$0xff]
        %v706 = vld [vmem:[#allocation3 + $0x30] sm:$0xff]
        %v707 = vld [vmem:[#allocation3 + $0x38] sm:$0xff]
        %v708 = vld [vmem:[#allocation3 + $0x40] sm:$0xff]
        %v709 = vld [vmem:[#allocation3 + $0x48] sm:$0xff]
        %v710 = vld [vmem:[#allocation3 + $0x50] sm:$0xff]
        %v711 = vld [vmem:[#allocation3 + $0x58] sm:$0xff]
        %v712 = vld [vmem:[#allocation3 + $0x60] sm:$0xff]
        %v713 = vld [vmem:[#allocation3 + $0x68] sm:$0xff]
        %v714 = vld [vmem:[#allocation3 + $0x70] sm:$0xff]
        %v715 = vld [vmem:[#allocation3 + $0x78] sm:$0xff]
        %v716 = vld [vmem:[#allocation3 + $0x80] sm:$0xff]
        %v717 = vld [vmem:[#allocation3 + $0x88] sm:$0xff]
        %v718 = vld [vmem:[#allocation3 + $0x90] sm:$0xff]
        %v719 = vld [vmem:[#allocation3 + $0x98] sm:$0xff]
        %v720 = vld [vmem:[#allocation3 + $0xa0] sm:$0xff]
        %v721 = vld [vmem:[#allocation3 + $0xa8] sm:$0xff]
        %v722 = vld [vmem:[#allocation3 + $0xb0] sm:$0xff]
        %v723 = vld [vmem:[#allocation3 + $0xb8] sm:$0xff]
        %v724 = vld [vmem:[%s371] sm:$0x7]
        %p725 = scmp.eq.s32.totalorder %s29, 0
        // Predicated region
        $region41: #{tpu_custom_call.1} parent=35 // pred_check
          %p726 = pneg %p725
        $region42: #{tpu_custom_call.1} parent=35 // pred_check_branch
          %728 = sbr.rel (%p726) target = $region44
        $region43: #{tpu_custom_call.1} parent=35 // pred_region
          %v729 = vld [vmem:[#allocation5] sm:$0xff]
          %v730 = vld [vmem:[#allocation5 + $0x8] sm:$0xff]
          %s731 = smul.u32 0, 3
          %s732 = smul.addr %s731, 8
          %s733 = scalar_lea.vmem [#allocation4], %s732
          %v734 = vld [vmem:[%s733] sm:$0xff]
          %v735 = vld [vmem:[%s733 + $0x8] sm:$0xff]
          %v736 = vld [vmem:[%s733 + $0x10] sm:$0xff]
          %v737 = vld [vmem:[%s358] sm:$0xff]
          %v738 = vld [vmem:[%s358 + $0x8] sm:$0xff]
          %v739 = vpack.c.bf16 %v730, %v729
          %v741 = vlaneseq
          %v742 = vshrl.u32 %v741, 7
          %v743 = vsub.s32 0, %v742
          %v744 = vrot.slane %v724, %v743
          %v745 = vlaneseq
          %v746 = vshrl.u32 %v745, 7
          %v747 = vsub.s32 1, %v746
          %v748 = vrot.slane %v724, %v747
          %v749 = vlaneseq
          %v750 = vshrl.u32 %v749, 7
          %v751 = vsub.s32 2, %v750
          %v752 = vrot.slane %v724, %v751
          %756 = vmatprep.subr.bf16.mxu0 %v701
          %757 = vmatpush1.bf16.msra.mxu0 %v700
          %758 = vmatprep.subr.bf16.mxu0 %v704
          %759 = vmatpush1.bf16.msra.mxu0 %v703
          %760 = vmatprep.subr.bf16.mxu0 %v707
          %761 = vmatpush1.bf16.msra.mxu0 %v706
          %762 = vmatprep.subr.bf16.mxu0 %v710
          %763 = vmatpush1.bf16.msra.mxu0 %v709
          %764 = vmatprep.subr.bf16.mxu0 %v713
          %765 = vmatpush1.bf16.msra.mxu0 %v712
          %766 = vmatprep.subr.bf16.mxu0 %v716
          %767 = vmatpush1.bf16.msra.mxu0 %v715
          %768 = vmatprep.subr.bf16.mxu0 %v719
          %769 = vmatpush1.bf16.msra.mxu0 %v718
          %770 = vmatprep.subr.bf16.mxu0 %v722
          %771 = vmatpush1.bf16.msra.mxu0 %v721
          %772 = vmatprep.subr.bf16.mxu0 0
          %773 = vmatpush1.bf16.msra.mxu0 0
          %774 = vmatprep.subr.bf16.mxu0 0
          %775 = vmatpush1.bf16.msra.mxu0 0
          %776 = vmatprep.subr.bf16.mxu0 0
          %777 = vmatpush1.bf16.msra.mxu0 0
          %778 = vmatprep.subr.bf16.mxu0 0
          %779 = vmatpush1.bf16.msra.mxu0 0
          %780 = vmatprep.subr.bf16.mxu0 0
          %781 = vmatpush1.bf16.msra.mxu0 0
          %782 = vmatprep.subr.bf16.mxu0 0
          %783 = vmatpush1.bf16.msra.mxu0 0
          %784 = vmatprep.subr.bf16.mxu0 0
          %785 = vmatpush1.bf16.msra.mxu0 0
          %786 = vmatprep.subr.bf16.mxu0 0
          %787 = vmatpush1.bf16.msra.mxu0 0
          %788 = vmatprep.mubr.bf16.mxu0 0
          %789 = vmatmul.mubr.bf16.gmra.mrb[0].mxu0 %v739
          %v790 = vpop.f32.mrb[0].mxu0
          %v791 = vadd.f32 %v744, %v790
          %v792 = vpop.f32.mrb[0].mxu0
          %v793 = vadd.f32 %v748, %v792
          %v794 = vpop.f32.mrb[0].mxu0
          %v795 = vadd.f32 %v744, %v794
          %v796 = vpop.f32.mrb[0].mxu0
          %v797 = vadd.f32 %v748, %v796
          %798 = vdwg.mxu0
          %799 = vmatprep.subr.bf16.mxu0 0
          %800 = vmatpush1.bf16.msra.mxu0 %v702
          %801 = vmatprep.subr.bf16.mxu0 0
          %802 = vmatpush1.bf16.msra.mxu0 %v705
          %803 = vmatprep.subr.bf16.mxu0 0
          %804 = vmatpush1.bf16.msra.mxu0 %v708
          %805 = vmatprep.subr.bf16.mxu0 0
          %806 = vmatpush1.bf16.msra.mxu0 %v711
          %807 = vmatprep.subr.bf16.mxu0 0
          %808 = vmatpush1.bf16.msra.mxu0 %v714
          %809 = vmatprep.subr.bf16.mxu0 0
          %810 = vmatpush1.bf16.msra.mxu0 %v717
          %811 = vmatprep.subr.bf16.mxu0 0
          %812 = vmatpush1.bf16.msra.mxu0 %v720
          %813 = vmatprep.subr.bf16.mxu0 0
          %814 = vmatpush1.bf16.msra.mxu0 %v723
          %815 = vmatprep.subr.bf16.mxu0 0
          %816 = vmatpush1.bf16.msra.mxu0 0
          %817 = vmatprep.subr.bf16.mxu0 0
          %818 = vmatpush1.bf16.msra.mxu0 0
          %819 = vmatprep.subr.bf16.mxu0 0
          %820 = vmatpush1.bf16.msra.mxu0 0
          %821 = vmatprep.subr.bf16.mxu0 0
          %822 = vmatpush1.bf16.msra.mxu0 0
          %823 = vmatprep.subr.bf16.mxu0 0
          %824 = vmatpush1.bf16.msra.mxu0 0
          %825 = vmatprep.subr.bf16.mxu0 0
          %826 = vmatpush1.bf16.msra.mxu0 0
          %827 = vmatprep.subr.bf16.mxu0 0
          %828 = vmatpush1.bf16.msra.mxu0 0
          %829 = vmatprep.subr.bf16.mxu0 0
          %830 = vmatpush1.bf16.msra.mxu0 0
          %831 = vmatprep.mubr.bf16.mxu0 0
          %832 = vmatmul.mubr.bf16.gmra.mrb[0].mxu0 %v739
          %v833 = vpop.f32.mrb[0].mxu0
          %v834 = vadd.f32 %v752, %v833
          %v835 = vpop.f32.mrb[0].mxu0
          %v836 = vpop.f32.mrb[0].mxu0
          %v837 = vadd.f32 %v752, %v836
          %v838 = vpop.f32.mrb[0].mxu0
          %839 = vdwg.mxu0
          %v840 = vunpack.c.l.bf16 %v734
          %v841 = vunpack.c.h.bf16 %v734
          %v842 = vadd.f32 %v840, %v791
          %v843 = vadd.f32 %v841, %v795
          %v844 = vxor.u32 %v842, 2147483648
          %v845 = vxor.u32 %v843, 2147483648
          %v846 = vmul.f32 %v844, 1.442695
          %v847 = vpow.pop %v846
          %v848 = vmul.f32 %v845, 1.442695
          %v849 = vpow.pop %v848
          %v850 = vadd.f32 %v847, 1.0
          %v851 = vadd.f32 %v849, 1.0
          %v852 = vrcp.pop %v850
          %v853 = vmul.f32 1.0, %v852
          %v854 = vrcp.pop %v851
          %v855 = vmul.f32 1.0, %v854
          %v856 = vunpack.c.l.bf16 %v735
          %v857 = vunpack.c.h.bf16 %v735
          %v858 = vadd.f32 %v856, %v793
          %v859 = vadd.f32 %v857, %v797
          %v860 = vxor.u32 %v858, 2147483648
          %v861 = vxor.u32 %v859, 2147483648
          %v862 = vmul.f32 %v860, 1.442695
          %v863 = vpow.pop %v862
          %v864 = vmul.f32 %v861, 1.442695
          %v865 = vpow.pop %v864
          %v866 = vadd.f32 %v863, 1.0
          %v867 = vadd.f32 %v865, 1.0
          %v868 = vrcp.pop %v866
          %v869 = vmul.f32 1.0, %v868
          %v870 = vrcp.pop %v867
          %v871 = vmul.f32 1.0, %v870
          %v872 = vmul.f32 %v853, %v834
          %v873 = vmul.f32 %v855, %v837
          %v874 = vunpack.c.l.bf16 %v736
          %v875 = vunpack.c.h.bf16 %v736
          %v876 = vadd.f32 %v874, %v872
          %v877 = vadd.f32 %v875, %v873
          %v878 = vtanh.pop %v876
          %v879 = vtanh.pop %v877
          %v880 = vsub.f32 1.0, %v869
          %v881 = vsub.f32 1.0, %v871
          %v882 = vmul.f32 %v880, %v878
          %v883 = vmul.f32 %v881, %v879
          %v884 = vmul.f32 %v869, %v729
          %v885 = vmul.f32 %v871, %v730
          %v886 = vadd.f32 %v882, %v884
          %v887 = vadd.f32 %v883, %v885
          %889 = vset.pattern.permute.xlu0 0
          %890 = vperm.xlu0 %889, %v737
          %v891 = vpop.permute.xlu0 %890
          %894 = vset.pattern.permute.xlu0 0
          %895 = vperm.xlu0 %894, %v738
          %v896 = vpop.permute.xlu0 %895
          %v898 = vmul.f32 %v891, %v886
          %v899 = vmul.f32 %v896, %v887
          %v900 = vpack.c.bf16 %v899, %v898
          %v902 = vunpack.c.l.b16 %v900
          %v903 = vunpack.c.h.b16 %v900
          %v904 = vpack.c.b16 %v902, %v902
          %v905 = vpack.c.b16 %v903, %v903
          %908 = vst [vmem:[%s328] sm:$0xf] %v904
          %909 = vst [vmem:[%s328 + $0x4] sm:$0xf] %v905
          %v910 = vsub.f32 1.0, %v737
          %v911 = vsub.f32 1.0, %v738
          %913 = vset.pattern.permute.xlu0 0
          %914 = vperm.xlu0 %913, %v910
          %v915 = vpop.permute.xlu0 %914
          %918 = vset.pattern.permute.xlu0 0
          %919 = vperm.xlu0 %918, %v911
          %v920 = vpop.permute.xlu0 %919
          %v922 = vmul.f32 %v915, %v729
          %v923 = vmul.f32 %v920, %v730
          %v924 = vadd.f32 %v898, %v922
          %v925 = vadd.f32 %v899, %v923
          %s926 = smul.u32 1, 3
          %s927 = smul.addr %s926, 8
          %s928 = scalar_lea.vmem [#allocation4], %s927
          %v929 = vld [vmem:[%s928] sm:$0xff]
          %v930 = vld [vmem:[%s928 + $0x8] sm:$0xff]
          %v931 = vld [vmem:[%s928 + $0x10] sm:$0xff]
          %s932 = scalar_lea.vmem %s358, 16
          %v933 = vld [vmem:[%s932] sm:$0xff]
          %v934 = vld [vmem:[%s932 + $0x8] sm:$0xff]
          %v935 = vpack.c.bf16 %v925, %v924
          %936 = vmatprep.subr.bf16.mxu0 %v701
          %937 = vmatpush1.bf16.msra.mxu0 %v700
          %938 = vmatprep.subr.bf16.mxu0 %v704
          %939 = vmatpush1.bf16.msra.mxu0 %v703
          %940 = vmatprep.subr.bf16.mxu0 %v707
          %941 = vmatpush1.bf16.msra.mxu0 %v706
          %942 = vmatprep.subr.bf16.mxu0 %v710
          %943 = vmatpush1.bf16.msra.mxu0 %v709
          %944 = vmatprep.subr.bf16.mxu0 %v713
          %945 = vmatpush1.bf16.msra.mxu0 %v712
          %946 = vmatprep.subr.bf16.mxu0 %v716
          %947 = vmatpush1.bf16.msra.mxu0 %v715
          %948 = vmatprep.subr.bf16.mxu0 %v719
          %949 = vmatpush1.bf16.msra.mxu0 %v718
          %950 = vmatprep.subr.bf16.mxu0 %v722
          %951 = vmatpush1.bf16.msra.mxu0 %v721
          %952 = vmatprep.subr.bf16.mxu0 0
          %953 = vmatpush1.bf16.msra.mxu0 0
          %954 = vmatprep.subr.bf16.mxu0 0
          %955 = vmatpush1.bf16.msra.mxu0 0
          %956 = vmatprep.subr.bf16.mxu0 0
          %957 = vmatpush1.bf16.msra.mxu0 0
          %958 = vmatprep.subr.bf16.mxu0 0
          %959 = vmatpush1.bf16.msra.mxu0 0
          %960 = vmatprep.subr.bf16.mxu0 0
          %961 = vmatpush1.bf16.msra.mxu0 0
          %962 = vmatprep.subr.bf16.mxu0 0
          %963 = vmatpush1.bf16.msra.mxu0 0
          %964 = vmatprep.subr.bf16.mxu0 0
          %965 = vmatpush1.bf16.msra.mxu0 0
          %966 = vmatprep.subr.bf16.mxu0 0
          %967 = vmatpush1.bf16.msra.mxu0 0
          %968 = vmatprep.mubr.bf16.mxu0 0
          %969 = vmatmul.mubr.bf16.gmra.mrb[0].mxu0 %v935
          %v970 = vpop.f32.mrb[0].mxu0
          %v971 = vadd.f32 %v744, %v970
          %v972 = vpop.f32.mrb[0].mxu0
          %v973 = vadd.f32 %v748, %v972
          %v974 = vpop.f32.mrb[0].mxu0
          %v975 = vadd.f32 %v744, %v974
          %v976 = vpop.f32.mrb[0].mxu0
          %v977 = vadd.f32 %v748, %v976
          %978 = vdwg.mxu0
          %979 = vmatprep.subr.bf16.mxu0 0
          %980 = vmatpush1.bf16.msra.mxu0 %v702
          %981 = vmatprep.subr.bf16.mxu0 0
          %982 = vmatpush1.bf16.msra.mxu0 %v705
          %983 = vmatprep.subr.bf16.mxu0 0
          %984 = vmatpush1.bf16.msra.mxu0 %v708
          %985 = vmatprep.subr.bf16.mxu0 0
          %986 = vmatpush1.bf16.msra.mxu0 %v711
          %987 = vmatprep.subr.bf16.mxu0 0
          %988 = vmatpush1.bf16.msra.mxu0 %v714
          %989 = vmatprep.subr.bf16.mxu0 0
          %990 = vmatpush1.bf16.msra.mxu0 %v717
          %991 = vmatprep.subr.bf16.mxu0 0
          %992 = vmatpush1.bf16.msra.mxu0 %v720
          %993 = vmatprep.subr.bf16.mxu0 0
          %994 = vmatpush1.bf16.msra.mxu0 %v723
          %995 = vmatprep.subr.bf16.mxu0 0
          %996 = vmatpush1.bf16.msra.mxu0 0
          %997 = vmatprep.subr.bf16.mxu0 0
          %998 = vmatpush1.bf16.msra.mxu0 0
          %999 = vmatprep.subr.bf16.mxu0 0
          %1000 = vmatpush1.bf16.msra.mxu0 0
          %1001 = vmatprep.subr.bf16.mxu0 0
          %1002 = vmatpush1.bf16.msra.mxu0 0
          %1003 = vmatprep.subr.bf16.mxu0 0
          %1004 = vmatpush1.bf16.msra.mxu0 0
          %1005 = vmatprep.subr.bf16.mxu0 0
          %1006 = vmatpush1.bf16.msra.mxu0 0
          %1007 = vmatprep.subr.bf16.mxu0 0
          %1008 = vmatpush1.bf16.msra.mxu0 0
          %1009 = vmatprep.subr.bf16.mxu0 0
          %1010 = vmatpush1.bf16.msra.mxu0 0
          %1011 = vmatprep.mubr.bf16.mxu0 0
          %1012 = vmatmul.mubr.bf16.gmra.mrb[0].mxu0 %v935
          %v1013 = vpop.f32.mrb[0].mxu0
          %v1014 = vadd.f32 %v752, %v1013
          %v1015 = vpop.f32.mrb[0].mxu0
          %v1016 = vpop.f32.mrb[0].mxu0
          %v1017 = vadd.f32 %v752, %v1016
          %v1018 = vpop.f32.mrb[0].mxu0
          %1019 = vdwg.mxu0
          %v1020 = vunpack.c.l.bf16 %v929
          %v1021 = vunpack.c.h.bf16 %v929
          %v1022 = vadd.f32 %v1020, %v971
          %v1023 = vadd.f32 %v1021, %v975
          %v1024 = vxor.u32 %v1022, 2147483648
          %v1025 = vxor.u32 %v1023, 2147483648
          %v1026 = vmul.f32 %v1024, 1.442695
          %v1027 = vpow.pop %v1026
          %v1028 = vmul.f32 %v1025, 1.442695
          %v1029 = vpow.pop %v1028
          %v1030 = vadd.f32 %v1027, 1.0
          %v1031 = vadd.f32 %v1029, 1.0
          %v1032 = vrcp.pop %v1030
          %v1033 = vmul.f32 1.0, %v1032
          %v1034 = vrcp.pop %v1031
          %v1035 = vmul.f32 1.0, %v1034
          %v1036 = vunpack.c.l.bf16 %v930
          %v1037 = vunpack.c.h.bf16 %v930
          %v1038 = vadd.f32 %v1036, %v973
          %v1039 = vadd.f32 %v1037, %v977
          %v1040 = vxor.u32 %v1038, 2147483648
          %v1041 = vxor.u32 %v1039, 2147483648
          %v1042 = vmul.f32 %v1040, 1.442695
          %v1043 = vpow.pop %v1042
          %v1044 = vmul.f32 %v1041, 1.442695
          %v1045 = vpow.pop %v1044
          %v1046 = vadd.f32 %v1043, 1.0
          %v1047 = vadd.f32 %v1045, 1.0
          %v1048 = vrcp.pop %v1046
          %v1049 = vmul.f32 1.0, %v1048
          %v1050 = vrcp.pop %v1047
          %v1051 = vmul.f32 1.0, %v1050
          %v1052 = vmul.f32 %v1033, %v1014
          %v1053 = vmul.f32 %v1035, %v1017
          %v1054 = vunpack.c.l.bf16 %v931
          %v1055 = vunpack.c.h.bf16 %v931
          %v1056 = vadd.f32 %v1054, %v1052
          %v1057 = vadd.f32 %v1055, %v1053
          %v1058 = vtanh.pop %v1056
          %v1059 = vtanh.pop %v1057
          %v1060 = vsub.f32 1.0, %v1049
          %v1061 = vsub.f32 1.0, %v1051
          %v1062 = vmul.f32 %v1060, %v1058
          %v1063 = vmul.f32 %v1061, %v1059
          %v1064 = vmul.f32 %v1049, %v924
          %v1065 = vmul.f32 %v1051, %v925
          %v1066 = vadd.f32 %v1062, %v1064
          %v1067 = vadd.f32 %v1063, %v1065
          %1069 = vset.pattern.permute.xlu0 0
          %1070 = vperm.xlu0 %1069, %v933
          %v1071 = vpop.permute.xlu0 %1070
          %1074 = vset.pattern.permute.xlu0 0
          %1075 = vperm.xlu0 %1074, %v934
          %v1076 = vpop.permute.xlu0 %1075
          %v1078 = vmul.f32 %v1071, %v1066
          %v1079 = vmul.f32 %v1076, %v1067
          %v1080 = vpack.c.bf16 %v1079, %v1078
          %v1082 = vunpack.c.l.b16 %v1080
          %v1083 = vunpack.c.h.b16 %v1080
          %v1084 = vpack.c.b16 %v1082, %v1082
          %v1085 = vpack.c.b16 %v1083, %v1083
          %s1088 = scalar_lea.vmem %s328, 8 [#allocation7]
          %1089 = vst [vmem:[%s1088] sm:$0xf] %v1084
          %1090 = vst [vmem:[%s1088 + $0x4] sm:$0xf] %v1085
          %v1091 = vsub.f32 1.0, %v933
          %v1092 = vsub.f32 1.0, %v934
          %1094 = vset.pattern.permute.xlu0 0
          %1095 = vperm.xlu0 %1094, %v1091
          %v1096 = vpop.permute.xlu0 %1095
          %1099 = vset.pattern.permute.xlu0 0
          %1100 = vperm.xlu0 %1099, %v1092
          %v1101 = vpop.permute.xlu0 %1100
          %v1103 = vmul.f32 %v1096, %v924
          %v1104 = vmul.f32 %v1101, %v925
          %v1105 = vadd.f32 %v1078, %v1103
          %v1106 = vadd.f32 %v1079, %v1104
          %s1107 = smul.u32 2, 3
          %s1108 = smul.addr %s1107, 8
          %s1109 = scalar_lea.vmem [#allocation4], %s1108
          %v1110 = vld [vmem:[%s1109] sm:$0xff]
          %v1111 = vld [vmem:[%s1109 + $0x8] sm:$0xff]
          %v1112 = vld [vmem:[%s1109 + $0x10] sm:$0xff]
          %s1113 = scalar_lea.vmem %s358, 32
          %v1114 = vld [vmem:[%s1113] sm:$0xff]
          %v1115 = vld [vmem:[%s1113 + $0x8] sm:$0xff]
          %v1116 = vpack.c.bf16 %v1106, %v1105
          %1117 = vmatprep.subr.bf16.mxu0 %v701
          %1118 = vmatpush1.bf16.msra.mxu0 %v700
          %1119 = vmatprep.subr.bf16.mxu0 %v704
          %1120 = vmatpush1.bf16.msra.mxu0 %v703
          %1121 = vmatprep.subr.bf16.mxu0 %v707
          %1122 = vmatpush1.bf16.msra.mxu0 %v706
          %1123 = vmatprep.subr.bf16.mxu0 %v710
          %1124 = vmatpush1.bf16.msra.mxu0 %v709
          %1125 = vmatprep.subr.bf16.mxu0 %v713
          %1126 = vmatpush1.bf16.msra.mxu0 %v712
          %1127 = vmatprep.subr.bf16.mxu0 %v716
          %1128 = vmatpush1.bf16.msra.mxu0 %v715
          %1129 = vmatprep.subr.bf16.mxu0 %v719
          %1130 = vmatpush1.bf16.msra.mxu0 %v718
          %1131 = vmatprep.subr.bf16.mxu0 %v722
          %1132 = vmatpush1.bf16.msra.mxu0 %v721
          %1133 = vmatprep.subr.bf16.mxu0 0
          %1134 = vmatpush1.bf16.msra.mxu0 0
          %1135 = vmatprep.subr.bf16.mxu0 0
          %1136 = vmatpush1.bf16.msra.mxu0 0
          %1137 = vmatprep.subr.bf16.mxu0 0
          %1138 = vmatpush1.bf16.msra.mxu0 0
          %1139 = vmatprep.subr.bf16.mxu0 0
          %1140 = vmatpush1.bf16.msra.mxu0 0
          %1141 = vmatprep.subr.bf16.mxu0 0
          %1142 = vmatpush1.bf16.msra.mxu0 0
          %1143 = vmatprep.subr.bf16.mxu0 0
          %1144 = vmatpush1.bf16.msra.mxu0 0
          %1145 = vmatprep.subr.bf16.mxu0 0
          %1146 = vmatpush1.bf16.msra.mxu0 0
          %1147 = vmatprep.subr.bf16.mxu0 0
          %1148 = vmatpush1.bf16.msra.mxu0 0
          %1149 = vmatprep.mubr.bf16.mxu0 0
          %1150 = vmatmul.mubr.bf16.gmra.mrb[0].mxu0 %v1116
          %v1151 = vpop.f32.mrb[0].mxu0
          %v1152 = vadd.f32 %v744, %v1151
          %v1153 = vpop.f32.mrb[0].mxu0
          %v1154 = vadd.f32 %v748, %v1153
          %v1155 = vpop.f32.mrb[0].mxu0
          %v1156 = vadd.f32 %v744, %v1155
          %v1157 = vpop.f32.mrb[0].mxu0
          %v1158 = vadd.f32 %v748, %v1157
          %1159 = vdwg.mxu0
          %1160 = vmatprep.subr.bf16.mxu0 0
          %1161 = vmatpush1.bf16.msra.mxu0 %v702
          %1162 = vmatprep.subr.bf16.mxu0 0
          %1163 = vmatpush1.bf16.msra.mxu0 %v705
          %1164 = vmatprep.subr.bf16.mxu0 0
          %1165 = vmatpush1.bf16.msra.mxu0 %v708
          %1166 = vmatprep.subr.bf16.mxu0 0
          %1167 = vmatpush1.bf16.msra.mxu0 %v711
          %1168 = vmatprep.subr.bf16.mxu0 0
          %1169 = vmatpush1.bf16.msra.mxu0 %v714
          %1170 = vmatprep.subr.bf16.mxu0 0
          %1171 = vmatpush1.bf16.msra.mxu0 %v717
          %1172 = vmatprep.subr.bf16.mxu0 0
          %1173 = vmatpush1.bf16.msra.mxu0 %v720
          %1174 = vmatprep.subr.bf16.mxu0 0
          %1175 = vmatpush1.bf16.msra.mxu0 %v723
          %1176 = vmatprep.subr.bf16.mxu0 0
          %1177 = vmatpush1.bf16.msra.mxu0 0
          %1178 = vmatprep.subr.bf16.mxu0 0
          %1179 = vmatpush1.bf16.msra.mxu0 0
          %1180 = vmatprep.subr.bf16.mxu0 0
          %1181 = vmatpush1.bf16.msra.mxu0 0
          %1182 = vmatprep.subr.bf16.mxu0 0
          %1183 = vmatpush1.bf16.msra.mxu0 0
          %1184 = vmatprep.subr.bf16.mxu0 0
          %1185 = vmatpush1.bf16.msra.mxu0 0
          %1186 = vmatprep.subr.bf16.mxu0 0
          %1187 = vmatpush1.bf16.msra.mxu0 0
          %1188 = vmatprep.subr.bf16.mxu0 0
          %1189 = vmatpush1.bf16.msra.mxu0 0
          %1190 = vmatprep.subr.bf16.mxu0 0
          %1191 = vmatpush1.bf16.msra.mxu0 0
          %1192 = vmatprep.mubr.bf16.mxu0 0
          %1193 = vmatmul.mubr.bf16.gmra.mrb[0].mxu0 %v1116
          %v1194 = vpop.f32.mrb[0].mxu0
          %v1195 = vadd.f32 %v752, %v1194
          %v1196 = vpop.f32.mrb[0].mxu0
          %v1197 = vpop.f32.mrb[0].mxu0
          %v1198 = vadd.f32 %v752, %v1197
          %v1199 = vpop.f32.mrb[0].mxu0
          %1200 = vdwg.mxu0
          %v1201 = vunpack.c.l.bf16 %v1110
          %v1202 = vunpack.c.h.bf16 %v1110
          %v1203 = vadd.f32 %v1201, %v1152
          %v1204 = vadd.f32 %v1202, %v1156
          %v1205 = vxor.u32 %v1203, 2147483648
          %v1206 = vxor.u32 %v1204, 2147483648
          %v1207 = vmul.f32 %v1205, 1.442695
          %v1208 = vpow.pop %v1207
          %v1209 = vmul.f32 %v1206, 1.442695
          %v1210 = vpow.pop %v1209
          %v1211 = vadd.f32 %v1208, 1.0
          %v1212 = vadd.f32 %v1210, 1.0
          %v1213 = vrcp.pop %v1211
          %v1214 = vmul.f32 1.0, %v1213
          %v1215 = vrcp.pop %v1212
          %v1216 = vmul.f32 1.0, %v1215
          %v1217 = vunpack.c.l.bf16 %v1111
          %v1218 = vunpack.c.h.bf16 %v1111
          %v1219 = vadd.f32 %v1217, %v1154
          %v1220 = vadd.f32 %v1218, %v1158
          %v1221 = vxor.u32 %v1219, 2147483648
          %v1222 = vxor.u32 %v1220, 2147483648
          %v1223 = vmul.f32 %v1221, 1.442695
          %v1224 = vpow.pop %v1223
          %v1225 = vmul.f32 %v1222, 1.442695
          %v1226 = vpow.pop %v1225
          %v1227 = vadd.f32 %v1224, 1.0
          %v1228 = vadd.f32 %v1226, 1.0
          %v1229 = vrcp.pop %v1227
          %v1230 = vmul.f32 1.0, %v1229
          %v1231 = vrcp.pop %v1228
          %v1232 = vmul.f32 1.0, %v1231
          %v1233 = vmul.f32 %v1214, %v1195
          %v1234 = vmul.f32 %v1216, %v1198
          %v1235 = vunpack.c.l.bf16 %v1112
          %v1236 = vunpack.c.h.bf16 %v1112
          %v1237 = vadd.f32 %v1235, %v1233
          %v1238 = vadd.f32 %v1236, %v1234
          %v1239 = vtanh.pop %v1237
          %v1240 = vtanh.pop %v1238
          %v1241 = vsub.f32 1.0, %v1230
          %v1242 = vsub.f32 1.0, %v1232
          %v1243 = vmul.f32 %v1241, %v1239
          %v1244 = vmul.f32 %v1242, %v1240
          %v1245 = vmul.f32 %v1230, %v1105
          %v1246 = vmul.f32 %v1232, %v1106
          %v1247 = vadd.f32 %v1243, %v1245
          %v1248 = vadd.f32 %v1244, %v1246
          %1250 = vset.pattern.permute.xlu0 0
          %1251 = vperm.xlu0 %1250, %v1114
          %v1252 = vpop.permute.xlu0 %1251
          %1255 = vset.pattern.permute.xlu0 0
          %1256 = vperm.xlu0 %1255, %v1115
          %v1257 = vpop.permute.xlu0 %1256
          %v1259 = vmul.f32 %v1252, %v1247
          %v1260 = vmul.f32 %v1257, %v1248
          %v1261 = vpack.c.bf16 %v1260, %v1259
          %v1263 = vunpack.c.l.b16 %v1261
          %v1264 = vunpack.c.h.b16 %v1261
          %v1265 = vpack.c.b16 %v1263, %v1263
          %v1266 = vpack.c.b16 %v1264, %v1264
          %s1269 = scalar_lea.vmem %s328, 16 [#allocation7]
          %1270 = vst [vmem:[%s1269] sm:$0xf] %v1265
          %1271 = vst [vmem:[%s1269 + $0x4] sm:$0xf] %v1266
          %v1272 = vsub.f32 1.0, %v1114
          %v1273 = vsub.f32 1.0, %v1115
          %1275 = vset.pattern.permute.xlu0 0
          %1276 = vperm.xlu0 %1275, %v1272
          %v1277 = vpop.permute.xlu0 %1276
          %1280 = vset.pattern.permute.xlu0 0
          %1281 = vperm.xlu0 %1280, %v1273
          %v1282 = vpop.permute.xlu0 %1281
          %v1284 = vmul.f32 %v1277, %v1105
          %v1285 = vmul.f32 %v1282, %v1106
          %v1286 = vadd.f32 %v1259, %v1284
          %v1287 = vadd.f32 %v1260, %v1285
          %s1288 = smul.u32 3, 3
          %s1289 = smul.addr %s1288, 8
          %s1290 = scalar_lea.vmem [#allocation4], %s1289
          %v1291 = vld [vmem:[%s1290] sm:$0xff]
          %v1292 = vld [vmem:[%s1290 + $0x8] sm:$0xff]
          %v1293 = vld [vmem:[%s1290 + $0x10] sm:$0xff]
          %s1294 = scalar_lea.vmem %s358, 48
          %v1295 = vld [vmem:[%s1294] sm:$0xff]
          %v1296 = vld [vmem:[%s1294 + $0x8] sm:$0xff]
          %v1297 = vpack.c.bf16 %v1287, %v1286
          %1298 = vmatprep.subr.bf16.mxu0 %v701
          %1299 = vmatpush1.bf16.msra.mxu0 %v700
          %1300 = vmatprep.subr.bf16.mxu0 %v704
          %1301 = vmatpush1.bf16.msra.mxu0 %v703
          %1302 = vmatprep.subr.bf16.mxu0 %v707
          %1303 = vmatpush1.bf16.msra.mxu0 %v706
          %1304 = vmatprep.subr.bf16.mxu0 %v710
          %1305 = vmatpush1.bf16.msra.mxu0 %v709
          %1306 = vmatprep.subr.bf16.mxu0 %v713
          %1307 = vmatpush1.bf16.msra.mxu0 %v712
          %1308 = vmatprep.subr.bf16.mxu0 %v716
          %1309 = vmatpush1.bf16.msra.mxu0 %v715
          %1310 = vmatprep.subr.bf16.mxu0 %v719
          %1311 = vmatpush1.bf16.msra.mxu0 %v718
          %1312 = vmatprep.subr.bf16.mxu0 %v722
          %1313 = vmatpush1.bf16.msra.mxu0 %v721
          %1314 = vmatprep.subr.bf16.mxu0 0
          %1315 = vmatpush1.bf16.msra.mxu0 0
          %1316 = vmatprep.subr.bf16.mxu0 0
          %1317 = vmatpush1.bf16.msra.mxu0 0
          %1318 = vmatprep.subr.bf16.mxu0 0
          %1319 = vmatpush1.bf16.msra.mxu0 0
          %1320 = vmatprep.subr.bf16.mxu0 0
          %1321 = vmatpush1.bf16.msra.mxu0 0
          %1322 = vmatprep.subr.bf16.mxu0 0
          %1323 = vmatpush1.bf16.msra.mxu0 0
          %1324 = vmatprep.subr.bf16.mxu0 0
          %1325 = vmatpush1.bf16.msra.mxu0 0
          %1326 = vmatprep.subr.bf16.mxu0 0
          %1327 = vmatpush1.bf16.msra.mxu0 0
          %1328 = vmatprep.subr.bf16.mxu0 0
          %1329 = vmatpush1.bf16.msra.mxu0 0
          %1330 = vmatprep.mubr.bf16.mxu0 0
          %1331 = vmatmul.mubr.bf16.gmra.mrb[0].mxu0 %v1297
          %v1332 = vpop.f32.mrb[0].mxu0
          %v1333 = vadd.f32 %v744, %v1332
          %v1334 = vpop.f32.mrb[0].mxu0
          %v1335 = vadd.f32 %v748, %v1334
          %v1336 = vpop.f32.mrb[0].mxu0
          %v1337 = vadd.f32 %v744, %v1336
          %v1338 = vpop.f32.mrb[0].mxu0
          %v1339 = vadd.f32 %v748, %v1338
          %1340 = vdwg.mxu0
          %1341 = vmatprep.subr.bf16.mxu0 0
          %1342 = vmatpush1.bf16.msra.mxu0 %v702
          %1343 = vmatprep.subr.bf16.mxu0 0
          %1344 = vmatpush1.bf16.msra.mxu0 %v705
          %1345 = vmatprep.subr.bf16.mxu0 0
          %1346 = vmatpush1.bf16.msra.mxu0 %v708
          %1347 = vmatprep.subr.bf16.mxu0 0
          %1348 = vmatpush1.bf16.msra.mxu0 %v711
          %1349 = vmatprep.subr.bf16.mxu0 0
          %1350 = vmatpush1.bf16.msra.mxu0 %v714
          %1351 = vmatprep.subr.bf16.mxu0 0
          %1352 = vmatpush1.bf16.msra.mxu0 %v717
          %1353 = vmatprep.subr.bf16.mxu0 0
          %1354 = vmatpush1.bf16.msra.mxu0 %v720
          %1355 = vmatprep.subr.bf16.mxu0 0
          %1356 = vmatpush1.bf16.msra.mxu0 %v723
          %1357 = vmatprep.subr.bf16.mxu0 0
          %1358 = vmatpush1.bf16.msra.mxu0 0
          %1359 = vmatprep.subr.bf16.mxu0 0
          %1360 = vmatpush1.bf16.msra.mxu0 0
          %1361 = vmatprep.subr.bf16.mxu0 0
          %1362 = vmatpush1.bf16.msra.mxu0 0
          %1363 = vmatprep.subr.bf16.mxu0 0
          %1364 = vmatpush1.bf16.msra.mxu0 0
          %1365 = vmatprep.subr.bf16.mxu0 0
          %1366 = vmatpush1.bf16.msra.mxu0 0
          %1367 = vmatprep.subr.bf16.mxu0 0
          %1368 = vmatpush1.bf16.msra.mxu0 0
          %1369 = vmatprep.subr.bf16.mxu0 0
          %1370 = vmatpush1.bf16.msra.mxu0 0
          %1371 = vmatprep.subr.bf16.mxu0 0
          %1372 = vmatpush1.bf16.msra.mxu0 0
          %1373 = vmatprep.mubr.bf16.mxu0 0
          %1374 = vmatmul.mubr.bf16.gmra.mrb[0].mxu0 %v1297
          %v1375 = vpop.f32.mrb[0].mxu0
          %v1376 = vadd.f32 %v752, %v1375
          %v1377 = vpop.f32.mrb[0].mxu0
          %v1378 = vpop.f32.mrb[0].mxu0
          %v1379 = vadd.f32 %v752, %v1378
          %v1380 = vpop.f32.mrb[0].mxu0
          %1381 = vdwg.mxu0
          %v1382 = vunpack.c.l.bf16 %v1291
          %v1383 = vunpack.c.h.bf16 %v1291
          %v1384 = vadd.f32 %v1382, %v1333
          %v1385 = vadd.f32 %v1383, %v1337
          %v1386 = vxor.u32 %v1384, 2147483648
          %v1387 = vxor.u32 %v1385, 2147483648
          %v1388 = vmul.f32 %v1386, 1.442695
          %v1389 = vpow.pop %v1388
          %v1390 = vmul.f32 %v1387, 1.442695
          %v1391 = vpow.pop %v1390
          %v1392 = vadd.f32 %v1389, 1.0
          %v1393 = vadd.f32 %v1391, 1.0
          %v1394 = vrcp.pop %v1392
          %v1395 = vmul.f32 1.0, %v1394
          %v1396 = vrcp.pop %v1393
          %v1397 = vmul.f32 1.0, %v1396
          %v1398 = vunpack.c.l.bf16 %v1292
          %v1399 = vunpack.c.h.bf16 %v1292
          %v1400 = vadd.f32 %v1398, %v1335
          %v1401 = vadd.f32 %v1399, %v1339
          %v1402 = vxor.u32 %v1400, 2147483648
          %v1403 = vxor.u32 %v1401, 2147483648
          %v1404 = vmul.f32 %v1402, 1.442695
          %v1405 = vpow.pop %v1404
          %v1406 = vmul.f32 %v1403, 1.442695
          %v1407 = vpow.pop %v1406
          %v1408 = vadd.f32 %v1405, 1.0
          %v1409 = vadd.f32 %v1407, 1.0
          %v1410 = vrcp.pop %v1408
          %v1411 = vmul.f32 1.0, %v1410
          %v1412 = vrcp.pop %v1409
          %v1413 = vmul.f32 1.0, %v1412
          %v1414 = vmul.f32 %v1395, %v1376
          %v1415 = vmul.f32 %v1397, %v1379
          %v1416 = vunpack.c.l.bf16 %v1293
          %v1417 = vunpack.c.h.bf16 %v1293
          %v1418 = vadd.f32 %v1416, %v1414
          %v1419 = vadd.f32 %v1417, %v1415
          %v1420 = vtanh.pop %v1418
          %v1421 = vtanh.pop %v1419
          %v1422 = vsub.f32 1.0, %v1411
          %v1423 = vsub.f32 1.0, %v1413
          %v1424 = vmul.f32 %v1422, %v1420
          %v1425 = vmul.f32 %v1423, %v1421
          %v1426 = vmul.f32 %v1411, %v1286
          %v1427 = vmul.f32 %v1413, %v1287
          %v1428 = vadd.f32 %v1424, %v1426
          %v1429 = vadd.f32 %v1425, %v1427
          %1431 = vset.pattern.permute.xlu0 0
          %1432 = vperm.xlu0 %1431, %v1295
          %v1433 = vpop.permute.xlu0 %1432
          %1436 = vset.pattern.permute.xlu0 0
          %1437 = vperm.xlu0 %1436, %v1296
          %v1438 = vpop.permute.xlu0 %1437
          %v1440 = vmul.f32 %v1433, %v1428
          %v1441 = vmul.f32 %v1438, %v1429
          %v1442 = vpack.c.bf16 %v1441, %v1440
          %v1444 = vunpack.c.l.b16 %v1442
          %v1445 = vunpack.c.h.b16 %v1442
          %v1446 = vpack.c.b16 %v1444, %v1444
          %v1447 = vpack.c.b16 %v1445, %v1445
          %s1450 = scalar_lea.vmem %s328, 24 [#allocation7]
          %1451 = vst [vmem:[%s1450] sm:$0xf] %v1446
          %1452 = vst [vmem:[%s1450 + $0x4] sm:$0xf] %v1447
          %v1453 = vsub.f32 1.0, %v1295
          %v1454 = vsub.f32 1.0, %v1296
          %1456 = vset.pattern.permute.xlu0 0
          %1457 = vperm.xlu0 %1456, %v1453
          %v1458 = vpop.permute.xlu0 %1457
          %1461 = vset.pattern.permute.xlu0 0
          %1462 = vperm.xlu0 %1461, %v1454
          %v1463 = vpop.permute.xlu0 %1462
          %v1465 = vmul.f32 %v1458, %v1286
          %v1466 = vmul.f32 %v1463, %v1287
          %v1467 = vadd.f32 %v1440, %v1465
          %v1468 = vadd.f32 %v1441, %v1466
          %1469 = vst [vmem:[#allocation5] sm:$0xff] %v1467
          %1470 = vst [vmem:[#allocation5 + $0x8] sm:$0xff] %v1468
        $region44: #{tpu_custom_call.1} parent=35 // pred_fallthru
          _
        %p1471 = scmp.eq.s32.totalorder %s29, 1
        // Predicated region
        $region45: #{tpu_custom_call.1} parent=35 // pred_check
          %p1472 = pneg %p1471
        $region46: #{tpu_custom_call.1} parent=35 // pred_check_branch
          %1474 = sbr.rel (%p1472) target = $region48
        $region47: #{tpu_custom_call.1} parent=35 // pred_region
          %v1475 = vld [vmem:[#allocation5] sm:$0xff]
          %v1476 = vld [vmem:[#allocation5 + $0x8] sm:$0xff]
          %s1477 = smul.u32 3, 3
          %s1478 = smul.addr %s1477, 8
          %s1479 = scalar_lea.vmem [#allocation4], %s1478
          %v1480 = vld [vmem:[%s1479] sm:$0xff]
          %v1481 = vld [vmem:[%s1479 + $0x8] sm:$0xff]
          %v1482 = vld [vmem:[%s1479 + $0x10] sm:$0xff]
          %s1483 = scalar_lea.vmem %s358, 48
          %v1484 = vld [vmem:[%s1483] sm:$0xff]
          %v1485 = vld [vmem:[%s1483 + $0x8] sm:$0xff]
          %v1486 = vpack.c.bf16 %v1476, %v1475
          %v1488 = vlaneseq
          %v1489 = vshrl.u32 %v1488, 7
          %v1490 = vsub.s32 0, %v1489
          %v1491 = vrot.slane %v724, %v1490
          %v1492 = vlaneseq
          %v1493 = vshrl.u32 %v1492, 7
          %v1494 = vsub.s32 1, %v1493
          %v1495 = vrot.slane %v724, %v1494
          %v1496 = vlaneseq
          %v1497 = vshrl.u32 %v1496, 7
          %v1498 = vsub.s32 2, %v1497
          %v1499 = vrot.slane %v724, %v1498
          %1503 = vmatprep.subr.bf16.mxu0 %v701
          %1504 = vmatpush1.bf16.msra.mxu0 %v700
          %1505 = vmatprep.subr.bf16.mxu0 %v704
          %1506 = vmatpush1.bf16.msra.mxu0 %v703
          %1507 = vmatprep.subr.bf16.mxu0 %v707
          %1508 = vmatpush1.bf16.msra.mxu0 %v706
          %1509 = vmatprep.subr.bf16.mxu0 %v710
          %1510 = vmatpush1.bf16.msra.mxu0 %v709
          %1511 = vmatprep.subr.bf16.mxu0 %v713
          %1512 = vmatpush1.bf16.msra.mxu0 %v712
          %1513 = vmatprep.subr.bf16.mxu0 %v716
          %1514 = vmatpush1.bf16.msra.mxu0 %v715
          %1515 = vmatprep.subr.bf16.mxu0 %v719
          %1516 = vmatpush1.bf16.msra.mxu0 %v718
          %1517 = vmatprep.subr.bf16.mxu0 %v722
          %1518 = vmatpush1.bf16.msra.mxu0 %v721
          %1519 = vmatprep.subr.bf16.mxu0 0
          %1520 = vmatpush1.bf16.msra.mxu0 0
          %1521 = vmatprep.subr.bf16.mxu0 0
          %1522 = vmatpush1.bf16.msra.mxu0 0
          %1523 = vmatprep.subr.bf16.mxu0 0
          %1524 = vmatpush1.bf16.msra.mxu0 0
          %1525 = vmatprep.subr.bf16.mxu0 0
          %1526 = vmatpush1.bf16.msra.mxu0 0
          %1527 = vmatprep.subr.bf16.mxu0 0
          %1528 = vmatpush1.bf16.msra.mxu0 0
          %1529 = vmatprep.subr.bf16.mxu0 0
          %1530 = vmatpush1.bf16.msra.mxu0 0
          %1531 = vmatprep.subr.bf16.mxu0 0
          %1532 = vmatpush1.bf16.msra.mxu0 0
          %1533 = vmatprep.subr.bf16.mxu0 0
          %1534 = vmatpush1.bf16.msra.mxu0 0
          %1535 = vmatprep.mubr.bf16.mxu0 0
          %1536 = vmatmul.mubr.bf16.gmra.mrb[0].mxu0 %v1486
          %v1537 = vpop.f32.mrb[0].mxu0
          %v1538 = vadd.f32 %v1491, %v1537
          %v1539 = vpop.f32.mrb[0].mxu0
          %v1540 = vadd.f32 %v1495, %v1539
          %v1541 = vpop.f32.mrb[0].mxu0
          %v1542 = vadd.f32 %v1491, %v1541
          %v1543 = vpop.f32.mrb[0].mxu0
          %v1544 = vadd.f32 %v1495, %v1543
          %1545 = vdwg.mxu0
          %1546 = vmatprep.subr.bf16.mxu0 0
          %1547 = vmatpush1.bf16.msra.mxu0 %v702
          %1548 = vmatprep.subr.bf16.mxu0 0
          %1549 = vmatpush1.bf16.msra.mxu0 %v705
          %1550 = vmatprep.subr.bf16.mxu0 0
          %1551 = vmatpush1.bf16.msra.mxu0 %v708
          %1552 = vmatprep.subr.bf16.mxu0 0
          %1553 = vmatpush1.bf16.msra.mxu0 %v711
          %1554 = vmatprep.subr.bf16.mxu0 0
          %1555 = vmatpush1.bf16.msra.mxu0 %v714
          %1556 = vmatprep.subr.bf16.mxu0 0
          %1557 = vmatpush1.bf16.msra.mxu0 %v717
          %1558 = vmatprep.subr.bf16.mxu0 0
          %1559 = vmatpush1.bf16.msra.mxu0 %v720
          %1560 = vmatprep.subr.bf16.mxu0 0
          %1561 = vmatpush1.bf16.msra.mxu0 %v723
          %1562 = vmatprep.subr.bf16.mxu0 0
          %1563 = vmatpush1.bf16.msra.mxu0 0
          %1564 = vmatprep.subr.bf16.mxu0 0
          %1565 = vmatpush1.bf16.msra.mxu0 0
          %1566 = vmatprep.subr.bf16.mxu0 0
          %1567 = vmatpush1.bf16.msra.mxu0 0
          %1568 = vmatprep.subr.bf16.mxu0 0
          %1569 = vmatpush1.bf16.msra.mxu0 0
          %1570 = vmatprep.subr.bf16.mxu0 0
          %1571 = vmatpush1.bf16.msra.mxu0 0
          %1572 = vmatprep.subr.bf16.mxu0 0
          %1573 = vmatpush1.bf16.msra.mxu0 0
          %1574 = vmatprep.subr.bf16.mxu0 0
          %1575 = vmatpush1.bf16.msra.mxu0 0
          %1576 = vmatprep.subr.bf16.mxu0 0
          %1577 = vmatpush1.bf16.msra.mxu0 0
          %1578 = vmatprep.mubr.bf16.mxu0 0
          %1579 = vmatmul.mubr.bf16.gmra.mrb[0].mxu0 %v1486
          %v1580 = vpop.f32.mrb[0].mxu0
          %v1581 = vadd.f32 %v1499, %v1580
          %v1582 = vpop.f32.mrb[0].mxu0
          %v1583 = vpop.f32.mrb[0].mxu0
          %v1584 = vadd.f32 %v1499, %v1583
          %v1585 = vpop.f32.mrb[0].mxu0
          %1586 = vdwg.mxu0
          %v1587 = vunpack.c.l.bf16 %v1480
          %v1588 = vunpack.c.h.bf16 %v1480
          %v1589 = vadd.f32 %v1587, %v1538
          %v1590 = vadd.f32 %v1588, %v1542
          %v1591 = vxor.u32 %v1589, 2147483648
          %v1592 = vxor.u32 %v1590, 2147483648
          %v1593 = vmul.f32 %v1591, 1.442695
          %v1594 = vpow.pop %v1593
          %v1595 = vmul.f32 %v1592, 1.442695
          %v1596 = vpow.pop %v1595
          %v1597 = vadd.f32 %v1594, 1.0
          %v1598 = vadd.f32 %v1596, 1.0
          %v1599 = vrcp.pop %v1597
          %v1600 = vmul.f32 1.0, %v1599
          %v1601 = vrcp.pop %v1598
          %v1602 = vmul.f32 1.0, %v1601
          %v1603 = vunpack.c.l.bf16 %v1481
          %v1604 = vunpack.c.h.bf16 %v1481
          %v1605 = vadd.f32 %v1603, %v1540
          %v1606 = vadd.f32 %v1604, %v1544
          %v1607 = vxor.u32 %v1605, 2147483648
          %v1608 = vxor.u32 %v1606, 2147483648
          %v1609 = vmul.f32 %v1607, 1.442695
          %v1610 = vpow.pop %v1609
          %v1611 = vmul.f32 %v1608, 1.442695
          %v1612 = vpow.pop %v1611
          %v1613 = vadd.f32 %v1610, 1.0
          %v1614 = vadd.f32 %v1612, 1.0
          %v1615 = vrcp.pop %v1613
          %v1616 = vmul.f32 1.0, %v1615
          %v1617 = vrcp.pop %v1614
          %v1618 = vmul.f32 1.0, %v1617
          %v1619 = vmul.f32 %v1600, %v1581
          %v1620 = vmul.f32 %v1602, %v1584
          %v1621 = vunpack.c.l.bf16 %v1482
          %v1622 = vunpack.c.h.bf16 %v1482
          %v1623 = vadd.f32 %v1621, %v1619
          %v1624 = vadd.f32 %v1622, %v1620
          %v1625 = vtanh.pop %v1623
          %v1626 = vtanh.pop %v1624
          %v1627 = vsub.f32 1.0, %v1616
          %v1628 = vsub.f32 1.0, %v1618
          %v1629 = vmul.f32 %v1627, %v1625
          %v1630 = vmul.f32 %v1628, %v1626
          %v1631 = vmul.f32 %v1616, %v1475
          %v1632 = vmul.f32 %v1618, %v1476
          %v1633 = vadd.f32 %v1629, %v1631
          %v1634 = vadd.f32 %v1630, %v1632
          %1636 = vset.pattern.permute.xlu0 0
          %1637 = vperm.xlu0 %1636, %v1484
          %v1638 = vpop.permute.xlu0 %1637
          %1641 = vset.pattern.permute.xlu0 0
          %1642 = vperm.xlu0 %1641, %v1485
          %v1643 = vpop.permute.xlu0 %1642
          %v1645 = vmul.f32 %v1638, %v1633
          %v1646 = vmul.f32 %v1643, %v1634
          %v1647 = vpack.c.bf16 %v1646, %v1645
          %v1649 = vunpack.c.l.b16 %v1647
          %v1650 = vunpack.c.h.b16 %v1647
          %v1651 = vpack.c.b16 %v1649, %v1649
          %v1652 = vpack.c.b16 %v1650, %v1650
          %s1655 = scalar_lea.vmem %s328, 24 [#allocation7]
          %1656 = vst [vmem:[%s1655] sm:$0xf] %v1651
          %1657 = vst [vmem:[%s1655 + $0x4] sm:$0xf] %v1652
          %v1658 = vsub.f32 1.0, %v1484
          %v1659 = vsub.f32 1.0, %v1485
          %1661 = vset.pattern.permute.xlu0 0
          %1662 = vperm.xlu0 %1661, %v1658
          %v1663 = vpop.permute.xlu0 %1662
          %1666 = vset.pattern.permute.xlu0 0
          %1667 = vperm.xlu0 %1666, %v1659
          %v1668 = vpop.permute.xlu0 %1667
          %v1670 = vmul.f32 %v1663, %v1475
          %v1671 = vmul.f32 %v1668, %v1476
          %v1672 = vadd.f32 %v1645, %v1670
          %v1673 = vadd.f32 %v1646, %v1671
          %s1674 = smul.u32 2, 3
          %s1675 = smul.addr %s1674, 8
          %s1676 = scalar_lea.vmem [#allocation4], %s1675
          %v1677 = vld [vmem:[%s1676] sm:$0xff]
          %v1678 = vld [vmem:[%s1676 + $0x8] sm:$0xff]
          %v1679 = vld [vmem:[%s1676 + $0x10] sm:$0xff]
          %s1680 = scalar_lea.vmem %s358, 32
          %v1681 = vld [vmem:[%s1680] sm:$0xff]
          %v1682 = vld [vmem:[%s1680 + $0x8] sm:$0xff]
          %v1683 = vpack.c.bf16 %v1673, %v1672
          %1684 = vmatprep.subr.bf16.mxu0 %v701
          %1685 = vmatpush1.bf16.msra.mxu0 %v700
          %1686 = vmatprep.subr.bf16.mxu0 %v704
          %1687 = vmatpush1.bf16.msra.mxu0 %v703
          %1688 = vmatprep.subr.bf16.mxu0 %v707
          %1689 = vmatpush1.bf16.msra.mxu0 %v706
          %1690 = vmatprep.subr.bf16.mxu0 %v710
          %1691 = vmatpush1.bf16.msra.mxu0 %v709
          %1692 = vmatprep.subr.bf16.mxu0 %v713
          %1693 = vmatpush1.bf16.msra.mxu0 %v712
          %1694 = vmatprep.subr.bf16.mxu0 %v716
          %1695 = vmatpush1.bf16.msra.mxu0 %v715
          %1696 = vmatprep.subr.bf16.mxu0 %v719
          %1697 = vmatpush1.bf16.msra.mxu0 %v718
          %1698 = vmatprep.subr.bf16.mxu0 %v722
          %1699 = vmatpush1.bf16.msra.mxu0 %v721
          %1700 = vmatprep.subr.bf16.mxu0 0
          %1701 = vmatpush1.bf16.msra.mxu0 0
          %1702 = vmatprep.subr.bf16.mxu0 0
          %1703 = vmatpush1.bf16.msra.mxu0 0
          %1704 = vmatprep.subr.bf16.mxu0 0
          %1705 = vmatpush1.bf16.msra.mxu0 0
          %1706 = vmatprep.subr.bf16.mxu0 0
          %1707 = vmatpush1.bf16.msra.mxu0 0
          %1708 = vmatprep.subr.bf16.mxu0 0
          %1709 = vmatpush1.bf16.msra.mxu0 0
          %1710 = vmatprep.subr.bf16.mxu0 0
          %1711 = vmatpush1.bf16.msra.mxu0 0
          %1712 = vmatprep.subr.bf16.mxu0 0
          %1713 = vmatpush1.bf16.msra.mxu0 0
          %1714 = vmatprep.subr.bf16.mxu0 0
          %1715 = vmatpush1.bf16.msra.mxu0 0
          %1716 = vmatprep.mubr.bf16.mxu0 0
          %1717 = vmatmul.mubr.bf16.gmra.mrb[0].mxu0 %v1683
          %v1718 = vpop.f32.mrb[0].mxu0
          %v1719 = vadd.f32 %v1491, %v1718
          %v1720 = vpop.f32.mrb[0].mxu0
          %v1721 = vadd.f32 %v1495, %v1720
          %v1722 = vpop.f32.mrb[0].mxu0
          %v1723 = vadd.f32 %v1491, %v1722
          %v1724 = vpop.f32.mrb[0].mxu0
          %v1725 = vadd.f32 %v1495, %v1724
          %1726 = vdwg.mxu0
          %1727 = vmatprep.subr.bf16.mxu0 0
          %1728 = vmatpush1.bf16.msra.mxu0 %v702
          %1729 = vmatprep.subr.bf16.mxu0 0
          %1730 = vmatpush1.bf16.msra.mxu0 %v705
          %1731 = vmatprep.subr.bf16.mxu0 0
          %1732 = vmatpush1.bf16.msra.mxu0 %v708
          %1733 = vmatprep.subr.bf16.mxu0 0
          %1734 = vmatpush1.bf16.msra.mxu0 %v711
          %1735 = vmatprep.subr.bf16.mxu0 0
          %1736 = vmatpush1.bf16.msra.mxu0 %v714
          %1737 = vmatprep.subr.bf16.mxu0 0
          %1738 = vmatpush1.bf16.msra.mxu0 %v717
          %1739 = vmatprep.subr.bf16.mxu0 0
          %1740 = vmatpush1.bf16.msra.mxu0 %v720
          %1741 = vmatprep.subr.bf16.mxu0 0
          %1742 = vmatpush1.bf16.msra.mxu0 %v723
          %1743 = vmatprep.subr.bf16.mxu0 0
          %1744 = vmatpush1.bf16.msra.mxu0 0
          %1745 = vmatprep.subr.bf16.mxu0 0
          %1746 = vmatpush1.bf16.msra.mxu0 0
          %1747 = vmatprep.subr.bf16.mxu0 0
          %1748 = vmatpush1.bf16.msra.mxu0 0
          %1749 = vmatprep.subr.bf16.mxu0 0
          %1750 = vmatpush1.bf16.msra.mxu0 0
          %1751 = vmatprep.subr.bf16.mxu0 0
          %1752 = vmatpush1.bf16.msra.mxu0 0
          %1753 = vmatprep.subr.bf16.mxu0 0
          %1754 = vmatpush1.bf16.msra.mxu0 0
          %1755 = vmatprep.subr.bf16.mxu0 0
          %1756 = vmatpush1.bf16.msra.mxu0 0
          %1757 = vmatprep.subr.bf16.mxu0 0
          %1758 = vmatpush1.bf16.msra.mxu0 0
          %1759 = vmatprep.mubr.bf16.mxu0 0
          %1760 = vmatmul.mubr.bf16.gmra.mrb[0].mxu0 %v1683
          %v1761 = vpop.f32.mrb[0].mxu0
          %v1762 = vadd.f32 %v1499, %v1761
          %v1763 = vpop.f32.mrb[0].mxu0
          %v1764 = vpop.f32.mrb[0].mxu0
          %v1765 = vadd.f32 %v1499, %v1764
          %v1766 = vpop.f32.mrb[0].mxu0
          %1767 = vdwg.mxu0
          %v1768 = vunpack.c.l.bf16 %v1677
          %v1769 = vunpack.c.h.bf16 %v1677
          %v1770 = vadd.f32 %v1768, %v1719
          %v1771 = vadd.f32 %v1769, %v1723
          %v1772 = vxor.u32 %v1770, 2147483648
          %v1773 = vxor.u32 %v1771, 2147483648
          %v1774 = vmul.f32 %v1772, 1.442695
          %v1775 = vpow.pop %v1774
          %v1776 = vmul.f32 %v1773, 1.442695
          %v1777 = vpow.pop %v1776
          %v1778 = vadd.f32 %v1775, 1.0
          %v1779 = vadd.f32 %v1777, 1.0
          %v1780 = vrcp.pop %v1778
          %v1781 = vmul.f32 1.0, %v1780
          %v1782 = vrcp.pop %v1779
          %v1783 = vmul.f32 1.0, %v1782
          %v1784 = vunpack.c.l.bf16 %v1678
          %v1785 = vunpack.c.h.bf16 %v1678
          %v1786 = vadd.f32 %v1784, %v1721
          %v1787 = vadd.f32 %v1785, %v1725
          %v1788 = vxor.u32 %v1786, 2147483648
          %v1789 = vxor.u32 %v1787, 2147483648
          %v1790 = vmul.f32 %v1788, 1.442695
          %v1791 = vpow.pop %v1790
          %v1792 = vmul.f32 %v1789, 1.442695
          %v1793 = vpow.pop %v1792
          %v1794 = vadd.f32 %v1791, 1.0
          %v1795 = vadd.f32 %v1793, 1.0
          %v1796 = vrcp.pop %v1794
          %v1797 = vmul.f32 1.0, %v1796
          %v1798 = vrcp.pop %v1795
          %v1799 = vmul.f32 1.0, %v1798
          %v1800 = vmul.f32 %v1781, %v1762
          %v1801 = vmul.f32 %v1783, %v1765
          %v1802 = vunpack.c.l.bf16 %v1679
          %v1803 = vunpack.c.h.bf16 %v1679
          %v1804 = vadd.f32 %v1802, %v1800
          %v1805 = vadd.f32 %v1803, %v1801
          %v1806 = vtanh.pop %v1804
          %v1807 = vtanh.pop %v1805
          %v1808 = vsub.f32 1.0, %v1797
          %v1809 = vsub.f32 1.0, %v1799
          %v1810 = vmul.f32 %v1808, %v1806
          %v1811 = vmul.f32 %v1809, %v1807
          %v1812 = vmul.f32 %v1797, %v1672
          %v1813 = vmul.f32 %v1799, %v1673
          %v1814 = vadd.f32 %v1810, %v1812
          %v1815 = vadd.f32 %v1811, %v1813
          %1817 = vset.pattern.permute.xlu0 0
          %1818 = vperm.xlu0 %1817, %v1681
          %v1819 = vpop.permute.xlu0 %1818
          %1822 = vset.pattern.permute.xlu0 0
          %1823 = vperm.xlu0 %1822, %v1682
          %v1824 = vpop.permute.xlu0 %1823
          %v1826 = vmul.f32 %v1819, %v1814
          %v1827 = vmul.f32 %v1824, %v1815
          %v1828 = vpack.c.bf16 %v1827, %v1826
          %v1830 = vunpack.c.l.b16 %v1828
          %v1831 = vunpack.c.h.b16 %v1828
          %v1832 = vpack.c.b16 %v1830, %v1830
          %v1833 = vpack.c.b16 %v1831, %v1831
          %s1836 = scalar_lea.vmem %s328, 16 [#allocation7]
          %1837 = vst [vmem:[%s1836] sm:$0xf] %v1832
          %1838 = vst [vmem:[%s1836 + $0x4] sm:$0xf] %v1833
          %v1839 = vsub.f32 1.0, %v1681
          %v1840 = vsub.f32 1.0, %v1682
          %1842 = vset.pattern.permute.xlu0 0
          %1843 = vperm.xlu0 %1842, %v1839
          %v1844 = vpop.permute.xlu0 %1843
          %1847 = vset.pattern.permute.xlu0 0
          %1848 = vperm.xlu0 %1847, %v1840
          %v1849 = vpop.permute.xlu0 %1848
          %v1851 = vmul.f32 %v1844, %v1672
          %v1852 = vmul.f32 %v1849, %v1673
          %v1853 = vadd.f32 %v1826, %v1851
          %v1854 = vadd.f32 %v1827, %v1852
          %s1855 = smul.u32 1, 3
          %s1856 = smul.addr %s1855, 8
          %s1857 = scalar_lea.vmem [#allocation4], %s1856
          %v1858 = vld [vmem:[%s1857] sm:$0xff]
          %v1859 = vld [vmem:[%s1857 + $0x8] sm:$0xff]
          %v1860 = vld [vmem:[%s1857 + $0x10] sm:$0xff]
          %s1861 = scalar_lea.vmem %s358, 16
          %v1862 = vld [vmem:[%s1861] sm:$0xff]
          %v1863 = vld [vmem:[%s1861 + $0x8] sm:$0xff]
          %v1864 = vpack.c.bf16 %v1854, %v1853
          %1865 = vmatprep.subr.bf16.mxu0 %v701
          %1866 = vmatpush1.bf16.msra.mxu0 %v700
          %1867 = vmatprep.subr.bf16.mxu0 %v704
          %1868 = vmatpush1.bf16.msra.mxu0 %v703
          %1869 = vmatprep.subr.bf16.mxu0 %v707
          %1870 = vmatpush1.bf16.msra.mxu0 %v706
          %1871 = vmatprep.subr.bf16.mxu0 %v710
          %1872 = vmatpush1.bf16.msra.mxu0 %v709
          %1873 = vmatprep.subr.bf16.mxu0 %v713
          %1874 = vmatpush1.bf16.msra.mxu0 %v712
          %1875 = vmatprep.subr.bf16.mxu0 %v716
          %1876 = vmatpush1.bf16.msra.mxu0 %v715
          %1877 = vmatprep.subr.bf16.mxu0 %v719
          %1878 = vmatpush1.bf16.msra.mxu0 %v718
          %1879 = vmatprep.subr.bf16.mxu0 %v722
          %1880 = vmatpush1.bf16.msra.mxu0 %v721
          %1881 = vmatprep.subr.bf16.mxu0 0
          %1882 = vmatpush1.bf16.msra.mxu0 0
          %1883 = vmatprep.subr.bf16.mxu0 0
          %1884 = vmatpush1.bf16.msra.mxu0 0
          %1885 = vmatprep.subr.bf16.mxu0 0
          %1886 = vmatpush1.bf16.msra.mxu0 0
          %1887 = vmatprep.subr.bf16.mxu0 0
          %1888 = vmatpush1.bf16.msra.mxu0 0
          %1889 = vmatprep.subr.bf16.mxu0 0
          %1890 = vmatpush1.bf16.msra.mxu0 0
          %1891 = vmatprep.subr.bf16.mxu0 0
          %1892 = vmatpush1.bf16.msra.mxu0 0
          %1893 = vmatprep.subr.bf16.mxu0 0
          %1894 = vmatpush1.bf16.msra.mxu0 0
          %1895 = vmatprep.subr.bf16.mxu0 0
          %1896 = vmatpush1.bf16.msra.mxu0 0
          %1897 = vmatprep.mubr.bf16.mxu0 0
          %1898 = vmatmul.mubr.bf16.gmra.mrb[0].mxu0 %v1864
          %v1899 = vpop.f32.mrb[0].mxu0
          %v1900 = vadd.f32 %v1491, %v1899
          %v1901 = vpop.f32.mrb[0].mxu0
          %v1902 = vadd.f32 %v1495, %v1901
          %v1903 = vpop.f32.mrb[0].mxu0
          %v1904 = vadd.f32 %v1491, %v1903
          %v1905 = vpop.f32.mrb[0].mxu0
          %v1906 = vadd.f32 %v1495, %v1905
          %1907 = vdwg.mxu0
          %1908 = vmatprep.subr.bf16.mxu0 0
          %1909 = vmatpush1.bf16.msra.mxu0 %v702
          %1910 = vmatprep.subr.bf16.mxu0 0
          %1911 = vmatpush1.bf16.msra.mxu0 %v705
          %1912 = vmatprep.subr.bf16.mxu0 0
          %1913 = vmatpush1.bf16.msra.mxu0 %v708
          %1914 = vmatprep.subr.bf16.mxu0 0
          %1915 = vmatpush1.bf16.msra.mxu0 %v711
          %1916 = vmatprep.subr.bf16.mxu0 0
          %1917 = vmatpush1.bf16.msra.mxu0 %v714
          %1918 = vmatprep.subr.bf16.mxu0 0
          %1919 = vmatpush1.bf16.msra.mxu0 %v717
          %1920 = vmatprep.subr.bf16.mxu0 0
          %1921 = vmatpush1.bf16.msra.mxu0 %v720
          %1922 = vmatprep.subr.bf16.mxu0 0
          %1923 = vmatpush1.bf16.msra.mxu0 %v723
          %1924 = vmatprep.subr.bf16.mxu0 0
          %1925 = vmatpush1.bf16.msra.mxu0 0
          %1926 = vmatprep.subr.bf16.mxu0 0
          %1927 = vmatpush1.bf16.msra.mxu0 0
          %1928 = vmatprep.subr.bf16.mxu0 0
          %1929 = vmatpush1.bf16.msra.mxu0 0
          %1930 = vmatprep.subr.bf16.mxu0 0
          %1931 = vmatpush1.bf16.msra.mxu0 0
          %1932 = vmatprep.subr.bf16.mxu0 0
          %1933 = vmatpush1.bf16.msra.mxu0 0
          %1934 = vmatprep.subr.bf16.mxu0 0
          %1935 = vmatpush1.bf16.msra.mxu0 0
          %1936 = vmatprep.subr.bf16.mxu0 0
          %1937 = vmatpush1.bf16.msra.mxu0 0
          %1938 = vmatprep.subr.bf16.mxu0 0
          %1939 = vmatpush1.bf16.msra.mxu0 0
          %1940 = vmatprep.mubr.bf16.mxu0 0
          %1941 = vmatmul.mubr.bf16.gmra.mrb[0].mxu0 %v1864
          %v1942 = vpop.f32.mrb[0].mxu0
          %v1943 = vadd.f32 %v1499, %v1942
          %v1944 = vpop.f32.mrb[0].mxu0
          %v1945 = vpop.f32.mrb[0].mxu0
          %v1946 = vadd.f32 %v1499, %v1945
          %v1947 = vpop.f32.mrb[0].mxu0
          %1948 = vdwg.mxu0
          %v1949 = vunpack.c.l.bf16 %v1858
          %v1950 = vunpack.c.h.bf16 %v1858
          %v1951 = vadd.f32 %v1949, %v1900
          %v1952 = vadd.f32 %v1950, %v1904
          %v1953 = vxor.u32 %v1951, 2147483648
          %v1954 = vxor.u32 %v1952, 2147483648
          %v1955 = vmul.f32 %v1953, 1.442695
          %v1956 = vpow.pop %v1955
          %v1957 = vmul.f32 %v1954, 1.442695
          %v1958 = vpow.pop %v1957
          %v1959 = vadd.f32 %v1956, 1.0
          %v1960 = vadd.f32 %v1958, 1.0
          %v1961 = vrcp.pop %v1959
          %v1962 = vmul.f32 1.0, %v1961
          %v1963 = vrcp.pop %v1960
          %v1964 = vmul.f32 1.0, %v1963
          %v1965 = vunpack.c.l.bf16 %v1859
          %v1966 = vunpack.c.h.bf16 %v1859
          %v1967 = vadd.f32 %v1965, %v1902
          %v1968 = vadd.f32 %v1966, %v1906
          %v1969 = vxor.u32 %v1967, 2147483648
          %v1970 = vxor.u32 %v1968, 2147483648
          %v1971 = vmul.f32 %v1969, 1.442695
          %v1972 = vpow.pop %v1971
          %v1973 = vmul.f32 %v1970, 1.442695
          %v1974 = vpow.pop %v1973
          %v1975 = vadd.f32 %v1972, 1.0
          %v1976 = vadd.f32 %v1974, 1.0
          %v1977 = vrcp.pop %v1975
          %v1978 = vmul.f32 1.0, %v1977
          %v1979 = vrcp.pop %v1976
          %v1980 = vmul.f32 1.0, %v1979
          %v1981 = vmul.f32 %v1962, %v1943
          %v1982 = vmul.f32 %v1964, %v1946
          %v1983 = vunpack.c.l.bf16 %v1860
          %v1984 = vunpack.c.h.bf16 %v1860
          %v1985 = vadd.f32 %v1983, %v1981
          %v1986 = vadd.f32 %v1984, %v1982
          %v1987 = vtanh.pop %v1985
          %v1988 = vtanh.pop %v1986
          %v1989 = vsub.f32 1.0, %v1978
          %v1990 = vsub.f32 1.0, %v1980
          %v1991 = vmul.f32 %v1989, %v1987
          %v1992 = vmul.f32 %v1990, %v1988
          %v1993 = vmul.f32 %v1978, %v1853
          %v1994 = vmul.f32 %v1980, %v1854
          %v1995 = vadd.f32 %v1991, %v1993
          %v1996 = vadd.f32 %v1992, %v1994
          %1998 = vset.pattern.permute.xlu0 0
          %1999 = vperm.xlu0 %1998, %v1862
          %v2000 = vpop.permute.xlu0 %1999
          %2003 = vset.pattern.permute.xlu0 0
          %2004 = vperm.xlu0 %2003, %v1863
          %v2005 = vpop.permute.xlu0 %2004
          %v2007 = vmul.f32 %v2000, %v1995
          %v2008 = vmul.f32 %v2005, %v1996
          %v2009 = vpack.c.bf16 %v2008, %v2007
          %v2011 = vunpack.c.l.b16 %v2009
          %v2012 = vunpack.c.h.b16 %v2009
          %v2013 = vpack.c.b16 %v2011, %v2011
          %v2014 = vpack.c.b16 %v2012, %v2012
          %s2017 = scalar_lea.vmem %s328, 8 [#allocation7]
          %2018 = vst [vmem:[%s2017] sm:$0xf] %v2013
          %2019 = vst [vmem:[%s2017 + $0x4] sm:$0xf] %v2014
          %v2020 = vsub.f32 1.0, %v1862
          %v2021 = vsub.f32 1.0, %v1863
          %2023 = vset.pattern.permute.xlu0 0
          %2024 = vperm.xlu0 %2023, %v2020
          %v2025 = vpop.permute.xlu0 %2024
          %2028 = vset.pattern.permute.xlu0 0
          %2029 = vperm.xlu0 %2028, %v2021
          %v2030 = vpop.permute.xlu0 %2029
          %v2032 = vmul.f32 %v2025, %v1853
          %v2033 = vmul.f32 %v2030, %v1854
          %v2034 = vadd.f32 %v2007, %v2032
          %v2035 = vadd.f32 %v2008, %v2033
          %s2036 = smul.u32 0, 3
          %s2037 = smul.addr %s2036, 8
          %s2038 = scalar_lea.vmem [#allocation4], %s2037
          %v2039 = vld [vmem:[%s2038] sm:$0xff]
          %v2040 = vld [vmem:[%s2038 + $0x8] sm:$0xff]
          %v2041 = vld [vmem:[%s2038 + $0x10] sm:$0xff]
          %v2042 = vld [vmem:[%s358] sm:$0xff]
          %v2043 = vld [vmem:[%s358 + $0x8] sm:$0xff]
          %v2044 = vpack.c.bf16 %v2035, %v2034
          %2045 = vmatprep.subr.bf16.mxu0 %v701
          %2046 = vmatpush1.bf16.msra.mxu0 %v700
          %2047 = vmatprep.subr.bf16.mxu0 %v704
          %2048 = vmatpush1.bf16.msra.mxu0 %v703
          %2049 = vmatprep.subr.bf16.mxu0 %v707
          %2050 = vmatpush1.bf16.msra.mxu0 %v706
          %2051 = vmatprep.subr.bf16.mxu0 %v710
          %2052 = vmatpush1.bf16.msra.mxu0 %v709
          %2053 = vmatprep.subr.bf16.mxu0 %v713
          %2054 = vmatpush1.bf16.msra.mxu0 %v712
          %2055 = vmatprep.subr.bf16.mxu0 %v716
          %2056 = vmatpush1.bf16.msra.mxu0 %v715
          %2057 = vmatprep.subr.bf16.mxu0 %v719
          %2058 = vmatpush1.bf16.msra.mxu0 %v718
          %2059 = vmatprep.subr.bf16.mxu0 %v722
          %2060 = vmatpush1.bf16.msra.mxu0 %v721
          %2061 = vmatprep.subr.bf16.mxu0 0
          %2062 = vmatpush1.bf16.msra.mxu0 0
          %2063 = vmatprep.subr.bf16.mxu0 0
          %2064 = vmatpush1.bf16.msra.mxu0 0
          %2065 = vmatprep.subr.bf16.mxu0 0
          %2066 = vmatpush1.bf16.msra.mxu0 0
          %2067 = vmatprep.subr.bf16.mxu0 0
          %2068 = vmatpush1.bf16.msra.mxu0 0
          %2069 = vmatprep.subr.bf16.mxu0 0
          %2070 = vmatpush1.bf16.msra.mxu0 0
          %2071 = vmatprep.subr.bf16.mxu0 0
          %2072 = vmatpush1.bf16.msra.mxu0 0
          %2073 = vmatprep.subr.bf16.mxu0 0
          %2074 = vmatpush1.bf16.msra.mxu0 0
          %2075 = vmatprep.subr.bf16.mxu0 0
          %2076 = vmatpush1.bf16.msra.mxu0 0
          %2077 = vmatprep.mubr.bf16.mxu0 0
          %2078 = vmatmul.mubr.bf16.gmra.mrb[0].mxu0 %v2044
          %v2079 = vpop.f32.mrb[0].mxu0
          %v2080 = vadd.f32 %v1491, %v2079
          %v2081 = vpop.f32.mrb[0].mxu0
          %v2082 = vadd.f32 %v1495, %v2081
          %v2083 = vpop.f32.mrb[0].mxu0
          %v2084 = vadd.f32 %v1491, %v2083
          %v2085 = vpop.f32.mrb[0].mxu0
          %v2086 = vadd.f32 %v1495, %v2085
          %2087 = vdwg.mxu0
          %2088 = vmatprep.subr.bf16.mxu0 0
          %2089 = vmatpush1.bf16.msra.mxu0 %v702
          %2090 = vmatprep.subr.bf16.mxu0 0
          %2091 = vmatpush1.bf16.msra.mxu0 %v705
          %2092 = vmatprep.subr.bf16.mxu0 0
          %2093 = vmatpush1.bf16.msra.mxu0 %v708
          %2094 = vmatprep.subr.bf16.mxu0 0
          %2095 = vmatpush1.bf16.msra.mxu0 %v711
          %2096 = vmatprep.subr.bf16.mxu0 0
          %2097 = vmatpush1.bf16.msra.mxu0 %v714
          %2098 = vmatprep.subr.bf16.mxu0 0
          %2099 = vmatpush1.bf16.msra.mxu0 %v717
          %2100 = vmatprep.subr.bf16.mxu0 0
          %2101 = vmatpush1.bf16.msra.mxu0 %v720
          %2102 = vmatprep.subr.bf16.mxu0 0
          %2103 = vmatpush1.bf16.msra.mxu0 %v723
          %2104 = vmatprep.subr.bf16.mxu0 0
          %2105 = vmatpush1.bf16.msra.mxu0 0
          %2106 = vmatprep.subr.bf16.mxu0 0
          %2107 = vmatpush1.bf16.msra.mxu0 0
          %2108 = vmatprep.subr.bf16.mxu0 0
          %2109 = vmatpush1.bf16.msra.mxu0 0
          %2110 = vmatprep.subr.bf16.mxu0 0
          %2111 = vmatpush1.bf16.msra.mxu0 0
          %2112 = vmatprep.subr.bf16.mxu0 0
          %2113 = vmatpush1.bf16.msra.mxu0 0
          %2114 = vmatprep.subr.bf16.mxu0 0
          %2115 = vmatpush1.bf16.msra.mxu0 0
          %2116 = vmatprep.subr.bf16.mxu0 0
          %2117 = vmatpush1.bf16.msra.mxu0 0
          %2118 = vmatprep.subr.bf16.mxu0 0
          %2119 = vmatpush1.bf16.msra.mxu0 0
          %2120 = vmatprep.mubr.bf16.mxu0 0
          %2121 = vmatmul.mubr.bf16.gmra.mrb[0].mxu0 %v2044
          %v2122 = vpop.f32.mrb[0].mxu0
          %v2123 = vadd.f32 %v1499, %v2122
          %v2124 = vpop.f32.mrb[0].mxu0
          %v2125 = vpop.f32.mrb[0].mxu0
          %v2126 = vadd.f32 %v1499, %v2125
          %v2127 = vpop.f32.mrb[0].mxu0
          %2128 = vdwg.mxu0
          %v2129 = vunpack.c.l.bf16 %v2039
          %v2130 = vunpack.c.h.bf16 %v2039
          %v2131 = vadd.f32 %v2129, %v2080
          %v2132 = vadd.f32 %v2130, %v2084
          %v2133 = vxor.u32 %v2131, 2147483648
          %v2134 = vxor.u32 %v2132, 2147483648
          %v2135 = vmul.f32 %v2133, 1.442695
          %v2136 = vpow.pop %v2135
          %v2137 = vmul.f32 %v2134, 1.442695
          %v2138 = vpow.pop %v2137
          %v2139 = vadd.f32 %v2136, 1.0
          %v2140 = vadd.f32 %v2138, 1.0
          %v2141 = vrcp.pop %v2139
          %v2142 = vmul.f32 1.0, %v2141
          %v2143 = vrcp.pop %v2140
          %v2144 = vmul.f32 1.0, %v2143
          %v2145 = vunpack.c.l.bf16 %v2040
          %v2146 = vunpack.c.h.bf16 %v2040
          %v2147 = vadd.f32 %v2145, %v2082
          %v2148 = vadd.f32 %v2146, %v2086
          %v2149 = vxor.u32 %v2147, 2147483648
          %v2150 = vxor.u32 %v2148, 2147483648
          %v2151 = vmul.f32 %v2149, 1.442695
          %v2152 = vpow.pop %v2151
          %v2153 = vmul.f32 %v2150, 1.442695
          %v2154 = vpow.pop %v2153
          %v2155 = vadd.f32 %v2152, 1.0
          %v2156 = vadd.f32 %v2154, 1.0
          %v2157 = vrcp.pop %v2155
          %v2158 = vmul.f32 1.0, %v2157
          %v2159 = vrcp.pop %v2156
          %v2160 = vmul.f32 1.0, %v2159
          %v2161 = vmul.f32 %v2142, %v2123
          %v2162 = vmul.f32 %v2144, %v2126
          %v2163 = vunpack.c.l.bf16 %v2041
          %v2164 = vunpack.c.h.bf16 %v2041
          %v2165 = vadd.f32 %v2163, %v2161
          %v2166 = vadd.f32 %v2164, %v2162
          %v2167 = vtanh.pop %v2165
          %v2168 = vtanh.pop %v2166
          %v2169 = vsub.f32 1.0, %v2158
          %v2170 = vsub.f32 1.0, %v2160
          %v2171 = vmul.f32 %v2169, %v2167
          %v2172 = vmul.f32 %v2170, %v2168
          %v2173 = vmul.f32 %v2158, %v2034
          %v2174 = vmul.f32 %v2160, %v2035
          %v2175 = vadd.f32 %v2171, %v2173
          %v2176 = vadd.f32 %v2172, %v2174
          %2178 = vset.pattern.permute.xlu0 0
          %2179 = vperm.xlu0 %2178, %v2042
          %v2180 = vpop.permute.xlu0 %2179
          %2183 = vset.pattern.permute.xlu0 0
          %2184 = vperm.xlu0 %2183, %v2043
          %v2185 = vpop.permute.xlu0 %2184
          %v2187 = vmul.f32 %v2180, %v2175
          %v2188 = vmul.f32 %v2185, %v2176
          %v2189 = vpack.c.bf16 %v2188, %v2187
          %v2191 = vunpack.c.l.b16 %v2189
          %v2192 = vunpack.c.h.b16 %v2189
          %v2193 = vpack.c.b16 %v2191, %v2191
          %v2194 = vpack.c.b16 %v2192, %v2192
          %2197 = vst [vmem:[%s328] sm:$0xf] %v2193
          %2198 = vst [vmem:[%s328 + $0x4] sm:$0xf] %v2194
          %v2199 = vsub.f32 1.0, %v2042
          %v2200 = vsub.f32 1.0, %v2043
          %2202 = vset.pattern.permute.xlu0 0
          %2203 = vperm.xlu0 %2202, %v2199
          %v2204 = vpop.permute.xlu0 %2203
          %2207 = vset.pattern.permute.xlu0 0
          %2208 = vperm.xlu0 %2207, %v2200
          %v2209 = vpop.permute.xlu0 %2208
          %v2211 = vmul.f32 %v2204, %v2034
          %v2212 = vmul.f32 %v2209, %v2035
          %v2213 = vadd.f32 %v2187, %v2211
          %v2214 = vadd.f32 %v2188, %v2212
          %2215 = vst [vmem:[#allocation5] sm:$0xff] %v2213
          %2216 = vst [vmem:[#allocation5 + $0x8] sm:$0xff] %v2214
        $region48: #{tpu_custom_call.1} parent=35 // pred_fallthru
          _
        %p2217 = scmp.eq.s32.totalorder %s30, 1
        // Predicated region
        $region49: #{tpu_custom_call.1} parent=35 // pred_check
          %p2218 = pneg %p2217
        $region50: #{tpu_custom_call.1} parent=35 // pred_check_branch
          %2220 = sbr.rel (%p2218) target = $region52
        $region51: #{tpu_custom_call.1} parent=35 // pred_region
          %v2221 = vld [vmem:[#allocation5] sm:$0xff]
          %v2222 = vld [vmem:[#allocation5 + $0x8] sm:$0xff]
          %2223 = vst [vmem:[%s335] sm:$0xff] %v2221
          %2224 = vst [vmem:[%s335 + $0x8] sm:$0xff] %v2222
        $region52: #{tpu_custom_call.1} parent=35 // pred_fallthru
          _
        %s2225 = sand.u32 %s175, 1
        %s2226 = scalar_lea.sflag [#allocation8], %s2225
        %s2227 = sand.u32 %s175, 1
        %s2228 = smul.addr %s2227, 32
        %s2229 = scalar_lea.vmem [#allocation7], %s2228
        %s2230 = sand.u32 %s201, 1
        %s2231 = scalar_lea.sflag [#allocation10], %s2230
        %s2232 = sand.u32 %s201, 1
        %s2233 = smul.addr %s2232, 16
        %s2234 = scalar_lea.vmem [#allocation9], %s2233
        // Predicated region
        $region53: #{tpu_custom_call.1} parent=35 // pred_check
          %p2235 = pneg %p185
        $region54: #{tpu_custom_call.1} parent=35 // pred_check_branch
          %2237 = sbr.rel (%p2235) target = $region56
        $region55: #{tpu_custom_call.1} parent=35 // pred_region
          %s2238 = smul.u32 %s30, 2
          %s2239 = ssub.s32 1, %s2238
          %s2240 = smul.u32 %s29, %s2239
          %s2241 = sadd.s32 %s30, %s2240
          %s2242 = smul.u32 8, %s2241
          %s2244 = ssub.s32 512, 512
          %2245 = vsyncadd %s2226, %s2244
          %s2246 = smul.addr %s2242, 2
          %s2247 = sadd.s32 %s29, %s2246
          %s2248 = smul.addr %s2247, 64
          %s2249 = scalar_lea.hbm %s6, %s2248
          %s2250 = sshll.u32 %s2229, 4
          %s2251 = int_to_ptr.vmem [resolvable:$true] %s2250
          %2256 = dma.vmem_to_hbm [thread:$0]  %s2251, 512, %s2249, %s2226, 64, 128, 4
        $region56: #{tpu_custom_call.1} parent=35 // pred_fallthru
          _
        // Predicated region
        $region57: #{tpu_custom_call.1} parent=35 // pred_check
          %p2257 = pneg %p211
        $region58: #{tpu_custom_call.1} parent=35 // pred_check_branch
          %2259 = sbr.rel (%p2257) target = $region60
        $region59: #{tpu_custom_call.1} parent=35 // pred_region
          %s2261 = ssub.s32 256, 256
          %2262 = vsyncadd %s2231, %s2261
          %s2263 = smul.addr %s29, 2
          %s2264 = smul.addr %s2263, 128
          %s2265 = scalar_lea.hbm %s7, %s2264
          %s2266 = sshll.u32 %s2234, 4
          %s2267 = int_to_ptr.vmem [resolvable:$true] %s2266
          %2272 = dma.vmem_to_hbm [thread:$0]  %s2267, 256, %s2265, %s2231, 128, 128, 8
        $region60: #{tpu_custom_call.1} parent=35 // pred_fallthru
          _
      $region36: #{tpu_custom_call.1} parent=5 // pred_fallthru
        _
      %p2273 = scmp.le.s32.totalorder 2, %s20
      // Predicated region
      $region61: #{tpu_custom_call.1} parent=5 // pred_check
        %p2274 = pneg %p2273
      $region62: #{tpu_custom_call.1} parent=5 // pred_check_branch
        %2276 = sbr.rel (%p2274) target = $region64
      $region63: #{tpu_custom_call.1} parent=5 // pred_region
        %s2277 = ssub.s32 %s20, 2
        // Predicated region
        $region65: #{tpu_custom_call.1} parent=63 // pred_check
          %p2278 = pneg %p191
        $region66: #{tpu_custom_call.1} parent=63 // pred_check_branch
          %2280 = sbr.rel (%p2278) target = $region68
        $region67: #{tpu_custom_call.1} parent=63 // pred_region
          %s2281 = sand.u32 %s176, 1
          %s2282 = scalar_lea.sflag [#allocation8], %s2281
          %s2283 = sand.u32 %s176, 1
          %s2284 = smul.addr %s2283, 32
          %s2285 = scalar_lea.vmem [#allocation7], %s2284
          %2286 = dma.done %s2282, 512
        $region68: #{tpu_custom_call.1} parent=63 // pred_fallthru
          _
        // Predicated region
        $region69: #{tpu_custom_call.1} parent=63 // pred_check
          %p2287 = pneg %p217
        $region70: #{tpu_custom_call.1} parent=63 // pred_check_branch
          %2289 = sbr.rel (%p2287) target = $region72
        $region71: #{tpu_custom_call.1} parent=63 // pred_region
          %s2290 = sand.u32 %s202, 1
          %s2291 = scalar_lea.sflag [#allocation10], %s2290
          %s2292 = sand.u32 %s202, 1
          %s2293 = smul.addr %s2292, 16
          %s2294 = scalar_lea.vmem [#allocation9], %s2293
          %2295 = dma.done %s2291, 256
        $region72: #{tpu_custom_call.1} parent=63 // pred_fallthru
          _
      $region64: #{tpu_custom_call.1} parent=5 // pred_fallthru
        _
    $region6: #{tpu_custom_call.1} parent=1 // loop_footer
      %s24 = sadd.s32 1, %s20
    $region7: #{tpu_custom_call.1} parent=1 // loop_footer_branch
      %19 = sbr.rel target = $region3
    $region8: #{tpu_custom_call.1} parent=1 // loop_exit
      _
    %2296 = vsyncpa [#allocation8], 1
    %s2297 = scalar_lea.sflag [#allocation8], 1
    %2298 = vsyncpa %s2297, 1
    %2299 = vsyncpa [#allocation10], 1
    %s2300 = scalar_lea.sflag [#allocation10], 1
    %2301 = vsyncpa %s2300, 1
  %2302 = vsyncmov [#allocation6]
  %s2303 = vpop.sfrf %2302
  %p2304 = scmp.eq.s32.totalorder %s2303, 0
  %p2305 = pneg %p2304
  %2307 = shalt.err (%p2305)
  %s2308 = scalar_lea.sflag [#allocation6], 1
  %2309 = vsyncmov %s2308
  %s2310 = vpop.sfrf %2309
  %p2311 = scmp.eq.s32.totalorder %s2310, 0
  %p2312 = pneg %p2311
  %2314 = shalt.err (%p2312)

</llo_original>
